<compile_context>
chip_gen: v7x
topology: tpu7x:2x2x1
jax: 0.10.0
libtpu: 0.0.40
codegen_flags: <defaults>
</compile_context>

<pallas_src>
import functools

import jax
import jax.numpy as jnp
from jax.experimental import pallas as pl
from jax.experimental.pallas import tpu as pltpu


# ----------------------------------------------------------------------------
# In-kernel helpers
# ----------------------------------------------------------------------------
def _dot_bias(x_f32, w_bf16, b_f32):
    """bf16 MXU matmul with f32 accumulation, plus bias (f32)."""
    y = jnp.dot(x_f32.astype(jnp.bfloat16), w_bf16,
                preferred_element_type=jnp.float32)
    return y + b_f32


def _silu(x):
    return x * jax.nn.sigmoid(x)


# ----------------------------------------------------------------------------
# Fused encoder kernel:
#   x -> [Linear+SiLU] x4 -> Linear -> h            (B, latent*G*2)
#   softmax(Linear(h[:, :128]))     -> mixing       (B, G)
# ----------------------------------------------------------------------------
def _encoder_kernel(x_ref,
                    w1, b1, w2, b2, w3, b3, w4, b4, w5, b5, wm, bm,
                    h_out, mix_out):
    h = x_ref[...]
    h = _silu(_dot_bias(h, w1[...], b1[...]))
    h = _silu(_dot_bias(h, w2[...], b2[...]))
    h = _silu(_dot_bias(h, w3[...], b3[...]))
    h = _silu(_dot_bias(h, w4[...], b4[...]))
    h = _dot_bias(h, w5[...], b5[...])               # (B, latent*G*2), f32

    # Mixing head: faithful to the reference — reads the first 128 columns of
    # the *final* encoder output (requires latent*G*2 >= 128).
    logits = _dot_bias(h[:, :128], wm[...], bm[...])  # (B, G)
    logits = logits - jnp.max(logits, axis=-1, keepdims=True)
    e = jnp.exp(logits)
    mix = e * pl.reciprocal(jnp.sum(e, axis=-1, keepdims=True), approx=True)

    h_out[...] = h.astype(h_out.dtype)
    mix_out[...] = mix.astype(mix_out.dtype)


# ----------------------------------------------------------------------------
# Fused decoder kernel:
#   [z;c] -> [Linear+SiLU] x4 -> Linear -> recon    (B, input_dim)
# ----------------------------------------------------------------------------
def _decoder_kernel(x_ref,
                    w1, b1, w2, b2, w3, b3, w4, b4, w5, b5,
                    o_ref):
    h = x_ref[...]
    h = _silu(_dot_bias(h, w1[...], b1[...]))
    h = _silu(_dot_bias(h, w2[...], b2[...]))
    h = _silu(_dot_bias(h, w3[...], b3[...]))
    h = _silu(_dot_bias(h, w4[...], b4[...]))
    h = _dot_bias(h, w5[...], b5[...])
    o_ref[...] = h.astype(o_ref.dtype)


# ----------------------------------------------------------------------------
# pallas_call wrappers
# ----------------------------------------------------------------------------
_COMPILER_PARAMS = pltpu.CompilerParams(
    dimension_semantics=("arbitrary",),
    vmem_limit_bytes=32 * 1024 * 1024,   # explicit; safe on v5e/v6e/v7x
)


def _full_spec(shape):
    ndim = len(shape)
    return pl.BlockSpec(shape, lambda i, _n=ndim: (0,) * _n)


def encoder_forward(params, x):
    """x: (B, input_dim) f32 -> (h (B, latent*G*2) f32, mix (B, G) f32)."""
    B = x.shape[0]
    args = [x]
    for w, b in params["enc"]:
        args += [w, b]
    wm, bm = params["mix"]
    args += [wm, bm]

    out_dim = params["enc"][4][0].shape[1]
    G = wm.shape[1]

    return pl.pallas_call(
        _encoder_kernel,
        out_shape=(jax.ShapeDtypeStruct((B, out_dim), jnp.float32),
                   jax.ShapeDtypeStruct((B, G), jnp.float32)),
        grid=(1,),
        in_specs=[_full_spec(a.shape) for a in args],
        out_specs=(_full_spec((B, out_dim)), _full_spec((B, G))),
        compiler_params=_COMPILER_PARAMS,
    )(*args)


def decoder_forward(params, combined):
    """combined: (B, latent+cond) f32 -> recon (B, input_dim) f32."""
    B = combined.shape[0]
    args = [combined]
    for w, b in params["dec"]:
        args += [w, b]
    out_dim = params["dec"][4][0].shape[1]

    return pl.pallas_call(
        _decoder_kernel,
        out_shape=jax.ShapeDtypeStruct((B, out_dim), jnp.float32),
        grid=(1,),
        in_specs=[_full_spec(a.shape) for a in args],
        out_specs=_full_spec((B, out_dim)),
        compiler_params=_COMPILER_PARAMS,
    )(*args)


# ----------------------------------------------------------------------------
# Parameter construction (deterministic, synthetic).
# PyTorch Linear weight is (out, in); we store the transposed (in, out) so the
# kernels do a plain x @ W.  Weights in bf16, biases in f32 (shape (1, N)).
# ----------------------------------------------------------------------------
def _init_linear(key, fan_in, fan_out, scale=0.02):
    kw, kb = jax.random.split(key)
    w = (scale * jax.random.normal(kw, (fan_in, fan_out), jnp.float32)
         ).astype(jnp.bfloat16)
    b = scale * jax.random.normal(kb, (1, fan_out), jnp.float32)
    return w, b


def init_params(key, input_dim, latent_dim, condition_dim, num_gaussians):
    assert latent_dim * num_gaussians * 2 >= 128, (
        "mixing head reads h[:, :128]; need latent_dim*num_gaussians*2 >= 128")
    keys = jax.random.split(key, 16)
    params = {}
    enc_dims = [input_dim, 1024, 512, 256, 128, latent_dim * num_gaussians * 2]
    params["enc"] = [
        _init_linear(keys[i], enc_dims[i], enc_dims[i + 1]) for i in range(5)
    ]
    params["mix"] = _init_linear(keys[5], 128, num_gaussians)
    dec_dims = [latent_dim + condition_dim, 128, 256, 512, 1024, input_dim]
    params["dec"] = [
        _init_linear(keys[6 + i], dec_dims[i], dec_dims[i + 1]) for i in range(5)
    ]
    return params


# ----------------------------------------------------------------------------
# Forward pass (matches CVAE_02_4.forward, eval-mode dropout).
# ----------------------------------------------------------------------------
def reparameterize(key, mean, log_var, mixing_coeffs):
    # TODO(synk): torch.multinomial / torch.randn_like have no Pallas
    # equivalent; GMM sampling done in plain JAX (semantically equivalent,
    # different RNG stream than PyTorch).
    std = jnp.exp(0.5 * log_var)
    k_comp, k_eps = jax.random.split(key)
    component = jax.random.categorical(
        k_comp, jnp.log(mixing_coeffs + 1e-20), axis=-1)          # (B,)
    batch_idx = jnp.arange(mean.shape[0])
    selected_mean = mean[batch_idx, component, :]
    selected_std = std[batch_idx, component, :]
    eps = jax.random.normal(k_eps, selected_std.shape, jnp.float32)
    return selected_mean + eps * selected_std


@functools.partial(jax.jit, static_argnames=("latent_dim", "num_gaussians"))
def cvae_forward(params, x, c, key, latent_dim, num_gaussians):
    h, mixing_coeffs = encoder_forward(params, x)
    half = h.shape[-1] // 2
    mean = h[:, :half].reshape(-1, num_gaussians, latent_dim)
    log_var = h[:, half:].reshape(-1, num_gaussians, latent_dim)

    z = reparameterize(key, mean, log_var, mixing_coeffs)

    combined = jnp.concatenate([z, c], axis=-1)
    recon = decoder_forward(params, combined)
    return recon, mean, log_var, mixing_coeffs


# ----------------------------------------------------------------------------
if __name__ == "__main__":
    # latent_dim * num_gaussians * 2 = 160 >= 128, so the (intentional,
    # reproduced) h[:, :128] slice in the encoder kernel is valid.
    batch = 8
    input_dim = 64
    latent_dim = 16
    condition_dim = 8
    num_gaussians = 5

    root = jax.random.PRNGKey(0)
    k_params, k_x, k_c, k_sample = jax.random.split(root, 4)

    params = init_params(k_params, input_dim, latent_dim, condition_dim,
                         num_gaussians)
    x = jax.random.normal(k_x, (batch, input_dim), jnp.float32)
    c = jax.random.normal(k_c, (batch, condition_dim), jnp.float32)

    recon, mean, log_var, mixing_coeffs = cvae_forward(
        params, x, c, k_sample, latent_dim, num_gaussians)

    jax.block_until_ready((recon, mean, log_var, mixing_coeffs))

    assert recon.shape == (batch, input_dim)
    assert mean.shape == (batch, num_gaussians, latent_dim)
    assert log_var.shape == (batch, num_gaussians, latent_dim)
    assert mixing_coeffs.shape == (batch, num_gaussians)
    # Softmax rows sum to ~1 (tolerance loosened for approx reciprocal + bf16).
    assert jnp.allclose(jnp.sum(mixing_coeffs, axis=-1), 1.0, atol=1e-2)
    assert bool(jnp.all(jnp.isfinite(recon)))

    print("KERNEL_OK")
</pallas_src>

<mosaic_0001>
module attributes {stable_mosaic.version = 11 : i64} {
  func.func @_decoder_kernel(%arg0: i32, %arg1: memref<8x24xf32, #tpu.memory_space<vmem>>, %arg2: memref<24x128xbf16, #tpu.memory_space<vmem>>, %arg3: memref<1x128xf32, #tpu.memory_space<vmem>>, %arg4: memref<128x256xbf16, #tpu.memory_space<vmem>>, %arg5: memref<1x256xf32, #tpu.memory_space<vmem>>, %arg6: memref<256x512xbf16, #tpu.memory_space<vmem>>, %arg7: memref<1x512xf32, #tpu.memory_space<vmem>>, %arg8: memref<512x1024xbf16, #tpu.memory_space<vmem>>, %arg9: memref<1x1024xf32, #tpu.memory_space<vmem>>, %arg10: memref<1024x64xbf16, #tpu.memory_space<vmem>>, %arg11: memref<1x64xf32, #tpu.memory_space<vmem>>, %arg12: memref<8x64xf32, #tpu.memory_space<vmem>>) attributes {dimension_semantics = [#tpu.dimension_semantics<arbitrary>], iteration_bounds = array<i64: 1>, scalar_prefetch = 0 : i64, scratch_operands = 0 : i64, tpu.core_type = #tpu.core_type<tc>, window_params = [{pipeline_mode = #tpu.pipeline_mode<synchronous>, transform_indices = @transform_0, window_bounds = array<i64: 8, 24>}, {pipeline_mode = #tpu.pipeline_mode<synchronous>, transform_indices = @transform_1, window_bounds = array<i64: 24, 128>}, {pipeline_mode = #tpu.pipeline_mode<synchronous>, transform_indices = @transform_2, window_bounds = array<i64: 1, 128>}, {pipeline_mode = #tpu.pipeline_mode<synchronous>, transform_indices = @transform_3, window_bounds = array<i64: 128, 256>}, {pipeline_mode = #tpu.pipeline_mode<synchronous>, transform_indices = @transform_4, window_bounds = array<i64: 1, 256>}, {pipeline_mode = #tpu.pipeline_mode<synchronous>, transform_indices = @transform_5, window_bounds = array<i64: 256, 512>}, {pipeline_mode = #tpu.pipeline_mode<synchronous>, transform_indices = @transform_6, window_bounds = array<i64: 1, 512>}, {pipeline_mode = #tpu.pipeline_mode<synchronous>, transform_indices = @transform_7, window_bounds = array<i64: 512, 1024>}, {pipeline_mode = #tpu.pipeline_mode<synchronous>, transform_indices = @transform_8, window_bounds = array<i64: 1, 1024>}, {pipeline_mode = #tpu.pipeline_mode<synchronous>, transform_indices = @transform_9, window_bounds = array<i64: 1024, 64>}, {pipeline_mode = #tpu.pipeline_mode<synchronous>, transform_indices = @transform_10, window_bounds = array<i64: 1, 64>}, {pipeline_mode = #tpu.pipeline_mode<synchronous>, transform_indices = @transform_11, window_bounds = array<i64: 8, 64>}]} {
    %c0 = arith.constant 0 : index
    %c0_0 = arith.constant 0 : index
    %0 = vector.load %arg1[%c0, %c0_0] : memref<8x24xf32, #tpu.memory_space<vmem>>, vector<8x24xf32>
    %c0_1 = arith.constant 0 : index
    %c0_2 = arith.constant 0 : index
    %1 = vector.load %arg2[%c0_1, %c0_2] : memref<24x128xbf16, #tpu.memory_space<vmem>>, vector<24x128xbf16>
    %c0_3 = arith.constant 0 : index
    %c0_4 = arith.constant 0 : index
    %2 = vector.load %arg3[%c0_3, %c0_4] : memref<1x128xf32, #tpu.memory_space<vmem>>, vector<1x128xf32>
    %3 = arith.truncf %0 : vector<8x24xf32> to vector<8x24xbf16>
    %cst = arith.constant dense<0.000000e+00> : vector<8x128xf32>
    %4 = tpu.matmul %3, %1, %cst {dimension_numbers = #tpu.dot_dimension_numbers<[1], [0], [0], [1], [0, 0, 1, 1], [], []>} : vector<8x24xbf16>, vector<24x128xbf16>, vector<8x128xf32> -> vector<8x128xf32>
    %5 = vector.broadcast %2 : vector<1x128xf32> to vector<8x128xf32>
    %6 = arith.addf %4, %5 : vector<8x128xf32>
    %7 = arith.negf %6 : vector<8x128xf32>
    %8 = math.exp %7 : vector<8x128xf32>
    %cst_5 = arith.constant 1.000000e+00 : f32
    %9 = vector.broadcast %cst_5 : f32 to vector<8x128xf32>
    %10 = arith.addf %9, %8 : vector<8x128xf32>
    %11 = arith.divf %9, %10 : vector<8x128xf32>
    %12 = arith.mulf %6, %11 : vector<8x128xf32>
    %c0_6 = arith.constant 0 : index
    %c0_7 = arith.constant 0 : index
    %13 = vector.load %arg4[%c0_6, %c0_7] : memref<128x256xbf16, #tpu.memory_space<vmem>>, vector<128x256xbf16>
    %c0_8 = arith.constant 0 : index
    %c0_9 = arith.constant 0 : index
    %14 = vector.load %arg5[%c0_8, %c0_9] : memref<1x256xf32, #tpu.memory_space<vmem>>, vector<1x256xf32>
    %15 = arith.truncf %12 : vector<8x128xf32> to vector<8x128xbf16>
    %cst_10 = arith.constant dense<0.000000e+00> : vector<8x256xf32>
    %16 = tpu.matmul %15, %13, %cst_10 {dimension_numbers = #tpu.dot_dimension_numbers<[1], [0], [0], [1], [0, 0, 1, 1], [], []>} : vector<8x128xbf16>, vector<128x256xbf16>, vector<8x256xf32> -> vector<8x256xf32>
    %17 = vector.broadcast %14 : vector<1x256xf32> to vector<8x256xf32>
    %18 = arith.addf %16, %17 : vector<8x256xf32>
    %19 = arith.negf %18 : vector<8x256xf32>
    %20 = math.exp %19 : vector<8x256xf32>
    %cst_11 = arith.constant 1.000000e+00 : f32
    %21 = vector.broadcast %cst_11 : f32 to vector<8x256xf32>
    %22 = arith.addf %21, %20 : vector<8x256xf32>
    %23 = arith.divf %21, %22 : vector<8x256xf32>
    %24 = arith.mulf %18, %23 : vector<8x256xf32>
    %c0_12 = arith.constant 0 : index
    %c0_13 = arith.constant 0 : index
    %25 = vector.load %arg6[%c0_12, %c0_13] : memref<256x512xbf16, #tpu.memory_space<vmem>>, vector<256x512xbf16>
    %c0_14 = arith.constant 0 : index
    %c0_15 = arith.constant 0 : index
    %26 = vector.load %arg7[%c0_14, %c0_15] : memref<1x512xf32, #tpu.memory_space<vmem>>, vector<1x512xf32>
    %27 = arith.truncf %24 : vector<8x256xf32> to vector<8x256xbf16>
    %cst_16 = arith.constant dense<0.000000e+00> : vector<8x512xf32>
    %28 = tpu.matmul %27, %25, %cst_16 {dimension_numbers = #tpu.dot_dimension_numbers<[1], [0], [0], [1], [0, 0, 1, 1], [], []>} : vector<8x256xbf16>, vector<256x512xbf16>, vector<8x512xf32> -> vector<8x512xf32>
    %29 = vector.broadcast %26 : vector<1x512xf32> to vector<8x512xf32>
    %30 = arith.addf %28, %29 : vector<8x512xf32>
    %31 = arith.negf %30 : vector<8x512xf32>
    %32 = math.exp %31 : vector<8x512xf32>
    %cst_17 = arith.constant 1.000000e+00 : f32
    %33 = vector.broadcast %cst_17 : f32 to vector<8x512xf32>
    %34 = arith.addf %33, %32 : vector<8x512xf32>
    %35 = arith.divf %33, %34 : vector<8x512xf32>
    %36 = arith.mulf %30, %35 : vector<8x512xf32>
    %c0_18 = arith.constant 0 : index
    %c0_19 = arith.constant 0 : index
    %37 = vector.load %arg8[%c0_18, %c0_19] : memref<512x1024xbf16, #tpu.memory_space<vmem>>, vector<512x1024xbf16>
    %c0_20 = arith.constant 0 : index
    %c0_21 = arith.constant 0 : index
    %38 = vector.load %arg9[%c0_20, %c0_21] : memref<1x1024xf32, #tpu.memory_space<vmem>>, vector<1x1024xf32>
    %39 = arith.truncf %36 : vector<8x512xf32> to vector<8x512xbf16>
    %cst_22 = arith.constant dense<0.000000e+00> : vector<8x1024xf32>
    %40 = tpu.matmul %39, %37, %cst_22 {dimension_numbers = #tpu.dot_dimension_numbers<[1], [0], [0], [1], [0, 0, 1, 1], [], []>} : vector<8x512xbf16>, vector<512x1024xbf16>, vector<8x1024xf32> -> vector<8x1024xf32>
    %41 = vector.broadcast %38 : vector<1x1024xf32> to vector<8x1024xf32>
    %42 = arith.addf %40, %41 : vector<8x1024xf32>
    %43 = arith.negf %42 : vector<8x1024xf32>
    %44 = math.exp %43 : vector<8x1024xf32>
    %cst_23 = arith.constant 1.000000e+00 : f32
    %45 = vector.broadcast %cst_23 : f32 to vector<8x1024xf32>
    %46 = arith.addf %45, %44 : vector<8x1024xf32>
    %47 = arith.divf %45, %46 : vector<8x1024xf32>
    %48 = arith.mulf %42, %47 : vector<8x1024xf32>
    %c0_24 = arith.constant 0 : index
    %c0_25 = arith.constant 0 : index
    %49 = vector.load %arg10[%c0_24, %c0_25] : memref<1024x64xbf16, #tpu.memory_space<vmem>>, vector<1024x64xbf16>
    %c0_26 = arith.constant 0 : index
    %c0_27 = arith.constant 0 : index
    %50 = vector.load %arg11[%c0_26, %c0_27] : memref<1x64xf32, #tpu.memory_space<vmem>>, vector<1x64xf32>
    %51 = arith.truncf %48 : vector<8x1024xf32> to vector<8x1024xbf16>
    %cst_28 = arith.constant dense<0.000000e+00> : vector<8x64xf32>
    %52 = tpu.matmul %51, %49, %cst_28 {dimension_numbers = #tpu.dot_dimension_numbers<[1], [0], [0], [1], [0, 0, 1, 1], [], []>} : vector<8x1024xbf16>, vector<1024x64xbf16>, vector<8x64xf32> -> vector<8x64xf32>
    %53 = vector.broadcast %50 : vector<1x64xf32> to vector<8x64xf32>
    %54 = arith.addf %52, %53 : vector<8x64xf32>
    %c0_29 = arith.constant 0 : index
    %c0_30 = arith.constant 0 : index
    %55 = vector.load %arg12[%c0_29, %c0_30] : memref<8x64xf32, #tpu.memory_space<vmem>>, vector<8x64xf32>
    tpu.vector_store %arg12[%c0_29, %c0_30], %54 {strides = array<i32>} : memref<8x64xf32, #tpu.memory_space<vmem>>, vector<8x64xf32>,
    return
  }
  func.func @transform_0(%arg0: i32) -> (i32, i32) {
    %c0_i32 = arith.constant 0 : i32
    %c0_i32_0 = arith.constant 0 : i32
    %c0_i32_1 = arith.constant 0 : i32
    return %c0_i32, %c0_i32_0 : i32, i32
  }
  func.func @transform_1(%arg0: i32) -> (i32, i32) {
    %c0_i32 = arith.constant 0 : i32
    %c0_i32_0 = arith.constant 0 : i32
    %c0_i32_1 = arith.constant 0 : i32
    return %c0_i32, %c0_i32_0 : i32, i32
  }
  func.func @transform_2(%arg0: i32) -> (i32, i32) {
    %c0_i32 = arith.constant 0 : i32
    %c0_i32_0 = arith.constant 0 : i32
    %c0_i32_1 = arith.constant 0 : i32
    return %c0_i32, %c0_i32_0 : i32, i32
  }
  func.func @transform_3(%arg0: i32) -> (i32, i32) {
    %c0_i32 = arith.constant 0 : i32
    %c0_i32_0 = arith.constant 0 : i32
    %c0_i32_1 = arith.constant 0 : i32
    return %c0_i32, %c0_i32_0 : i32, i32
  }
  func.func @transform_4(%arg0: i32) -> (i32, i32) {
    %c0_i32 = arith.constant 0 : i32
    %c0_i32_0 = arith.constant 0 : i32
    %c0_i32_1 = arith.constant 0 : i32
    return %c0_i32, %c0_i32_0 : i32, i32
  }
  func.func @transform_5(%arg0: i32) -> (i32, i32) {
    %c0_i32 = arith.constant 0 : i32
    %c0_i32_0 = arith.constant 0 : i32
    %c0_i32_1 = arith.constant 0 : i32
    return %c0_i32, %c0_i32_0 : i32, i32
  }
  func.func @transform_6(%arg0: i32) -> (i32, i32) {
    %c0_i32 = arith.constant 0 : i32
    %c0_i32_0 = arith.constant 0 : i32
    %c0_i32_1 = arith.constant 0 : i32
    return %c0_i32, %c0_i32_0 : i32, i32
  }
  func.func @transform_7(%arg0: i32) -> (i32, i32) {
    %c0_i32 = arith.constant 0 : i32
    %c0_i32_0 = arith.constant 0 : i32
    %c0_i32_1 = arith.constant 0 : i32
    return %c0_i32, %c0_i32_0 : i32, i32
  }
  func.func @transform_8(%arg0: i32) -> (i32, i32) {
    %c0_i32 = arith.constant 0 : i32
    %c0_i32_0 = arith.constant 0 : i32
    %c0_i32_1 = arith.constant 0 : i32
    return %c0_i32, %c0_i32_0 : i32, i32
  }
  func.func @transform_9(%arg0: i32) -> (i32, i32) {
    %c0_i32 = arith.constant 0 : i32
    %c0_i32_0 = arith.constant 0 : i32
    %c0_i32_1 = arith.constant 0 : i32
    return %c0_i32, %c0_i32_0 : i32, i32
  }
  func.func @transform_10(%arg0: i32) -> (i32, i32) {
    %c0_i32 = arith.constant 0 : i32
    %c0_i32_0 = arith.constant 0 : i32
    %c0_i32_1 = arith.constant 0 : i32
    return %c0_i32, %c0_i32_0 : i32, i32
  }
  func.func @transform_11(%arg0: i32) -> (i32, i32) {
    %c0_i32 = arith.constant 0 : i32
    %c0_i32_0 = arith.constant 0 : i32
    %c0_i32_1 = arith.constant 0 : i32
    return %c0_i32, %c0_i32_0 : i32, i32
  }
}

module attributes {stable_mosaic.version = 11 : i64} {
  func.func @_encoder_kernel(%arg0: i32, %arg1: memref<8x64xf32, #tpu.memory_space<vmem>>, %arg2: memref<64x1024xbf16, #tpu.memory_space<vmem>>, %arg3: memref<1x1024xf32, #tpu.memory_space<vmem>>, %arg4: memref<1024x512xbf16, #tpu.memory_space<vmem>>, %arg5: memref<1x512xf32, #tpu.memory_space<vmem>>, %arg6: memref<512x256xbf16, #tpu.memory_space<vmem>>, %arg7: memref<1x256xf32, #tpu.memory_space<vmem>>, %arg8: memref<256x128xbf16, #tpu.memory_space<vmem>>, %arg9: memref<1x128xf32, #tpu.memory_space<vmem>>, %arg10: memref<128x160xbf16, #tpu.memory_space<vmem>>, %arg11: memref<1x160xf32, #tpu.memory_space<vmem>>, %arg12: memref<128x5xbf16, #tpu.memory_space<vmem>>, %arg13: memref<1x5xf32, #tpu.memory_space<vmem>>, %arg14: memref<8x160xf32, #tpu.memory_space<vmem>>, %arg15: memref<8x5xf32, #tpu.memory_space<vmem>>) attributes {dimension_semantics = [#tpu.dimension_semantics<arbitrary>], iteration_bounds = array<i64: 1>, scalar_prefetch = 0 : i64, scratch_operands = 0 : i64, tpu.core_type = #tpu.core_type<tc>, window_params = [{pipeline_mode = #tpu.pipeline_mode<synchronous>, transform_indices = @transform_0, window_bounds = array<i64: 8, 64>}, {pipeline_mode = #tpu.pipeline_mode<synchronous>, transform_indices = @transform_1, window_bounds = array<i64: 64, 1024>}, {pipeline_mode = #tpu.pipeline_mode<synchronous>, transform_indices = @transform_2, window_bounds = array<i64: 1, 1024>}, {pipeline_mode = #tpu.pipeline_mode<synchronous>, transform_indices = @transform_3, window_bounds = array<i64: 1024, 512>}, {pipeline_mode = #tpu.pipeline_mode<synchronous>, transform_indices = @transform_4, window_bounds = array<i64: 1, 512>}, {pipeline_mode = #tpu.pipeline_mode<synchronous>, transform_indices = @transform_5, window_bounds = array<i64: 512, 256>}, {pipeline_mode = #tpu.pipeline_mode<synchronous>, transform_indices = @transform_6, window_bounds = array<i64: 1, 256>}, {pipeline_mode = #tpu.pipeline_mode<synchronous>, transform_indices = @transform_7, window_bounds = array<i64: 256, 128>}, {pipeline_mode = #tpu.pipeline_mode<synchronous>, transform_indices = @transform_8, window_bounds = array<i64: 1, 128>}, {pipeline_mode = #tpu.pipeline_mode<synchronous>, transform_indices = @transform_9, window_bounds = array<i64: 128, 160>}, {pipeline_mode = #tpu.pipeline_mode<synchronous>, transform_indices = @transform_10, window_bounds = array<i64: 1, 160>}, {pipeline_mode = #tpu.pipeline_mode<synchronous>, transform_indices = @transform_11, window_bounds = array<i64: 128, 5>}, {pipeline_mode = #tpu.pipeline_mode<synchronous>, transform_indices = @transform_12, window_bounds = array<i64: 1, 5>}, {pipeline_mode = #tpu.pipeline_mode<synchronous>, transform_indices = @transform_13, window_bounds = array<i64: 8, 160>}, {pipeline_mode = #tpu.pipeline_mode<synchronous>, transform_indices = @transform_14, window_bounds = array<i64: 8, 5>}]} {
    %c0 = arith.constant 0 : index
    %c0_0 = arith.constant 0 : index
    %0 = vector.load %arg1[%c0, %c0_0] : memref<8x64xf32, #tpu.memory_space<vmem>>, vector<8x64xf32>
    %c0_1 = arith.constant 0 : index
    %c0_2 = arith.constant 0 : index
    %1 = vector.load %arg2[%c0_1, %c0_2] : memref<64x1024xbf16, #tpu.memory_space<vmem>>, vector<64x1024xbf16>
    %c0_3 = arith.constant 0 : index
    %c0_4 = arith.constant 0 : index
    %2 = vector.load %arg3[%c0_3, %c0_4] : memref<1x1024xf32, #tpu.memory_space<vmem>>, vector<1x1024xf32>
    %3 = arith.truncf %0 : vector<8x64xf32> to vector<8x64xbf16>
    %cst = arith.constant dense<0.000000e+00> : vector<8x1024xf32>
    %4 = tpu.matmul %3, %1, %cst {dimension_numbers = #tpu.dot_dimension_numbers<[1], [0], [0], [1], [0, 0, 1, 1], [], []>} : vector<8x64xbf16>, vector<64x1024xbf16>, vector<8x1024xf32> -> vector<8x1024xf32>
    %5 = vector.broadcast %2 : vector<1x1024xf32> to vector<8x1024xf32>
    %6 = arith.addf %4, %5 : vector<8x1024xf32>
    %7 = arith.negf %6 : vector<8x1024xf32>
    %8 = math.exp %7 : vector<8x1024xf32>
    %cst_5 = arith.constant 1.000000e+00 : f32
    %9 = vector.broadcast %cst_5 : f32 to vector<8x1024xf32>
    %10 = arith.addf %9, %8 : vector<8x1024xf32>
    %11 = arith.divf %9, %10 : vector<8x1024xf32>
    %12 = arith.mulf %6, %11 : vector<8x1024xf32>
    %c0_6 = arith.constant 0 : index
    %c0_7 = arith.constant 0 : index
    %13 = vector.load %arg4[%c0_6, %c0_7] : memref<1024x512xbf16, #tpu.memory_space<vmem>>, vector<1024x512xbf16>
    %c0_8 = arith.constant 0 : index
    %c0_9 = arith.constant 0 : index
    %14 = vector.load %arg5[%c0_8, %c0_9] : memref<1x512xf32, #tpu.memory_space<vmem>>, vector<1x512xf32>
    %15 = arith.truncf %12 : vector<8x1024xf32> to vector<8x1024xbf16>
    %cst_10 = arith.constant dense<0.000000e+00> : vector<8x512xf32>
    %16 = tpu.matmul %15, %13, %cst_10 {dimension_numbers = #tpu.dot_dimension_numbers<[1], [0], [0], [1], [0, 0, 1, 1], [], []>} : vector<8x1024xbf16>, vector<1024x512xbf16>, vector<8x512xf32> -> vector<8x512xf32>
    %17 = vector.broadcast %14 : vector<1x512xf32> to vector<8x512xf32>
    %18 = arith.addf %16, %17 : vector<8x512xf32>
    %19 = arith.negf %18 : vector<8x512xf32>
    %20 = math.exp %19 : vector<8x512xf32>
    %cst_11 = arith.constant 1.000000e+00 : f32
    %21 = vector.broadcast %cst_11 : f32 to vector<8x512xf32>
    %22 = arith.addf %21, %20 : vector<8x512xf32>
    %23 = arith.divf %21, %22 : vector<8x512xf32>
    %24 = arith.mulf %18, %23 : vector<8x512xf32>
    %c0_12 = arith.constant 0 : index
    %c0_13 = arith.constant 0 : index
    %25 = vector.load %arg6[%c0_12, %c0_13] : memref<512x256xbf16, #tpu.memory_space<vmem>>, vector<512x256xbf16>
    %c0_14 = arith.constant 0 : index
    %c0_15 = arith.constant 0 : index
    %26 = vector.load %arg7[%c0_14, %c0_15] : memref<1x256xf32, #tpu.memory_space<vmem>>, vector<1x256xf32>
    %27 = arith.truncf %24 : vector<8x512xf32> to vector<8x512xbf16>
    %cst_16 = arith.constant dense<0.000000e+00> : vector<8x256xf32>
    %28 = tpu.matmul %27, %25, %cst_16 {dimension_numbers = #tpu.dot_dimension_numbers<[1], [0], [0], [1], [0, 0, 1, 1], [], []>} : vector<8x512xbf16>, vector<512x256xbf16>, vector<8x256xf32> -> vector<8x256xf32>
    %29 = vector.broadcast %26 : vector<1x256xf32> to vector<8x256xf32>
    %30 = arith.addf %28, %29 : vector<8x256xf32>
    %31 = arith.negf %30 : vector<8x256xf32>
    %32 = math.exp %31 : vector<8x256xf32>
    %cst_17 = arith.constant 1.000000e+00 : f32
    %33 = vector.broadcast %cst_17 : f32 to vector<8x256xf32>
    %34 = arith.addf %33, %32 : vector<8x256xf32>
    %35 = arith.divf %33, %34 : vector<8x256xf32>
    %36 = arith.mulf %30, %35 : vector<8x256xf32>
    %c0_18 = arith.constant 0 : index
    %c0_19 = arith.constant 0 : index
    %37 = vector.load %arg8[%c0_18, %c0_19] : memref<256x128xbf16, #tpu.memory_space<vmem>>, vector<256x128xbf16>
    %c0_20 = arith.constant 0 : index
    %c0_21 = arith.constant 0 : index
    %38 = vector.load %arg9[%c0_20, %c0_21] : memref<1x128xf32, #tpu.memory_space<vmem>>, vector<1x128xf32>
    %39 = arith.truncf %36 : vector<8x256xf32> to vector<8x256xbf16>
    %cst_22 = arith.constant dense<0.000000e+00> : vector<8x128xf32>
    %40 = tpu.matmul %39, %37, %cst_22 {dimension_numbers = #tpu.dot_dimension_numbers<[1], [0], [0], [1], [0, 0, 1, 1], [], []>} : vector<8x256xbf16>, vector<256x128xbf16>, vector<8x128xf32> -> vector<8x128xf32>
    %41 = vector.broadcast %38 : vector<1x128xf32> to vector<8x128xf32>
    %42 = arith.addf %40, %41 : vector<8x128xf32>
    %43 = arith.negf %42 : vector<8x128xf32>
    %44 = math.exp %43 : vector<8x128xf32>
    %cst_23 = arith.constant 1.000000e+00 : f32
    %45 = vector.broadcast %cst_23 : f32 to vector<8x128xf32>
    %46 = arith.addf %45, %44 : vector<8x128xf32>
    %47 = arith.divf %45, %46 : vector<8x128xf32>
    %48 = arith.mulf %42, %47 : vector<8x128xf32>
    %c0_24 = arith.constant 0 : index
    %c0_25 = arith.constant 0 : index
    %49 = vector.load %arg10[%c0_24, %c0_25] : memref<128x160xbf16, #tpu.memory_space<vmem>>, vector<128x160xbf16>
    %c0_26 = arith.constant 0 : index
    %c0_27 = arith.constant 0 : index
    %50 = vector.load %arg11[%c0_26, %c0_27] : memref<1x160xf32, #tpu.memory_space<vmem>>, vector<1x160xf32>
    %51 = arith.truncf %48 : vector<8x128xf32> to vector<8x128xbf16>
    %cst_28 = arith.constant dense<0.000000e+00> : vector<8x160xf32>
    %52 = tpu.matmul %51, %49, %cst_28 {dimension_numbers = #tpu.dot_dimension_numbers<[1], [0], [0], [1], [0, 0, 1, 1], [], []>} : vector<8x128xbf16>, vector<128x160xbf16>, vector<8x160xf32> -> vector<8x160xf32>
    %53 = vector.broadcast %50 : vector<1x160xf32> to vector<8x160xf32>
    %54 = arith.addf %52, %53 : vector<8x160xf32>
    %55 = vector.extract_strided_slice %54 {offsets = [0, 0], sizes = [8, 128], strides = [1, 1]} : vector<8x160xf32> to vector<8x128xf32>
    %c0_29 = arith.constant 0 : index
    %c0_30 = arith.constant 0 : index
    %56 = vector.load %arg12[%c0_29, %c0_30] : memref<128x5xbf16, #tpu.memory_space<vmem>>, vector<128x5xbf16>
    %c0_31 = arith.constant 0 : index
    %c0_32 = arith.constant 0 : index
    %57 = vector.load %arg13[%c0_31, %c0_32] : memref<1x5xf32, #tpu.memory_space<vmem>>, vector<1x5xf32>
    %58 = arith.truncf %55 : vector<8x128xf32> to vector<8x128xbf16>
    %cst_33 = arith.constant dense<0.000000e+00> : vector<8x5xf32>
    %59 = tpu.matmul %58, %56, %cst_33 {dimension_numbers = #tpu.dot_dimension_numbers<[1], [0], [0], [1], [0, 0, 1, 1], [], []>} : vector<8x128xbf16>, vector<128x5xbf16>, vector<8x5xf32> -> vector<8x5xf32>
    %60 = vector.broadcast %57 : vector<1x5xf32> to vector<8x5xf32>
    %61 = arith.addf %59, %60 : vector<8x5xf32>
    %cst_34 = arith.constant dense<0xFF800000> : vector<8xf32>
    %62 = vector.multi_reduction <maximumf>, %61, %cst_34 [1] : vector<8x5xf32> to vector<8xf32>
    %63 = vector.shape_cast %62 : vector<8xf32> to vector<8x1xf32>
    %64 = vector.broadcast %63 : vector<8x1xf32> to vector<8x5xf32>
    %65 = arith.subf %61, %64 : vector<8x5xf32>
    %66 = math.exp %65 : vector<8x5xf32>
    %cst_35 = arith.constant dense<0.000000e+00> : vector<8xf32>
    %67 = vector.multi_reduction <add>, %66, %cst_35 [1] : vector<8x5xf32> to vector<8xf32>
    %68 = vector.shape_cast %67 : vector<8xf32> to vector<8x1xf32>
    %69 = tpu.reciprocal %68 {approx = true} : vector<8x1xf32> -> vector<8x1xf32>
    %70 = vector.broadcast %69 : vector<8x1xf32> to vector<8x5xf32>
    %71 = arith.mulf %66, %70 : vector<8x5xf32>
    %c0_36 = arith.constant 0 : index
    %c0_37 = arith.constant 0 : index
    %72 = vector.load %arg14[%c0_36, %c0_37] : memref<8x160xf32, #tpu.memory_space<vmem>>, vector<8x160xf32>
    tpu.vector_store %arg14[%c0_36, %c0_37], %54 {strides = array<i32>} : memref<8x160xf32, #tpu.memory_space<vmem>>, vector<8x160xf32>,
    %c0_38 = arith.constant 0 : index
    %c0_39 = arith.constant 0 : index
    %73 = vector.load %arg15[%c0_38, %c0_39] : memref<8x5xf32, #tpu.memory_space<vmem>>, vector<8x5xf32>
    tpu.vector_store %arg15[%c0_38, %c0_39], %71 {strides = array<i32>} : memref<8x5xf32, #tpu.memory_space<vmem>>, vector<8x5xf32>,
    return
  }
  func.func @transform_0(%arg0: i32) -> (i32, i32) {
    %c0_i32 = arith.constant 0 : i32
    %c0_i32_0 = arith.constant 0 : i32
    %c0_i32_1 = arith.constant 0 : i32
    return %c0_i32, %c0_i32_0 : i32, i32
  }
  func.func @transform_1(%arg0: i32) -> (i32, i32) {
    %c0_i32 = arith.constant 0 : i32
    %c0_i32_0 = arith.constant 0 : i32
    %c0_i32_1 = arith.constant 0 : i32
    return %c0_i32, %c0_i32_0 : i32, i32
  }
  func.func @transform_2(%arg0: i32) -> (i32, i32) {
    %c0_i32 = arith.constant 0 : i32
    %c0_i32_0 = arith.constant 0 : i32
    %c0_i32_1 = arith.constant 0 : i32
    return %c0_i32, %c0_i32_0 : i32, i32
  }
  func.func @transform_3(%arg0: i32) -> (i32, i32) {
    %c0_i32 = arith.constant 0 : i32
    %c0_i32_0 = arith.constant 0 : i32
    %c0_i32_1 = arith.constant 0 : i32
    return %c0_i32, %c0_i32_0 : i32, i32
  }
  func.func @transform_4(%arg0: i32) -> (i32, i32) {
    %c0_i32 = arith.constant 0 : i32
    %c0_i32_0 = arith.constant 0 : i32
    %c0_i32_1 = arith.constant 0 : i32
    return %c0_i32, %c0_i32_0 : i32, i32
  }
  func.func @transform_5(%arg0: i32) -> (i32, i32) {
    %c0_i32 = arith.constant 0 : i32
    %c0_i32_0 = arith.constant 0 : i32
    %c0_i32_1 = arith.constant 0 : i32
    return %c0_i32, %c0_i32_0 : i32, i32
  }
  func.func @transform_6(%arg0: i32) -> (i32, i32) {
    %c0_i32 = arith.constant 0 : i32
    %c0_i32_0 = arith.constant 0 : i32
    %c0_i32_1 = arith.constant 0 : i32
    return %c0_i32, %c0_i32_0 : i32, i32
  }
  func.func @transform_7(%arg0: i32) -> (i32, i32) {
    %c0_i32 = arith.constant 0 : i32
    %c0_i32_0 = arith.constant 0 : i32
    %c0_i32_1 = arith.constant 0 : i32
    return %c0_i32, %c0_i32_0 : i32, i32
  }
  func.func @transform_8(%arg0: i32) -> (i32, i32) {
    %c0_i32 = arith.constant 0 : i32
    %c0_i32_0 = arith.constant 0 : i32
    %c0_i32_1 = arith.constant 0 : i32
    return %c0_i32, %c0_i32_0 : i32, i32
  }
  func.func @transform_9(%arg0: i32) -> (i32, i32) {
    %c0_i32 = arith.constant 0 : i32
    %c0_i32_0 = arith.constant 0 : i32
    %c0_i32_1 = arith.constant 0 : i32
    return %c0_i32, %c0_i32_0 : i32, i32
  }
  func.func @transform_10(%arg0: i32) -> (i32, i32) {
    %c0_i32 = arith.constant 0 : i32
    %c0_i32_0 = arith.constant 0 : i32
    %c0_i32_1 = arith.constant 0 : i32
    return %c0_i32, %c0_i32_0 : i32, i32
  }
  func.func @transform_11(%arg0: i32) -> (i32, i32) {
    %c0_i32 = arith.constant 0 : i32
    %c0_i32_0 = arith.constant 0 : i32
    %c0_i32_1 = arith.constant 0 : i32
    return %c0_i32, %c0_i32_0 : i32, i32
  }
  func.func @transform_12(%arg0: i32) -> (i32, i32) {
    %c0_i32 = arith.constant 0 : i32
    %c0_i32_0 = arith.constant 0 : i32
    %c0_i32_1 = arith.constant 0 : i32
    return %c0_i32, %c0_i32_0 : i32, i32
  }
  func.func @transform_13(%arg0: i32) -> (i32, i32) {
    %c0_i32 = arith.constant 0 : i32
    %c0_i32_0 = arith.constant 0 : i32
    %c0_i32_1 = arith.constant 0 : i32
    return %c0_i32, %c0_i32_0 : i32, i32
  }
  func.func @transform_14(%arg0: i32) -> (i32, i32) {
    %c0_i32 = arith.constant 0 : i32
    %c0_i32_0 = arith.constant 0 : i32
    %c0_i32_1 = arith.constant 0 : i32
    return %c0_i32, %c0_i32_0 : i32, i32
  }
}

</mosaic_0001>

<llo_original>
// kernel: cvae_forward.3
$region0: #{cvae_forward.3}
  #allocation0 [shape = 'u32[]', space=smem, size = 0x4, offset = 0x4, fixed_abs, tag = 'smem constant byte address 0x4 - core index']
  #allocation1 [shape = 'u32[144,128]{1,0:T(1,128)}', space=vmem, size = 0x12000, scoped, tag = 'internal scratch']
  %s0 = inlined_call_operand.vmem [shape: f32[8,24], index: 0, kind: input, shape index: {}]
  %s1 = inlined_call_operand.vmem [shape: bf16[24,128], index: 1, kind: input, shape index: {}]
  %s2 = inlined_call_operand.vmem [shape: f32[1,128], index: 2, kind: input, shape index: {}]
  %s3 = inlined_call_operand.vmem [shape: bf16[128,256], index: 3, kind: input, shape index: {}]
  %s4 = inlined_call_operand.vmem [shape: f32[1,256], index: 4, kind: input, shape index: {}]
  %s5 = inlined_call_operand.vmem [shape: bf16[256,512], index: 5, kind: input, shape index: {}]
  %s6 = inlined_call_operand.vmem [shape: f32[1,512], index: 6, kind: input, shape index: {}]
  %s7 = inlined_call_operand.vmem [shape: bf16[512,1024], index: 7, kind: input, shape index: {}]
  %s8 = inlined_call_operand.vmem [shape: f32[1,1024], index: 8, kind: input, shape index: {}]
  %s9 = inlined_call_operand.vmem [shape: bf16[1024,64], index: 9, kind: input, shape index: {}]
  %s10 = inlined_call_operand.vmem [shape: f32[1,64], index: 10, kind: input, shape index: {}]
  %s11 = inlined_call_operand.hbm [shape: f32[8,64], index: 11, kind: output, shape index: {}]
  %s12 = sld [smem:[#allocation0]]
  $region54: #{cvae_forward.3} parent=0
    _
  %s14 = ssub.s32 1, %s12
  %s15 = scalar_select 0, %s14, %s12
  $region1: #{cvae_forward.3} parent=0
    #allocation2 [shape = 'u8[4096]{0}', space=vmem, size = 0x1000, scoped, tag = 'output window, operand 0, single buffered']
    #allocation3 [shape = 's32[1]{0}', space=sflag, size = 0x4, scoped, tag = 'scoped memory for cvae_forward.3']
    %16 = vsyncpa [#allocation3], 0
    // Predicated region
    $region2: #{cvae_forward.3} parent=1 // pred_check
      _
    $region3: #{cvae_forward.3} parent=1 // pred_check_branch
      %18 = sbr.rel (0) target = $region5
    $region4: #{cvae_forward.3} parent=1 // pred_region
      _
    $region5: #{cvae_forward.3} parent=1 // pred_fallthru
      _
    // Predicated region
    $region6: #{cvae_forward.3} parent=1 // pred_check
      _
    $region7: #{cvae_forward.3} parent=1 // pred_check_branch
      %20 = sbr.rel (0) target = $region9
    $region8: #{cvae_forward.3} parent=1 // pred_region
      _
    $region9: #{cvae_forward.3} parent=1 // pred_fallthru
      _
    // Predicated region
    $region10: #{cvae_forward.3} parent=1 // pred_check
      _
    $region11: #{cvae_forward.3} parent=1 // pred_check_branch
      %22 = sbr.rel (0) target = $region13
    $region12: #{cvae_forward.3} parent=1 // pred_region
      _
    $region13: #{cvae_forward.3} parent=1 // pred_fallthru
      _
    // Predicated region
    $region14: #{cvae_forward.3} parent=1 // pred_check
      _
    $region15: #{cvae_forward.3} parent=1 // pred_check_branch
      %24 = sbr.rel (0) target = $region17
    $region16: #{cvae_forward.3} parent=1 // pred_region
      _
    $region17: #{cvae_forward.3} parent=1 // pred_fallthru
      _
    // Predicated region
    $region18: #{cvae_forward.3} parent=1 // pred_check
      _
    $region19: #{cvae_forward.3} parent=1 // pred_check_branch
      %26 = sbr.rel (0) target = $region21
    $region20: #{cvae_forward.3} parent=1 // pred_region
      _
    $region21: #{cvae_forward.3} parent=1 // pred_fallthru
      _
    // Predicated region
    $region22: #{cvae_forward.3} parent=1 // pred_check
      _
    $region23: #{cvae_forward.3} parent=1 // pred_check_branch
      %28 = sbr.rel (0) target = $region25
    $region24: #{cvae_forward.3} parent=1 // pred_region
      _
    $region25: #{cvae_forward.3} parent=1 // pred_fallthru
      _
    // Predicated region
    $region26: #{cvae_forward.3} parent=1 // pred_check
      _
    $region27: #{cvae_forward.3} parent=1 // pred_check_branch
      %30 = sbr.rel (0) target = $region29
    $region28: #{cvae_forward.3} parent=1 // pred_region
      _
    $region29: #{cvae_forward.3} parent=1 // pred_fallthru
      _
    // Predicated region
    $region30: #{cvae_forward.3} parent=1 // pred_check
      _
    $region31: #{cvae_forward.3} parent=1 // pred_check_branch
      %32 = sbr.rel (0) target = $region33
    $region32: #{cvae_forward.3} parent=1 // pred_region
      _
    $region33: #{cvae_forward.3} parent=1 // pred_fallthru
      _
    // Predicated region
    $region34: #{cvae_forward.3} parent=1 // pred_check
      _
    $region35: #{cvae_forward.3} parent=1 // pred_check_branch
      %34 = sbr.rel (0) target = $region37
    $region36: #{cvae_forward.3} parent=1 // pred_region
      _
    $region37: #{cvae_forward.3} parent=1 // pred_fallthru
      _
    // Predicated region
    $region38: #{cvae_forward.3} parent=1 // pred_check
      _
    $region39: #{cvae_forward.3} parent=1 // pred_check_branch
      %36 = sbr.rel (0) target = $region41
    $region40: #{cvae_forward.3} parent=1 // pred_region
      _
    $region41: #{cvae_forward.3} parent=1 // pred_fallthru
      _
    // Predicated region
    $region42: #{cvae_forward.3} parent=1 // pred_check
      _
    $region43: #{cvae_forward.3} parent=1 // pred_check_branch
      %38 = sbr.rel (0) target = $region45
    $region44: #{cvae_forward.3} parent=1 // pred_region
      _
    $region45: #{cvae_forward.3} parent=1 // pred_fallthru
      _
    %v40 = vld [vmem:[%s0] sm:$0xff]
    %v41 = vld [vmem:[%s1] sm:$0xf]
    %v42 = vld [vmem:[%s1 + $0x4] sm:$0xf]
    %v43 = vld [vmem:[%s1 + $0x8] sm:$0xf]
    %v44 = vld [vmem:[%s2] sm:$0x1]
    %v45 = vpack.c.bf16 %v40, %v40
    %v47 = vlaneseq
    %v48 = vshrl.u32 %v47, 7
    %v49 = vsub.s32 0, %v48
    %v50 = vrot.slane %v44, %v49
    %v55 = vunpack.c.l.b16 %v41
    %v56 = vunpack.c.l.b16 %v42
    %v57 = vunpack.c.l.b16 %v43
    %v58 = vpack.c.b16 %v56, %v55
    %v59 = vpack.c.b16 %v57, %v57
    %vm61 = vcmask 195584
    %v63 = vsel %vm61, %v45, 0
    %vm65 = vcmask 1043456
    %v67 = vsel %vm65, %v59, 0
    %69 = vmatprep.subr.bf16.mxu0 0
    %70 = vmatpush1.bf16.msra.mxu0 %v58
    %71 = vmatprep.subr.bf16.mxu0 0
    %72 = vmatpush1.bf16.msra.mxu0 %v67
    %73 = vmatprep.subr.bf16.mxu0 0
    %74 = vmatpush1.bf16.msra.mxu0 0
    %75 = vmatprep.subr.bf16.mxu0 0
    %76 = vmatpush1.bf16.msra.mxu0 0
    %77 = vmatprep.subr.bf16.mxu0 0
    %78 = vmatpush1.bf16.msra.mxu0 0
    %79 = vmatprep.subr.bf16.mxu0 0
    %80 = vmatpush1.bf16.msra.mxu0 0
    %81 = vmatprep.subr.bf16.mxu0 0
    %82 = vmatpush1.bf16.msra.mxu0 0
    %83 = vmatprep.subr.bf16.mxu0 0
    %84 = vmatpush1.bf16.msra.mxu0 0
    %85 = vmatprep.subr.bf16.mxu0 0
    %86 = vmatpush1.bf16.msra.mxu0 0
    %87 = vmatprep.subr.bf16.mxu0 0
    %88 = vmatpush1.bf16.msra.mxu0 0
    %89 = vmatprep.subr.bf16.mxu0 0
    %90 = vmatpush1.bf16.msra.mxu0 0
    %91 = vmatprep.subr.bf16.mxu0 0
    %92 = vmatpush1.bf16.msra.mxu0 0
    %93 = vmatprep.subr.bf16.mxu0 0
    %94 = vmatpush1.bf16.msra.mxu0 0
    %95 = vmatprep.subr.bf16.mxu0 0
    %96 = vmatpush1.bf16.msra.mxu0 0
    %97 = vmatprep.subr.bf16.mxu0 0
    %98 = vmatpush1.bf16.msra.mxu0 0
    %99 = vmatprep.subr.bf16.mxu0 0
    %100 = vmatpush1.bf16.msra.mxu0 0
    %101 = vmatprep.mubr.bf16.mxu0 0
    %102 = vmatmul.mubr.bf16.gmra.mrb[0].mxu0 %v63
    %v103 = vpop.f32.mrb[0].mxu0
    %v104 = vadd.f32 %v50, %v103
    %v105 = vpop.f32.mrb[0].mxu0
    %v106 = vpop.f32.mrb[0].mxu0
    %v107 = vpop.f32.mrb[0].mxu0
    %108 = vdwg.mxu0
    %v109 = vxor.u32 %v104, 2147483648
    %v110 = vmul.f32 %v109, 1.442695
    %v111 = vpow.pop %v110
    %v112 = vadd.f32 %v111, 1.0
    %v113 = vrcp.pop %v112
    %v114 = vmul.f32 1.0, %v113
    %v115 = vmul.f32 %v104, %v114
    %v116 = vld [vmem:[%s3] sm:$0xff]
    %v117 = vld [vmem:[%s3 + $0x8] sm:$0xff]
    %v118 = vld [vmem:[%s3 + $0x10] sm:$0xff]
    %v119 = vld [vmem:[%s3 + $0x18] sm:$0xff]
    %v120 = vld [vmem:[%s3 + $0x20] sm:$0xff]
    %v121 = vld [vmem:[%s3 + $0x28] sm:$0xff]
    %v122 = vld [vmem:[%s3 + $0x30] sm:$0xff]
    %v123 = vld [vmem:[%s3 + $0x38] sm:$0xff]
    %v124 = vld [vmem:[%s3 + $0x40] sm:$0xff]
    %v125 = vld [vmem:[%s3 + $0x48] sm:$0xff]
    %v126 = vld [vmem:[%s3 + $0x50] sm:$0xff]
    %v127 = vld [vmem:[%s3 + $0x58] sm:$0xff]
    %v128 = vld [vmem:[%s3 + $0x60] sm:$0xff]
    %v129 = vld [vmem:[%s3 + $0x68] sm:$0xff]
    %v130 = vld [vmem:[%s3 + $0x70] sm:$0xff]
    %v131 = vld [vmem:[%s3 + $0x78] sm:$0xff]
    %v132 = vld [vmem:[%s4] sm:$0x3]
    %v133 = vpack.c.bf16 %v115, %v115
    %v135 = vlaneseq
    %v136 = vshrl.u32 %v135, 7
    %v137 = vsub.s32 0, %v136
    %v138 = vrot.slane %v132, %v137
    %v139 = vlaneseq
    %v140 = vshrl.u32 %v139, 7
    %v141 = vsub.s32 1, %v140
    %v142 = vrot.slane %v132, %v141
    %v161 = vunpack.c.l.b16 %v116
    %v162 = vunpack.c.h.b16 %v116
    %v163 = vunpack.c.l.b16 %v117
    %v164 = vunpack.c.h.b16 %v117
    %v165 = vunpack.c.l.b16 %v118
    %v166 = vunpack.c.h.b16 %v118
    %v167 = vunpack.c.l.b16 %v119
    %v168 = vunpack.c.h.b16 %v119
    %v169 = vunpack.c.l.b16 %v120
    %v170 = vunpack.c.h.b16 %v120
    %v171 = vunpack.c.l.b16 %v121
    %v172 = vunpack.c.h.b16 %v121
    %v173 = vunpack.c.l.b16 %v122
    %v174 = vunpack.c.h.b16 %v122
    %v175 = vunpack.c.l.b16 %v123
    %v176 = vunpack.c.h.b16 %v123
    %v177 = vunpack.c.l.b16 %v124
    %v178 = vunpack.c.h.b16 %v124
    %v179 = vunpack.c.l.b16 %v125
    %v180 = vunpack.c.h.b16 %v125
    %v181 = vunpack.c.l.b16 %v126
    %v182 = vunpack.c.h.b16 %v126
    %v183 = vunpack.c.l.b16 %v127
    %v184 = vunpack.c.h.b16 %v127
    %v185 = vunpack.c.l.b16 %v128
    %v186 = vunpack.c.h.b16 %v128
    %v187 = vunpack.c.l.b16 %v129
    %v188 = vunpack.c.h.b16 %v129
    %v189 = vunpack.c.l.b16 %v130
    %v190 = vunpack.c.h.b16 %v130
    %v191 = vunpack.c.l.b16 %v131
    %v192 = vunpack.c.h.b16 %v131
    %v193 = vpack.c.b16 %v163, %v161
    %v194 = vpack.c.b16 %v164, %v162
    %v195 = vpack.c.b16 %v167, %v165
    %v196 = vpack.c.b16 %v168, %v166
    %v197 = vpack.c.b16 %v171, %v169
    %v198 = vpack.c.b16 %v172, %v170
    %v199 = vpack.c.b16 %v175, %v173
    %v200 = vpack.c.b16 %v176, %v174
    %v201 = vpack.c.b16 %v179, %v177
    %v202 = vpack.c.b16 %v180, %v178
    %v203 = vpack.c.b16 %v183, %v181
    %v204 = vpack.c.b16 %v184, %v182
    %v205 = vpack.c.b16 %v187, %v185
    %v206 = vpack.c.b16 %v188, %v186
    %v207 = vpack.c.b16 %v191, %v189
    %v208 = vpack.c.b16 %v192, %v190
    %225 = vmatprep.subr.bf16.mxu0 %v194
    %226 = vmatpush1.bf16.msra.mxu0 %v193
    %227 = vmatprep.subr.bf16.mxu0 %v196
    %228 = vmatpush1.bf16.msra.mxu0 %v195
    %229 = vmatprep.subr.bf16.mxu0 %v198
    %230 = vmatpush1.bf16.msra.mxu0 %v197
    %231 = vmatprep.subr.bf16.mxu0 %v200
    %232 = vmatpush1.bf16.msra.mxu0 %v199
    %233 = vmatprep.subr.bf16.mxu0 %v202
    %234 = vmatpush1.bf16.msra.mxu0 %v201
    %235 = vmatprep.subr.bf16.mxu0 %v204
    %236 = vmatpush1.bf16.msra.mxu0 %v203
    %237 = vmatprep.subr.bf16.mxu0 %v206
    %238 = vmatpush1.bf16.msra.mxu0 %v205
    %239 = vmatprep.subr.bf16.mxu0 %v208
    %240 = vmatpush1.bf16.msra.mxu0 %v207
    %241 = vmatprep.subr.bf16.mxu0 0
    %242 = vmatpush1.bf16.msra.mxu0 0
    %243 = vmatprep.subr.bf16.mxu0 0
    %244 = vmatpush1.bf16.msra.mxu0 0
    %245 = vmatprep.subr.bf16.mxu0 0
    %246 = vmatpush1.bf16.msra.mxu0 0
    %247 = vmatprep.subr.bf16.mxu0 0
    %248 = vmatpush1.bf16.msra.mxu0 0
    %249 = vmatprep.subr.bf16.mxu0 0
    %250 = vmatpush1.bf16.msra.mxu0 0
    %251 = vmatprep.subr.bf16.mxu0 0
    %252 = vmatpush1.bf16.msra.mxu0 0
    %253 = vmatprep.subr.bf16.mxu0 0
    %254 = vmatpush1.bf16.msra.mxu0 0
    %255 = vmatprep.subr.bf16.mxu0 0
    %256 = vmatpush1.bf16.msra.mxu0 0
    %257 = vmatprep.mubr.bf16.mxu0 0
    %258 = vmatmul.mubr.bf16.gmra.mrb[0].mxu0 %v133
    %v259 = vpop.f32.mrb[0].mxu0
    %v260 = vadd.f32 %v138, %v259
    %v261 = vpop.f32.mrb[0].mxu0
    %v262 = vadd.f32 %v142, %v261
    %v263 = vpop.f32.mrb[0].mxu0
    %v264 = vpop.f32.mrb[0].mxu0
    %265 = vdwg.mxu0
    %v266 = vxor.u32 %v260, 2147483648
    %v267 = vxor.u32 %v262, 2147483648
    %v268 = vmul.f32 %v266, 1.442695
    %v269 = vpow.pop %v268
    %v270 = vmul.f32 %v267, 1.442695
    %v271 = vpow.pop %v270
    %v272 = vadd.f32 %v269, 1.0
    %v273 = vadd.f32 %v271, 1.0
    %v274 = vrcp.pop %v272
    %v275 = vmul.f32 1.0, %v274
    %v276 = vrcp.pop %v273
    %v277 = vmul.f32 1.0, %v276
    %v278 = vmul.f32 %v260, %v275
    %v279 = vmul.f32 %v262, %v277
    %v280 = vld [vmem:[%s5] sm:$0xff]
    %v281 = vld [vmem:[%s5 + $0x8] sm:$0xff]
    %v282 = vld [vmem:[%s5 + $0x10] sm:$0xff]
    %v283 = vld [vmem:[%s5 + $0x18] sm:$0xff]
    %v284 = vld [vmem:[%s5 + $0x20] sm:$0xff]
    %v285 = vld [vmem:[%s5 + $0x28] sm:$0xff]
    %v286 = vld [vmem:[%s5 + $0x30] sm:$0xff]
    %v287 = vld [vmem:[%s5 + $0x38] sm:$0xff]
    %v288 = vld [vmem:[%s5 + $0x40] sm:$0xff]
    %v289 = vld [vmem:[%s5 + $0x48] sm:$0xff]
    %v290 = vld [vmem:[%s5 + $0x50] sm:$0xff]
    %v291 = vld [vmem:[%s5 + $0x58] sm:$0xff]
    %v292 = vld [vmem:[%s5 + $0x60] sm:$0xff]
    %v293 = vld [vmem:[%s5 + $0x68] sm:$0xff]
    %v294 = vld [vmem:[%s5 + $0x70] sm:$0xff]
    %v295 = vld [vmem:[%s5 + $0x78] sm:$0xff]
    %v296 = vld [vmem:[%s5 + $0x80] sm:$0xff]
    %v297 = vld [vmem:[%s5 + $0x88] sm:$0xff]
    %v298 = vld [vmem:[%s5 + $0x90] sm:$0xff]
    %v299 = vld [vmem:[%s5 + $0x98] sm:$0xff]
    %v300 = vld [vmem:[%s5 + $0xa0] sm:$0xff]
    %v301 = vld [vmem:[%s5 + $0xa8] sm:$0xff]
    %v302 = vld [vmem:[%s5 + $0xb0] sm:$0xff]
    %v303 = vld [vmem:[%s5 + $0xb8] sm:$0xff]
    %v304 = vld [vmem:[%s5 + $0xc0] sm:$0xff]
    %v305 = vld [vmem:[%s5 + $0xc8] sm:$0xff]
    %v306 = vld [vmem:[%s5 + $0xd0] sm:$0xff]
    %v307 = vld [vmem:[%s5 + $0xd8] sm:$0xff]
    %v308 = vld [vmem:[%s5 + $0xe0] sm:$0xff]
    %v309 = vld [vmem:[%s5 + $0xe8] sm:$0xff]
    %v310 = vld [vmem:[%s5 + $0xf0] sm:$0xff]
    %v311 = vld [vmem:[%s5 + $0xf8] sm:$0xff]
    %v312 = vld [vmem:[%s5 + $0x100] sm:$0xff]
    %v313 = vld [vmem:[%s5 + $0x108] sm:$0xff]
    %v314 = vld [vmem:[%s5 + $0x110] sm:$0xff]
    %v315 = vld [vmem:[%s5 + $0x118] sm:$0xff]
    %v316 = vld [vmem:[%s5 + $0x120] sm:$0xff]
    %v317 = vld [vmem:[%s5 + $0x128] sm:$0xff]
    %v318 = vld [vmem:[%s5 + $0x130] sm:$0xff]
    %v319 = vld [vmem:[%s5 + $0x138] sm:$0xff]
    %v320 = vld [vmem:[%s5 + $0x140] sm:$0xff]
    %v321 = vld [vmem:[%s5 + $0x148] sm:$0xff]
    %v322 = vld [vmem:[%s5 + $0x150] sm:$0xff]
    %v323 = vld [vmem:[%s5 + $0x158] sm:$0xff]
    %v324 = vld [vmem:[%s5 + $0x160] sm:$0xff]
    %v325 = vld [vmem:[%s5 + $0x168] sm:$0xff]
    %v326 = vld [vmem:[%s5 + $0x170] sm:$0xff]
    %v327 = vld [vmem:[%s5 + $0x178] sm:$0xff]
    %v328 = vld [vmem:[%s5 + $0x180] sm:$0xff]
    %v329 = vld [vmem:[%s5 + $0x188] sm:$0xff]
    %v330 = vld [vmem:[%s5 + $0x190] sm:$0xff]
    %v331 = vld [vmem:[%s5 + $0x198] sm:$0xff]
    %v332 = vld [vmem:[%s5 + $0x1a0] sm:$0xff]
    %v333 = vld [vmem:[%s5 + $0x1a8] sm:$0xff]
    %v334 = vld [vmem:[%s5 + $0x1b0] sm:$0xff]
    %v335 = vld [vmem:[%s5 + $0x1b8] sm:$0xff]
    %v336 = vld [vmem:[%s5 + $0x1c0] sm:$0xff]
    %v337 = vld [vmem:[%s5 + $0x1c8] sm:$0xff]
    %v338 = vld [vmem:[%s5 + $0x1d0] sm:$0xff]
    %v339 = vld [vmem:[%s5 + $0x1d8] sm:$0xff]
    %v340 = vld [vmem:[%s5 + $0x1e0] sm:$0xff]
    %v341 = vld [vmem:[%s5 + $0x1e8] sm:$0xff]
    %v342 = vld [vmem:[%s5 + $0x1f0] sm:$0xff]
    %v343 = vld [vmem:[%s5 + $0x1f8] sm:$0xff]
    %v344 = vld [vmem:[%s6] sm:$0xf]
    %v345 = vpack.c.bf16 %v278, %v278
    %v346 = vpack.c.bf16 %v279, %v279
    %v348 = vlaneseq
    %v349 = vshrl.u32 %v348, 7
    %v350 = vsub.s32 0, %v349
    %v351 = vrot.slane %v344, %v350
    %v352 = vlaneseq
    %v353 = vshrl.u32 %v352, 7
    %v354 = vsub.s32 1, %v353
    %v355 = vrot.slane %v344, %v354
    %v356 = vlaneseq
    %v357 = vshrl.u32 %v356, 7
    %v358 = vsub.s32 2, %v357
    %v359 = vrot.slane %v344, %v358
    %v360 = vlaneseq
    %v361 = vshrl.u32 %v360, 7
    %v362 = vsub.s32 3, %v361
    %v363 = vrot.slane %v344, %v362
    %v432 = vunpack.c.l.b16 %v280
    %v433 = vunpack.c.h.b16 %v280
    %v434 = vunpack.c.l.b16 %v281
    %v435 = vunpack.c.h.b16 %v281
    %v436 = vunpack.c.l.b16 %v282
    %v437 = vunpack.c.h.b16 %v282
    %v438 = vunpack.c.l.b16 %v283
    %v439 = vunpack.c.h.b16 %v283
    %v440 = vunpack.c.l.b16 %v284
    %v441 = vunpack.c.h.b16 %v284
    %v442 = vunpack.c.l.b16 %v285
    %v443 = vunpack.c.h.b16 %v285
    %v444 = vunpack.c.l.b16 %v286
    %v445 = vunpack.c.h.b16 %v286
    %v446 = vunpack.c.l.b16 %v287
    %v447 = vunpack.c.h.b16 %v287
    %v448 = vunpack.c.l.b16 %v288
    %v449 = vunpack.c.h.b16 %v288
    %v450 = vunpack.c.l.b16 %v289
    %v451 = vunpack.c.h.b16 %v289
    %v452 = vunpack.c.l.b16 %v290
    %v453 = vunpack.c.h.b16 %v290
    %v454 = vunpack.c.l.b16 %v291
    %v455 = vunpack.c.h.b16 %v291
    %v456 = vunpack.c.l.b16 %v292
    %v457 = vunpack.c.h.b16 %v292
    %v458 = vunpack.c.l.b16 %v293
    %v459 = vunpack.c.h.b16 %v293
    %v460 = vunpack.c.l.b16 %v294
    %v461 = vunpack.c.h.b16 %v294
    %v462 = vunpack.c.l.b16 %v295
    %v463 = vunpack.c.h.b16 %v295
    %v464 = vunpack.c.l.b16 %v296
    %v465 = vunpack.c.h.b16 %v296
    %v466 = vunpack.c.l.b16 %v297
    %v467 = vunpack.c.h.b16 %v297
    %v468 = vunpack.c.l.b16 %v298
    %v469 = vunpack.c.h.b16 %v298
    %v470 = vunpack.c.l.b16 %v299
    %v471 = vunpack.c.h.b16 %v299
    %v472 = vunpack.c.l.b16 %v300
    %v473 = vunpack.c.h.b16 %v300
    %v474 = vunpack.c.l.b16 %v301
    %v475 = vunpack.c.h.b16 %v301
    %v476 = vunpack.c.l.b16 %v302
    %v477 = vunpack.c.h.b16 %v302
    %v478 = vunpack.c.l.b16 %v303
    %v479 = vunpack.c.h.b16 %v303
    %v480 = vunpack.c.l.b16 %v304
    %v481 = vunpack.c.h.b16 %v304
    %v482 = vunpack.c.l.b16 %v305
    %v483 = vunpack.c.h.b16 %v305
    %v484 = vunpack.c.l.b16 %v306
    %v485 = vunpack.c.h.b16 %v306
    %v486 = vunpack.c.l.b16 %v307
    %v487 = vunpack.c.h.b16 %v307
    %v488 = vunpack.c.l.b16 %v308
    %v489 = vunpack.c.h.b16 %v308
    %v490 = vunpack.c.l.b16 %v309
    %v491 = vunpack.c.h.b16 %v309
    %v492 = vunpack.c.l.b16 %v310
    %v493 = vunpack.c.h.b16 %v310
    %v494 = vunpack.c.l.b16 %v311
    %v495 = vunpack.c.h.b16 %v311
    %v496 = vunpack.c.l.b16 %v312
    %v497 = vunpack.c.h.b16 %v312
    %v498 = vunpack.c.l.b16 %v313
    %v499 = vunpack.c.h.b16 %v313
    %v500 = vunpack.c.l.b16 %v314
    %v501 = vunpack.c.h.b16 %v314
    %v502 = vunpack.c.l.b16 %v315
    %v503 = vunpack.c.h.b16 %v315
    %v504 = vunpack.c.l.b16 %v316
    %v505 = vunpack.c.h.b16 %v316
    %v506 = vunpack.c.l.b16 %v317
    %v507 = vunpack.c.h.b16 %v317
    %v508 = vunpack.c.l.b16 %v318
    %v509 = vunpack.c.h.b16 %v318
    %v510 = vunpack.c.l.b16 %v319
    %v511 = vunpack.c.h.b16 %v319
    %v512 = vunpack.c.l.b16 %v320
    %v513 = vunpack.c.h.b16 %v320
    %v514 = vunpack.c.l.b16 %v321
    %v515 = vunpack.c.h.b16 %v321
    %v516 = vunpack.c.l.b16 %v322
    %v517 = vunpack.c.h.b16 %v322
    %v518 = vunpack.c.l.b16 %v323
    %v519 = vunpack.c.h.b16 %v323
    %v520 = vunpack.c.l.b16 %v324
    %v521 = vunpack.c.h.b16 %v324
    %v522 = vunpack.c.l.b16 %v325
    %v523 = vunpack.c.h.b16 %v325
    %v524 = vunpack.c.l.b16 %v326
    %v525 = vunpack.c.h.b16 %v326
    %v526 = vunpack.c.l.b16 %v327
    %v527 = vunpack.c.h.b16 %v327
    %v528 = vunpack.c.l.b16 %v328
    %v529 = vunpack.c.h.b16 %v328
    %v530 = vunpack.c.l.b16 %v329
    %v531 = vunpack.c.h.b16 %v329
    %v532 = vunpack.c.l.b16 %v330
    %v533 = vunpack.c.h.b16 %v330
    %v534 = vunpack.c.l.b16 %v331
    %v535 = vunpack.c.h.b16 %v331
    %v536 = vunpack.c.l.b16 %v332
    %v537 = vunpack.c.h.b16 %v332
    %v538 = vunpack.c.l.b16 %v333
    %v539 = vunpack.c.h.b16 %v333
    %v540 = vunpack.c.l.b16 %v334
    %v541 = vunpack.c.h.b16 %v334
    %v542 = vunpack.c.l.b16 %v335
    %v543 = vunpack.c.h.b16 %v335
    %v544 = vunpack.c.l.b16 %v336
    %v545 = vunpack.c.h.b16 %v336
    %v546 = vunpack.c.l.b16 %v337
    %v547 = vunpack.c.h.b16 %v337
    %v548 = vunpack.c.l.b16 %v338
    %v549 = vunpack.c.h.b16 %v338
    %v550 = vunpack.c.l.b16 %v339
    %v551 = vunpack.c.h.b16 %v339
    %v552 = vunpack.c.l.b16 %v340
    %v553 = vunpack.c.h.b16 %v340
    %v554 = vunpack.c.l.b16 %v341
    %v555 = vunpack.c.h.b16 %v341
    %v556 = vunpack.c.l.b16 %v342
    %v557 = vunpack.c.h.b16 %v342
    %v558 = vunpack.c.l.b16 %v343
    %v559 = vunpack.c.h.b16 %v343
    %v560 = vpack.c.b16 %v436, %v432
    %v561 = vpack.c.b16 %v437, %v433
    %v562 = vpack.c.b16 %v438, %v434
    %v563 = vpack.c.b16 %v439, %v435
    %v564 = vpack.c.b16 %v444, %v440
    %v565 = vpack.c.b16 %v445, %v441
    %v566 = vpack.c.b16 %v446, %v442
    %v567 = vpack.c.b16 %v447, %v443
    %v568 = vpack.c.b16 %v452, %v448
    %v569 = vpack.c.b16 %v453, %v449
    %v570 = vpack.c.b16 %v454, %v450
    %v571 = vpack.c.b16 %v455, %v451
    %v572 = vpack.c.b16 %v460, %v456
    %v573 = vpack.c.b16 %v461, %v457
    %v574 = vpack.c.b16 %v462, %v458
    %v575 = vpack.c.b16 %v463, %v459
    %v576 = vpack.c.b16 %v468, %v464
    %v577 = vpack.c.b16 %v469, %v465
    %v578 = vpack.c.b16 %v470, %v466
    %v579 = vpack.c.b16 %v471, %v467
    %v580 = vpack.c.b16 %v476, %v472
    %v581 = vpack.c.b16 %v477, %v473
    %v582 = vpack.c.b16 %v478, %v474
    %v583 = vpack.c.b16 %v479, %v475
    %v584 = vpack.c.b16 %v484, %v480
    %v585 = vpack.c.b16 %v485, %v481
    %v586 = vpack.c.b16 %v486, %v482
    %v587 = vpack.c.b16 %v487, %v483
    %v588 = vpack.c.b16 %v492, %v488
    %v589 = vpack.c.b16 %v493, %v489
    %v590 = vpack.c.b16 %v494, %v490
    %v591 = vpack.c.b16 %v495, %v491
    %v592 = vpack.c.b16 %v500, %v496
    %v593 = vpack.c.b16 %v501, %v497
    %v594 = vpack.c.b16 %v502, %v498
    %v595 = vpack.c.b16 %v503, %v499
    %v596 = vpack.c.b16 %v508, %v504
    %v597 = vpack.c.b16 %v509, %v505
    %v598 = vpack.c.b16 %v510, %v506
    %v599 = vpack.c.b16 %v511, %v507
    %v600 = vpack.c.b16 %v516, %v512
    %v601 = vpack.c.b16 %v517, %v513
    %v602 = vpack.c.b16 %v518, %v514
    %v603 = vpack.c.b16 %v519, %v515
    %v604 = vpack.c.b16 %v524, %v520
    %v605 = vpack.c.b16 %v525, %v521
    %v606 = vpack.c.b16 %v526, %v522
    %v607 = vpack.c.b16 %v527, %v523
    %v608 = vpack.c.b16 %v532, %v528
    %v609 = vpack.c.b16 %v533, %v529
    %v610 = vpack.c.b16 %v534, %v530
    %v611 = vpack.c.b16 %v535, %v531
    %v612 = vpack.c.b16 %v540, %v536
    %v613 = vpack.c.b16 %v541, %v537
    %v614 = vpack.c.b16 %v542, %v538
    %v615 = vpack.c.b16 %v543, %v539
    %v616 = vpack.c.b16 %v548, %v544
    %v617 = vpack.c.b16 %v549, %v545
    %v618 = vpack.c.b16 %v550, %v546
    %v619 = vpack.c.b16 %v551, %v547
    %v620 = vpack.c.b16 %v556, %v552
    %v621 = vpack.c.b16 %v557, %v553
    %v622 = vpack.c.b16 %v558, %v554
    %v623 = vpack.c.b16 %v559, %v555
    %688 = vmatprep.subr.bf16.mxu0 %v561
    %689 = vmatpush1.bf16.msra.mxu0 %v560
    %690 = vmatprep.subr.bf16.mxu0 %v565
    %691 = vmatpush1.bf16.msra.mxu0 %v564
    %692 = vmatprep.subr.bf16.mxu0 %v569
    %693 = vmatpush1.bf16.msra.mxu0 %v568
    %694 = vmatprep.subr.bf16.mxu0 %v573
    %695 = vmatpush1.bf16.msra.mxu0 %v572
    %696 = vmatprep.subr.bf16.mxu0 %v577
    %697 = vmatpush1.bf16.msra.mxu0 %v576
    %698 = vmatprep.subr.bf16.mxu0 %v581
    %699 = vmatpush1.bf16.msra.mxu0 %v580
    %700 = vmatprep.subr.bf16.mxu0 %v585
    %701 = vmatpush1.bf16.msra.mxu0 %v584
    %702 = vmatprep.subr.bf16.mxu0 %v589
    %703 = vmatpush1.bf16.msra.mxu0 %v588
    %704 = vmatprep.subr.bf16.mxu0 %v593
    %705 = vmatpush1.bf16.msra.mxu0 %v592
    %706 = vmatprep.subr.bf16.mxu0 %v597
    %707 = vmatpush1.bf16.msra.mxu0 %v596
    %708 = vmatprep.subr.bf16.mxu0 %v601
    %709 = vmatpush1.bf16.msra.mxu0 %v600
    %710 = vmatprep.subr.bf16.mxu0 %v605
    %711 = vmatpush1.bf16.msra.mxu0 %v604
    %712 = vmatprep.subr.bf16.mxu0 %v609
    %713 = vmatpush1.bf16.msra.mxu0 %v608
    %714 = vmatprep.subr.bf16.mxu0 %v613
    %715 = vmatpush1.bf16.msra.mxu0 %v612
    %716 = vmatprep.subr.bf16.mxu0 %v617
    %717 = vmatpush1.bf16.msra.mxu0 %v616
    %718 = vmatprep.subr.bf16.mxu0 %v621
    %719 = vmatpush1.bf16.msra.mxu0 %v620
    %720 = vmatprep.mubr.bf16.mxu0 %v346
    %721 = vmatmul.mubr.bf16.gmra.mrb[0].mxu0 %v345
    %v722 = vpop.f32.mrb[0].mxu0
    %v723 = vadd.f32 %v351, %v722
    %v724 = vpop.f32.mrb[0].mxu0
    %v725 = vadd.f32 %v355, %v724
    %v726 = vpop.f32.mrb[0].mxu0
    %v727 = vpop.f32.mrb[0].mxu0
    %728 = vdwg.mxu0
    %729 = vmatprep.subr.bf16.mxu0 %v563
    %730 = vmatpush1.bf16.msra.mxu0 %v562
    %731 = vmatprep.subr.bf16.mxu0 %v567
    %732 = vmatpush1.bf16.msra.mxu0 %v566
    %733 = vmatprep.subr.bf16.mxu0 %v571
    %734 = vmatpush1.bf16.msra.mxu0 %v570
    %735 = vmatprep.subr.bf16.mxu0 %v575
    %736 = vmatpush1.bf16.msra.mxu0 %v574
    %737 = vmatprep.subr.bf16.mxu0 %v579
    %738 = vmatpush1.bf16.msra.mxu0 %v578
    %739 = vmatprep.subr.bf16.mxu0 %v583
    %740 = vmatpush1.bf16.msra.mxu0 %v582
    %741 = vmatprep.subr.bf16.mxu0 %v587
    %742 = vmatpush1.bf16.msra.mxu0 %v586
    %743 = vmatprep.subr.bf16.mxu0 %v591
    %744 = vmatpush1.bf16.msra.mxu0 %v590
    %745 = vmatprep.subr.bf16.mxu0 %v595
    %746 = vmatpush1.bf16.msra.mxu0 %v594
    %747 = vmatprep.subr.bf16.mxu0 %v599
    %748 = vmatpush1.bf16.msra.mxu0 %v598
    %749 = vmatprep.subr.bf16.mxu0 %v603
    %750 = vmatpush1.bf16.msra.mxu0 %v602
    %751 = vmatprep.subr.bf16.mxu0 %v607
    %752 = vmatpush1.bf16.msra.mxu0 %v606
    %753 = vmatprep.subr.bf16.mxu0 %v611
    %754 = vmatpush1.bf16.msra.mxu0 %v610
    %755 = vmatprep.subr.bf16.mxu0 %v615
    %756 = vmatpush1.bf16.msra.mxu0 %v614
    %757 = vmatprep.subr.bf16.mxu0 %v619
    %758 = vmatpush1.bf16.msra.mxu0 %v618
    %759 = vmatprep.subr.bf16.mxu0 %v623
    %760 = vmatpush1.bf16.msra.mxu0 %v622
    %761 = vmatprep.mubr.bf16.mxu0 %v346
    %762 = vmatmul.mubr.bf16.gmra.mrb[0].mxu0 %v345
    %v763 = vpop.f32.mrb[0].mxu0
    %v764 = vadd.f32 %v359, %v763
    %v765 = vpop.f32.mrb[0].mxu0
    %v766 = vadd.f32 %v363, %v765
    %v767 = vpop.f32.mrb[0].mxu0
    %v768 = vpop.f32.mrb[0].mxu0
    %769 = vdwg.mxu0
    %v770 = vxor.u32 %v723, 2147483648
    %v771 = vxor.u32 %v725, 2147483648
    %v772 = vxor.u32 %v764, 2147483648
    %v773 = vxor.u32 %v766, 2147483648
    %v774 = vmul.f32 %v770, 1.442695
    %v775 = vpow.pop %v774
    %v776 = vmul.f32 %v771, 1.442695
    %v777 = vpow.pop %v776
    %v778 = vmul.f32 %v772, 1.442695
    %v779 = vpow.pop %v778
    %v780 = vmul.f32 %v773, 1.442695
    %v781 = vpow.pop %v780
    %v782 = vadd.f32 %v775, 1.0
    %v783 = vadd.f32 %v777, 1.0
    %v784 = vadd.f32 %v779, 1.0
    %v785 = vadd.f32 %v781, 1.0
    %v786 = vrcp.pop %v782
    %v787 = vmul.f32 1.0, %v786
    %v788 = vrcp.pop %v783
    %v789 = vmul.f32 1.0, %v788
    %v790 = vrcp.pop %v784
    %v791 = vmul.f32 1.0, %v790
    %v792 = vrcp.pop %v785
    %v793 = vmul.f32 1.0, %v792
    %v794 = vmul.f32 %v723, %v787
    %v795 = vmul.f32 %v725, %v789
    %v796 = vmul.f32 %v764, %v791
    %v797 = vmul.f32 %v766, %v793
    %v798 = vld [vmem:[%s7] sm:$0xff]
    %v799 = vld [vmem:[%s7 + $0x8] sm:$0xff]
    %v800 = vld [vmem:[%s7 + $0x10] sm:$0xff]
    %v801 = vld [vmem:[%s7 + $0x18] sm:$0xff]
    %v802 = vld [vmem:[%s7 + $0x20] sm:$0xff]
    %v803 = vld [vmem:[%s7 + $0x28] sm:$0xff]
    %v804 = vld [vmem:[%s7 + $0x30] sm:$0xff]
    %v805 = vld [vmem:[%s7 + $0x38] sm:$0xff]
    %v806 = vld [vmem:[%s7 + $0x40] sm:$0xff]
    %v807 = vld [vmem:[%s7 + $0x48] sm:$0xff]
    %v808 = vld [vmem:[%s7 + $0x50] sm:$0xff]
    %v809 = vld [vmem:[%s7 + $0x58] sm:$0xff]
    %v810 = vld [vmem:[%s7 + $0x60] sm:$0xff]
    %v811 = vld [vmem:[%s7 + $0x68] sm:$0xff]
    %v812 = vld [vmem:[%s7 + $0x70] sm:$0xff]
    %v813 = vld [vmem:[%s7 + $0x78] sm:$0xff]
    %v814 = vld [vmem:[%s7 + $0x80] sm:$0xff]
    %v815 = vld [vmem:[%s7 + $0x88] sm:$0xff]
    %v816 = vld [vmem:[%s7 + $0x90] sm:$0xff]
    %v817 = vld [vmem:[%s7 + $0x98] sm:$0xff]
    %v818 = vld [vmem:[%s7 + $0xa0] sm:$0xff]
    %v819 = vld [vmem:[%s7 + $0xa8] sm:$0xff]
    %v820 = vld [vmem:[%s7 + $0xb0] sm:$0xff]
    %v821 = vld [vmem:[%s7 + $0xb8] sm:$0xff]
    %v822 = vld [vmem:[%s7 + $0xc0] sm:$0xff]
    %v823 = vld [vmem:[%s7 + $0xc8] sm:$0xff]
    %v824 = vld [vmem:[%s7 + $0xd0] sm:$0xff]
    %v825 = vld [vmem:[%s7 + $0xd8] sm:$0xff]
    %v826 = vld [vmem:[%s7 + $0xe0] sm:$0xff]
    %v827 = vld [vmem:[%s7 + $0xe8] sm:$0xff]
    %v828 = vld [vmem:[%s7 + $0xf0] sm:$0xff]
    %v829 = vld [vmem:[%s7 + $0xf8] sm:$0xff]
    %v830 = vld [vmem:[%s7 + $0x100] sm:$0xff]
    %v831 = vld [vmem:[%s7 + $0x108] sm:$0xff]
    %v832 = vld [vmem:[%s7 + $0x110] sm:$0xff]
    %v833 = vld [vmem:[%s7 + $0x118] sm:$0xff]
    %v834 = vld [vmem:[%s7 + $0x120] sm:$0xff]
    %v835 = vld [vmem:[%s7 + $0x128] sm:$0xff]
    %v836 = vld [vmem:[%s7 + $0x130] sm:$0xff]
    %v837 = vld [vmem:[%s7 + $0x138] sm:$0xff]
    %v838 = vld [vmem:[%s7 + $0x140] sm:$0xff]
    %v839 = vld [vmem:[%s7 + $0x148] sm:$0xff]
    %v840 = vld [vmem:[%s7 + $0x150] sm:$0xff]
    %v841 = vld [vmem:[%s7 + $0x158] sm:$0xff]
    %v842 = vld [vmem:[%s7 + $0x160] sm:$0xff]
    %v843 = vld [vmem:[%s7 + $0x168] sm:$0xff]
    %v844 = vld [vmem:[%s7 + $0x170] sm:$0xff]
    %v845 = vld [vmem:[%s7 + $0x178] sm:$0xff]
    %v846 = vld [vmem:[%s7 + $0x180] sm:$0xff]
    %v847 = vld [vmem:[%s7 + $0x188] sm:$0xff]
    %v848 = vld [vmem:[%s7 + $0x190] sm:$0xff]
    %v849 = vld [vmem:[%s7 + $0x198] sm:$0xff]
    %v850 = vld [vmem:[%s7 + $0x1a0] sm:$0xff]
    %v851 = vld [vmem:[%s7 + $0x1a8] sm:$0xff]
    %v852 = vld [vmem:[%s7 + $0x1b0] sm:$0xff]
    %v853 = vld [vmem:[%s7 + $0x1b8] sm:$0xff]
    %v854 = vld [vmem:[%s7 + $0x1c0] sm:$0xff]
    %v855 = vld [vmem:[%s7 + $0x1c8] sm:$0xff]
    %v856 = vld [vmem:[%s7 + $0x1d0] sm:$0xff]
    %v857 = vld [vmem:[%s7 + $0x1d8] sm:$0xff]
    %v858 = vld [vmem:[%s7 + $0x1e0] sm:$0xff]
    %v859 = vld [vmem:[%s7 + $0x1e8] sm:$0xff]
    %v860 = vld [vmem:[%s7 + $0x1f0] sm:$0xff]
    %v861 = vld [vmem:[%s7 + $0x1f8] sm:$0xff]
    %v862 = vld [vmem:[%s7 + $0x200] sm:$0xff]
    %v863 = vld [vmem:[%s7 + $0x208] sm:$0xff]
    %v864 = vld [vmem:[%s7 + $0x210] sm:$0xff]
    %v865 = vld [vmem:[%s7 + $0x218] sm:$0xff]
    %v866 = vld [vmem:[%s7 + $0x220] sm:$0xff]
    %v867 = vld [vmem:[%s7 + $0x228] sm:$0xff]
    %v868 = vld [vmem:[%s7 + $0x230] sm:$0xff]
    %v869 = vld [vmem:[%s7 + $0x238] sm:$0xff]
    %v870 = vld [vmem:[%s7 + $0x240] sm:$0xff]
    %v871 = vld [vmem:[%s7 + $0x248] sm:$0xff]
    %v872 = vld [vmem:[%s7 + $0x250] sm:$0xff]
    %v873 = vld [vmem:[%s7 + $0x258] sm:$0xff]
    %v874 = vld [vmem:[%s7 + $0x260] sm:$0xff]
    %v875 = vld [vmem:[%s7 + $0x268] sm:$0xff]
    %v876 = vld [vmem:[%s7 + $0x270] sm:$0xff]
    %v877 = vld [vmem:[%s7 + $0x278] sm:$0xff]
    %v878 = vld [vmem:[%s7 + $0x280] sm:$0xff]
    %v879 = vld [vmem:[%s7 + $0x288] sm:$0xff]
    %v880 = vld [vmem:[%s7 + $0x290] sm:$0xff]
    %v881 = vld [vmem:[%s7 + $0x298] sm:$0xff]
    %v882 = vld [vmem:[%s7 + $0x2a0] sm:$0xff]
    %v883 = vld [vmem:[%s7 + $0x2a8] sm:$0xff]
    %v884 = vld [vmem:[%s7 + $0x2b0] sm:$0xff]
    %v885 = vld [vmem:[%s7 + $0x2b8] sm:$0xff]
    %v886 = vld [vmem:[%s7 + $0x2c0] sm:$0xff]
    %v887 = vld [vmem:[%s7 + $0x2c8] sm:$0xff]
    %v888 = vld [vmem:[%s7 + $0x2d0] sm:$0xff]
    %v889 = vld [vmem:[%s7 + $0x2d8] sm:$0xff]
    %v890 = vld [vmem:[%s7 + $0x2e0] sm:$0xff]
    %v891 = vld [vmem:[%s7 + $0x2e8] sm:$0xff]
    %v892 = vld [vmem:[%s7 + $0x2f0] sm:$0xff]
    %v893 = vld [vmem:[%s7 + $0x2f8] sm:$0xff]
    %v894 = vld [vmem:[%s7 + $0x300] sm:$0xff]
    %v895 = vld [vmem:[%s7 + $0x308] sm:$0xff]
    %v896 = vld [vmem:[%s7 + $0x310] sm:$0xff]
    %v897 = vld [vmem:[%s7 + $0x318] sm:$0xff]
    %v898 = vld [vmem:[%s7 + $0x320] sm:$0xff]
    %v899 = vld [vmem:[%s7 + $0x328] sm:$0xff]
    %v900 = vld [vmem:[%s7 + $0x330] sm:$0xff]
    %v901 = vld [vmem:[%s7 + $0x338] sm:$0xff]
    %v902 = vld [vmem:[%s7 + $0x340] sm:$0xff]
    %v903 = vld [vmem:[%s7 + $0x348] sm:$0xff]
    %v904 = vld [vmem:[%s7 + $0x350] sm:$0xff]
    %v905 = vld [vmem:[%s7 + $0x358] sm:$0xff]
    %v906 = vld [vmem:[%s7 + $0x360] sm:$0xff]
    %v907 = vld [vmem:[%s7 + $0x368] sm:$0xff]
    %v908 = vld [vmem:[%s7 + $0x370] sm:$0xff]
    %v909 = vld [vmem:[%s7 + $0x378] sm:$0xff]
    %v910 = vld [vmem:[%s7 + $0x380] sm:$0xff]
    %v911 = vld [vmem:[%s7 + $0x388] sm:$0xff]
    %v912 = vld [vmem:[%s7 + $0x390] sm:$0xff]
    %v913 = vld [vmem:[%s7 + $0x398] sm:$0xff]
    %v914 = vld [vmem:[%s7 + $0x3a0] sm:$0xff]
    %v915 = vld [vmem:[%s7 + $0x3a8] sm:$0xff]
    %v916 = vld [vmem:[%s7 + $0x3b0] sm:$0xff]
    %v917 = vld [vmem:[%s7 + $0x3b8] sm:$0xff]
    %v918 = vld [vmem:[%s7 + $0x3c0] sm:$0xff]
    %v919 = vld [vmem:[%s7 + $0x3c8] sm:$0xff]
    %v920 = vld [vmem:[%s7 + $0x3d0] sm:$0xff]
    %v921 = vld [vmem:[%s7 + $0x3d8] sm:$0xff]
    %v922 = vld [vmem:[%s7 + $0x3e0] sm:$0xff]
    %v923 = vld [vmem:[%s7 + $0x3e8] sm:$0xff]
    %v924 = vld [vmem:[%s7 + $0x3f0] sm:$0xff]
    %v925 = vld [vmem:[%s7 + $0x3f8] sm:$0xff]
    %v926 = vld [vmem:[%s7 + $0x400] sm:$0xff]
    %v927 = vld [vmem:[%s7 + $0x408] sm:$0xff]
    %v928 = vld [vmem:[%s7 + $0x410] sm:$0xff]
    %v929 = vld [vmem:[%s7 + $0x418] sm:$0xff]
    %v930 = vld [vmem:[%s7 + $0x420] sm:$0xff]
    %v931 = vld [vmem:[%s7 + $0x428] sm:$0xff]
    %v932 = vld [vmem:[%s7 + $0x430] sm:$0xff]
    %v933 = vld [vmem:[%s7 + $0x438] sm:$0xff]
    %v934 = vld [vmem:[%s7 + $0x440] sm:$0xff]
    %v935 = vld [vmem:[%s7 + $0x448] sm:$0xff]
    %v936 = vld [vmem:[%s7 + $0x450] sm:$0xff]
    %v937 = vld [vmem:[%s7 + $0x458] sm:$0xff]
    %v938 = vld [vmem:[%s7 + $0x460] sm:$0xff]
    %v939 = vld [vmem:[%s7 + $0x468] sm:$0xff]
    %v940 = vld [vmem:[%s7 + $0x470] sm:$0xff]
    %v941 = vld [vmem:[%s7 + $0x478] sm:$0xff]
    %v942 = vld [vmem:[%s7 + $0x480] sm:$0xff]
    %v943 = vld [vmem:[%s7 + $0x488] sm:$0xff]
    %v944 = vld [vmem:[%s7 + $0x490] sm:$0xff]
    %v945 = vld [vmem:[%s7 + $0x498] sm:$0xff]
    %v946 = vld [vmem:[%s7 + $0x4a0] sm:$0xff]
    %v947 = vld [vmem:[%s7 + $0x4a8] sm:$0xff]
    %v948 = vld [vmem:[%s7 + $0x4b0] sm:$0xff]
    %v949 = vld [vmem:[%s7 + $0x4b8] sm:$0xff]
    %v950 = vld [vmem:[%s7 + $0x4c0] sm:$0xff]
    %v951 = vld [vmem:[%s7 + $0x4c8] sm:$0xff]
    %v952 = vld [vmem:[%s7 + $0x4d0] sm:$0xff]
    %v953 = vld [vmem:[%s7 + $0x4d8] sm:$0xff]
    %v954 = vld [vmem:[%s7 + $0x4e0] sm:$0xff]
    %v955 = vld [vmem:[%s7 + $0x4e8] sm:$0xff]
    %v956 = vld [vmem:[%s7 + $0x4f0] sm:$0xff]
    %v957 = vld [vmem:[%s7 + $0x4f8] sm:$0xff]
    %v958 = vld [vmem:[%s7 + $0x500] sm:$0xff]
    %v959 = vld [vmem:[%s7 + $0x508] sm:$0xff]
    %v960 = vld [vmem:[%s7 + $0x510] sm:$0xff]
    %v961 = vld [vmem:[%s7 + $0x518] sm:$0xff]
    %v962 = vld [vmem:[%s7 + $0x520] sm:$0xff]
    %v963 = vld [vmem:[%s7 + $0x528] sm:$0xff]
    %v964 = vld [vmem:[%s7 + $0x530] sm:$0xff]
    %v965 = vld [vmem:[%s7 + $0x538] sm:$0xff]
    %v966 = vld [vmem:[%s7 + $0x540] sm:$0xff]
    %v967 = vld [vmem:[%s7 + $0x548] sm:$0xff]
    %v968 = vld [vmem:[%s7 + $0x550] sm:$0xff]
    %v969 = vld [vmem:[%s7 + $0x558] sm:$0xff]
    %v970 = vld [vmem:[%s7 + $0x560] sm:$0xff]
    %v971 = vld [vmem:[%s7 + $0x568] sm:$0xff]
    %v972 = vld [vmem:[%s7 + $0x570] sm:$0xff]
    %v973 = vld [vmem:[%s7 + $0x578] sm:$0xff]
    %v974 = vld [vmem:[%s7 + $0x580] sm:$0xff]
    %v975 = vld [vmem:[%s7 + $0x588] sm:$0xff]
    %v976 = vld [vmem:[%s7 + $0x590] sm:$0xff]
    %v977 = vld [vmem:[%s7 + $0x598] sm:$0xff]
    %v978 = vld [vmem:[%s7 + $0x5a0] sm:$0xff]
    %v979 = vld [vmem:[%s7 + $0x5a8] sm:$0xff]
    %v980 = vld [vmem:[%s7 + $0x5b0] sm:$0xff]
    %v981 = vld [vmem:[%s7 + $0x5b8] sm:$0xff]
    %v982 = vld [vmem:[%s7 + $0x5c0] sm:$0xff]
    %v983 = vld [vmem:[%s7 + $0x5c8] sm:$0xff]
    %v984 = vld [vmem:[%s7 + $0x5d0] sm:$0xff]
    %v985 = vld [vmem:[%s7 + $0x5d8] sm:$0xff]
    %v986 = vld [vmem:[%s7 + $0x5e0] sm:$0xff]
    %v987 = vld [vmem:[%s7 + $0x5e8] sm:$0xff]
    %v988 = vld [vmem:[%s7 + $0x5f0] sm:$0xff]
    %v989 = vld [vmem:[%s7 + $0x5f8] sm:$0xff]
    %v990 = vld [vmem:[%s7 + $0x600] sm:$0xff]
    %v991 = vld [vmem:[%s7 + $0x608] sm:$0xff]
    %v992 = vld [vmem:[%s7 + $0x610] sm:$0xff]
    %v993 = vld [vmem:[%s7 + $0x618] sm:$0xff]
    %v994 = vld [vmem:[%s7 + $0x620] sm:$0xff]
    %v995 = vld [vmem:[%s7 + $0x628] sm:$0xff]
    %v996 = vld [vmem:[%s7 + $0x630] sm:$0xff]
    %v997 = vld [vmem:[%s7 + $0x638] sm:$0xff]
    %v998 = vld [vmem:[%s7 + $0x640] sm:$0xff]
    %v999 = vld [vmem:[%s7 + $0x648] sm:$0xff]
    %v1000 = vld [vmem:[%s7 + $0x650] sm:$0xff]
    %v1001 = vld [vmem:[%s7 + $0x658] sm:$0xff]
    %v1002 = vld [vmem:[%s7 + $0x660] sm:$0xff]
    %v1003 = vld [vmem:[%s7 + $0x668] sm:$0xff]
    %v1004 = vld [vmem:[%s7 + $0x670] sm:$0xff]
    %v1005 = vld [vmem:[%s7 + $0x678] sm:$0xff]
    %v1006 = vld [vmem:[%s7 + $0x680] sm:$0xff]
    %v1007 = vld [vmem:[%s7 + $0x688] sm:$0xff]
    %v1008 = vld [vmem:[%s7 + $0x690] sm:$0xff]
    %v1009 = vld [vmem:[%s7 + $0x698] sm:$0xff]
    %v1010 = vld [vmem:[%s7 + $0x6a0] sm:$0xff]
    %v1011 = vld [vmem:[%s7 + $0x6a8] sm:$0xff]
    %v1012 = vld [vmem:[%s7 + $0x6b0] sm:$0xff]
    %v1013 = vld [vmem:[%s7 + $0x6b8] sm:$0xff]
    %v1014 = vld [vmem:[%s7 + $0x6c0] sm:$0xff]
    %v1015 = vld [vmem:[%s7 + $0x6c8] sm:$0xff]
    %v1016 = vld [vmem:[%s7 + $0x6d0] sm:$0xff]
    %v1017 = vld [vmem:[%s7 + $0x6d8] sm:$0xff]
    %v1018 = vld [vmem:[%s7 + $0x6e0] sm:$0xff]
    %v1019 = vld [vmem:[%s7 + $0x6e8] sm:$0xff]
    %v1020 = vld [vmem:[%s7 + $0x6f0] sm:$0xff]
    %v1021 = vld [vmem:[%s7 + $0x6f8] sm:$0xff]
    %v1022 = vld [vmem:[%s7 + $0x700] sm:$0xff]
    %v1023 = vld [vmem:[%s7 + $0x708] sm:$0xff]
    %v1024 = vld [vmem:[%s7 + $0x710] sm:$0xff]
    %v1025 = vld [vmem:[%s7 + $0x718] sm:$0xff]
    %v1026 = vld [vmem:[%s7 + $0x720] sm:$0xff]
    %v1027 = vld [vmem:[%s7 + $0x728] sm:$0xff]
    %v1028 = vld [vmem:[%s7 + $0x730] sm:$0xff]
    %v1029 = vld [vmem:[%s7 + $0x738] sm:$0xff]
    %v1030 = vld [vmem:[%s7 + $0x740] sm:$0xff]
    %v1031 = vld [vmem:[%s7 + $0x748] sm:$0xff]
    %v1032 = vld [vmem:[%s7 + $0x750] sm:$0xff]
    %v1033 = vld [vmem:[%s7 + $0x758] sm:$0xff]
    %v1034 = vld [vmem:[%s7 + $0x760] sm:$0xff]
    %v1035 = vld [vmem:[%s7 + $0x768] sm:$0xff]
    %v1036 = vld [vmem:[%s7 + $0x770] sm:$0xff]
    %v1037 = vld [vmem:[%s7 + $0x778] sm:$0xff]
    %v1038 = vld [vmem:[%s7 + $0x780] sm:$0xff]
    %v1039 = vld [vmem:[%s7 + $0x788] sm:$0xff]
    %v1040 = vld [vmem:[%s7 + $0x790] sm:$0xff]
    %v1041 = vld [vmem:[%s7 + $0x798] sm:$0xff]
    %v1042 = vld [vmem:[%s7 + $0x7a0] sm:$0xff]
    %v1043 = vld [vmem:[%s7 + $0x7a8] sm:$0xff]
    %v1044 = vld [vmem:[%s7 + $0x7b0] sm:$0xff]
    %v1045 = vld [vmem:[%s7 + $0x7b8] sm:$0xff]
    %v1046 = vld [vmem:[%s7 + $0x7c0] sm:$0xff]
    %v1047 = vld [vmem:[%s7 + $0x7c8] sm:$0xff]
    %v1048 = vld [vmem:[%s7 + $0x7d0] sm:$0xff]
    %v1049 = vld [vmem:[%s7 + $0x7d8] sm:$0xff]
    %v1050 = vld [vmem:[%s7 + $0x7e0] sm:$0xff]
    %v1051 = vld [vmem:[%s7 + $0x7e8] sm:$0xff]
    %v1052 = vld [vmem:[%s7 + $0x7f0] sm:$0xff]
    %v1053 = vld [vmem:[%s7 + $0x7f8] sm:$0xff]
    %v1054 = vld [vmem:[%s8] sm:$0xff]
    %v1055 = vpack.c.bf16 %v794, %v794
    %v1056 = vpack.c.bf16 %v795, %v795
    %v1057 = vpack.c.bf16 %v796, %v796
    %v1058 = vpack.c.bf16 %v797, %v797
    %v1060 = vlaneseq
    %v1061 = vshrl.u32 %v1060, 7
    %v1062 = vsub.s32 0, %v1061
    %v1063 = vrot.slane %v1054, %v1062
    %v1064 = vlaneseq
    %v1065 = vshrl.u32 %v1064, 7
    %v1066 = vsub.s32 1, %v1065
    %v1067 = vrot.slane %v1054, %v1066
    %v1068 = vlaneseq
    %v1069 = vshrl.u32 %v1068, 7
    %v1070 = vsub.s32 2, %v1069
    %v1071 = vrot.slane %v1054, %v1070
    %v1072 = vlaneseq
    %v1073 = vshrl.u32 %v1072, 7
    %v1074 = vsub.s32 3, %v1073
    %v1075 = vrot.slane %v1054, %v1074
    %v1076 = vlaneseq
    %v1077 = vshrl.u32 %v1076, 7
    %v1078 = vsub.s32 4, %v1077
    %v1079 = vrot.slane %v1054, %v1078
    %v1080 = vlaneseq
    %v1081 = vshrl.u32 %v1080, 7
    %v1082 = vsub.s32 5, %v1081
    %v1083 = vrot.slane %v1054, %v1082
    %v1084 = vlaneseq
    %v1085 = vshrl.u32 %v1084, 7
    %v1086 = vsub.s32 6, %v1085
    %v1087 = vrot.slane %v1054, %v1086
    %v1088 = vlaneseq
    %v1089 = vshrl.u32 %v1088, 7
    %v1090 = vsub.s32 7, %v1089
    %v1091 = vrot.slane %v1054, %v1090
    %v1356 = vunpack.c.l.b16 %v798
    %v1357 = vunpack.c.h.b16 %v798
    %v1358 = vunpack.c.l.b16 %v799
    %v1359 = vunpack.c.h.b16 %v799
    %v1360 = vunpack.c.l.b16 %v800
    %v1361 = vunpack.c.h.b16 %v800
    %v1362 = vunpack.c.l.b16 %v801
    %v1363 = vunpack.c.h.b16 %v801
    %v1364 = vunpack.c.l.b16 %v802
    %v1365 = vunpack.c.h.b16 %v802
    %v1366 = vunpack.c.l.b16 %v803
    %v1367 = vunpack.c.h.b16 %v803
    %v1368 = vunpack.c.l.b16 %v804
    %v1369 = vunpack.c.h.b16 %v804
    %v1370 = vunpack.c.l.b16 %v805
    %v1371 = vunpack.c.h.b16 %v805
    %v1372 = vunpack.c.l.b16 %v806
    %v1373 = vunpack.c.h.b16 %v806
    %v1374 = vunpack.c.l.b16 %v807
    %v1375 = vunpack.c.h.b16 %v807
    %v1376 = vunpack.c.l.b16 %v808
    %v1377 = vunpack.c.h.b16 %v808
    %v1378 = vunpack.c.l.b16 %v809
    %v1379 = vunpack.c.h.b16 %v809
    %v1380 = vunpack.c.l.b16 %v810
    %v1381 = vunpack.c.h.b16 %v810
    %v1382 = vunpack.c.l.b16 %v811
    %v1383 = vunpack.c.h.b16 %v811
    %v1384 = vunpack.c.l.b16 %v812
    %v1385 = vunpack.c.h.b16 %v812
    %v1386 = vunpack.c.l.b16 %v813
    %v1387 = vunpack.c.h.b16 %v813
    %v1388 = vunpack.c.l.b16 %v814
    %v1389 = vunpack.c.h.b16 %v814
    %v1390 = vunpack.c.l.b16 %v815
    %v1391 = vunpack.c.h.b16 %v815
    %v1392 = vunpack.c.l.b16 %v816
    %v1393 = vunpack.c.h.b16 %v816
    %v1394 = vunpack.c.l.b16 %v817
    %v1395 = vunpack.c.h.b16 %v817
    %v1396 = vunpack.c.l.b16 %v818
    %v1397 = vunpack.c.h.b16 %v818
    %v1398 = vunpack.c.l.b16 %v819
    %v1399 = vunpack.c.h.b16 %v819
    %v1400 = vunpack.c.l.b16 %v820
    %v1401 = vunpack.c.h.b16 %v820
    %v1402 = vunpack.c.l.b16 %v821
    %v1403 = vunpack.c.h.b16 %v821
    %v1404 = vunpack.c.l.b16 %v822
    %v1405 = vunpack.c.h.b16 %v822
    %v1406 = vunpack.c.l.b16 %v823
    %v1407 = vunpack.c.h.b16 %v823
    %v1408 = vunpack.c.l.b16 %v824
    %v1409 = vunpack.c.h.b16 %v824
    %v1410 = vunpack.c.l.b16 %v825
    %v1411 = vunpack.c.h.b16 %v825
    %v1412 = vunpack.c.l.b16 %v826
    %v1413 = vunpack.c.h.b16 %v826
    %v1414 = vunpack.c.l.b16 %v827
    %v1415 = vunpack.c.h.b16 %v827
    %v1416 = vunpack.c.l.b16 %v828
    %v1417 = vunpack.c.h.b16 %v828
    %v1418 = vunpack.c.l.b16 %v829
    %v1419 = vunpack.c.h.b16 %v829
    %v1420 = vunpack.c.l.b16 %v830
    %v1421 = vunpack.c.h.b16 %v830
    %v1422 = vunpack.c.l.b16 %v831
    %v1423 = vunpack.c.h.b16 %v831
    %v1424 = vunpack.c.l.b16 %v832
    %v1425 = vunpack.c.h.b16 %v832
    %v1426 = vunpack.c.l.b16 %v833
    %v1427 = vunpack.c.h.b16 %v833
    %v1428 = vunpack.c.l.b16 %v834
    %v1429 = vunpack.c.h.b16 %v834
    %v1430 = vunpack.c.l.b16 %v835
    %v1431 = vunpack.c.h.b16 %v835
    %v1432 = vunpack.c.l.b16 %v836
    %v1433 = vunpack.c.h.b16 %v836
    %v1434 = vunpack.c.l.b16 %v837
    %v1435 = vunpack.c.h.b16 %v837
    %v1436 = vunpack.c.l.b16 %v838
    %v1437 = vunpack.c.h.b16 %v838
    %v1438 = vunpack.c.l.b16 %v839
    %v1439 = vunpack.c.h.b16 %v839
    %v1440 = vunpack.c.l.b16 %v840
    %v1441 = vunpack.c.h.b16 %v840
    %v1442 = vunpack.c.l.b16 %v841
    %v1443 = vunpack.c.h.b16 %v841
    %v1444 = vunpack.c.l.b16 %v842
    %v1445 = vunpack.c.h.b16 %v842
    %v1446 = vunpack.c.l.b16 %v843
    %v1447 = vunpack.c.h.b16 %v843
    %v1448 = vunpack.c.l.b16 %v844
    %v1449 = vunpack.c.h.b16 %v844
    %v1450 = vunpack.c.l.b16 %v845
    %v1451 = vunpack.c.h.b16 %v845
    %v1452 = vunpack.c.l.b16 %v846
    %v1453 = vunpack.c.h.b16 %v846
    %v1454 = vunpack.c.l.b16 %v847
    %v1455 = vunpack.c.h.b16 %v847
    %v1456 = vunpack.c.l.b16 %v848
    %v1457 = vunpack.c.h.b16 %v848
    %v1458 = vunpack.c.l.b16 %v849
    %v1459 = vunpack.c.h.b16 %v849
    %v1460 = vunpack.c.l.b16 %v850
    %v1461 = vunpack.c.h.b16 %v850
    %v1462 = vunpack.c.l.b16 %v851
    %v1463 = vunpack.c.h.b16 %v851
    %v1464 = vunpack.c.l.b16 %v852
    %v1465 = vunpack.c.h.b16 %v852
    %v1466 = vunpack.c.l.b16 %v853
    %v1467 = vunpack.c.h.b16 %v853
    %v1468 = vunpack.c.l.b16 %v854
    %v1469 = vunpack.c.h.b16 %v854
    %v1470 = vunpack.c.l.b16 %v855
    %v1471 = vunpack.c.h.b16 %v855
    %v1472 = vunpack.c.l.b16 %v856
    %v1473 = vunpack.c.h.b16 %v856
    %v1474 = vunpack.c.l.b16 %v857
    %v1475 = vunpack.c.h.b16 %v857
    %v1476 = vunpack.c.l.b16 %v858
    %v1477 = vunpack.c.h.b16 %v858
    %v1478 = vunpack.c.l.b16 %v859
    %v1479 = vunpack.c.h.b16 %v859
    %v1480 = vunpack.c.l.b16 %v860
    %v1481 = vunpack.c.h.b16 %v860
    %v1482 = vunpack.c.l.b16 %v861
    %v1483 = vunpack.c.h.b16 %v861
    %v1484 = vunpack.c.l.b16 %v862
    %v1485 = vunpack.c.h.b16 %v862
    %v1486 = vunpack.c.l.b16 %v863
    %v1487 = vunpack.c.h.b16 %v863
    %v1488 = vunpack.c.l.b16 %v864
    %v1489 = vunpack.c.h.b16 %v864
    %v1490 = vunpack.c.l.b16 %v865
    %v1491 = vunpack.c.h.b16 %v865
    %v1492 = vunpack.c.l.b16 %v866
    %v1493 = vunpack.c.h.b16 %v866
    %v1494 = vunpack.c.l.b16 %v867
    %v1495 = vunpack.c.h.b16 %v867
    %v1496 = vunpack.c.l.b16 %v868
    %v1497 = vunpack.c.h.b16 %v868
    %v1498 = vunpack.c.l.b16 %v869
    %v1499 = vunpack.c.h.b16 %v869
    %v1500 = vunpack.c.l.b16 %v870
    %v1501 = vunpack.c.h.b16 %v870
    %v1502 = vunpack.c.l.b16 %v871
    %v1503 = vunpack.c.h.b16 %v871
    %v1504 = vunpack.c.l.b16 %v872
    %v1505 = vunpack.c.h.b16 %v872
    %v1506 = vunpack.c.l.b16 %v873
    %v1507 = vunpack.c.h.b16 %v873
    %v1508 = vunpack.c.l.b16 %v874
    %v1509 = vunpack.c.h.b16 %v874
    %v1510 = vunpack.c.l.b16 %v875
    %v1511 = vunpack.c.h.b16 %v875
    %v1512 = vunpack.c.l.b16 %v876
    %v1513 = vunpack.c.h.b16 %v876
    %v1514 = vunpack.c.l.b16 %v877
    %v1515 = vunpack.c.h.b16 %v877
    %v1516 = vunpack.c.l.b16 %v878
    %v1517 = vunpack.c.h.b16 %v878
    %v1518 = vunpack.c.l.b16 %v879
    %v1519 = vunpack.c.h.b16 %v879
    %v1520 = vunpack.c.l.b16 %v880
    %v1521 = vunpack.c.h.b16 %v880
    %v1522 = vunpack.c.l.b16 %v881
    %v1523 = vunpack.c.h.b16 %v881
    %v1524 = vunpack.c.l.b16 %v882
    %v1525 = vunpack.c.h.b16 %v882
    %v1526 = vunpack.c.l.b16 %v883
    %v1527 = vunpack.c.h.b16 %v883
    %v1528 = vunpack.c.l.b16 %v884
    %v1529 = vunpack.c.h.b16 %v884
    %v1530 = vunpack.c.l.b16 %v885
    %v1531 = vunpack.c.h.b16 %v885
    %v1532 = vunpack.c.l.b16 %v886
    %v1533 = vunpack.c.h.b16 %v886
    %v1534 = vunpack.c.l.b16 %v887
    %v1535 = vunpack.c.h.b16 %v887
    %v1536 = vunpack.c.l.b16 %v888
    %v1537 = vunpack.c.h.b16 %v888
    %v1538 = vunpack.c.l.b16 %v889
    %v1539 = vunpack.c.h.b16 %v889
    %v1540 = vunpack.c.l.b16 %v890
    %v1541 = vunpack.c.h.b16 %v890
    %v1542 = vunpack.c.l.b16 %v891
    %v1543 = vunpack.c.h.b16 %v891
    %v1544 = vunpack.c.l.b16 %v892
    %v1545 = vunpack.c.h.b16 %v892
    %v1546 = vunpack.c.l.b16 %v893
    %v1547 = vunpack.c.h.b16 %v893
    %v1548 = vunpack.c.l.b16 %v894
    %v1549 = vunpack.c.h.b16 %v894
    %v1550 = vunpack.c.l.b16 %v895
    %v1551 = vunpack.c.h.b16 %v895
    %v1552 = vunpack.c.l.b16 %v896
    %v1553 = vunpack.c.h.b16 %v896
    %v1554 = vunpack.c.l.b16 %v897
    %v1555 = vunpack.c.h.b16 %v897
    %v1556 = vunpack.c.l.b16 %v898
    %v1557 = vunpack.c.h.b16 %v898
    %v1558 = vunpack.c.l.b16 %v899
    %v1559 = vunpack.c.h.b16 %v899
    %v1560 = vunpack.c.l.b16 %v900
    %v1561 = vunpack.c.h.b16 %v900
    %v1562 = vunpack.c.l.b16 %v901
    %v1563 = vunpack.c.h.b16 %v901
    %v1564 = vunpack.c.l.b16 %v902
    %v1565 = vunpack.c.h.b16 %v902
    %v1566 = vunpack.c.l.b16 %v903
    %v1567 = vunpack.c.h.b16 %v903
    %v1568 = vunpack.c.l.b16 %v904
    %v1569 = vunpack.c.h.b16 %v904
    %v1570 = vunpack.c.l.b16 %v905
    %v1571 = vunpack.c.h.b16 %v905
    %v1572 = vunpack.c.l.b16 %v906
    %v1573 = vunpack.c.h.b16 %v906
    %v1574 = vunpack.c.l.b16 %v907
    %v1575 = vunpack.c.h.b16 %v907
    %v1576 = vunpack.c.l.b16 %v908
    %v1577 = vunpack.c.h.b16 %v908
    %v1578 = vunpack.c.l.b16 %v909
    %v1579 = vunpack.c.h.b16 %v909
    %v1580 = vunpack.c.l.b16 %v910
    %v1581 = vunpack.c.h.b16 %v910
    %v1582 = vunpack.c.l.b16 %v911
    %v1583 = vunpack.c.h.b16 %v911
    %v1584 = vunpack.c.l.b16 %v912
    %v1585 = vunpack.c.h.b16 %v912
    %v1586 = vunpack.c.l.b16 %v913
    %v1587 = vunpack.c.h.b16 %v913
    %v1588 = vunpack.c.l.b16 %v914
    %v1589 = vunpack.c.h.b16 %v914
    %v1590 = vunpack.c.l.b16 %v915
    %v1591 = vunpack.c.h.b16 %v915
    %v1592 = vunpack.c.l.b16 %v916
    %v1593 = vunpack.c.h.b16 %v916
    %v1594 = vunpack.c.l.b16 %v917
    %v1595 = vunpack.c.h.b16 %v917
    %v1596 = vunpack.c.l.b16 %v918
    %v1597 = vunpack.c.h.b16 %v918
    %v1598 = vunpack.c.l.b16 %v919
    %v1599 = vunpack.c.h.b16 %v919
    %v1600 = vunpack.c.l.b16 %v920
    %v1601 = vunpack.c.h.b16 %v920
    %v1602 = vunpack.c.l.b16 %v921
    %v1603 = vunpack.c.h.b16 %v921
    %v1604 = vunpack.c.l.b16 %v922
    %v1605 = vunpack.c.h.b16 %v922
    %v1606 = vunpack.c.l.b16 %v923
    %v1607 = vunpack.c.h.b16 %v923
    %v1608 = vunpack.c.l.b16 %v924
    %v1609 = vunpack.c.h.b16 %v924
    %v1610 = vunpack.c.l.b16 %v925
    %v1611 = vunpack.c.h.b16 %v925
    %v1612 = vunpack.c.l.b16 %v926
    %v1613 = vunpack.c.h.b16 %v926
    %v1614 = vunpack.c.l.b16 %v927
    %v1615 = vunpack.c.h.b16 %v927
    %v1616 = vunpack.c.l.b16 %v928
    %v1617 = vunpack.c.h.b16 %v928
    %v1618 = vunpack.c.l.b16 %v929
    %v1619 = vunpack.c.h.b16 %v929
    %v1620 = vunpack.c.l.b16 %v930
    %v1621 = vunpack.c.h.b16 %v930
    %v1622 = vunpack.c.l.b16 %v931
    %v1623 = vunpack.c.h.b16 %v931
    %v1624 = vunpack.c.l.b16 %v932
    %v1625 = vunpack.c.h.b16 %v932
    %v1626 = vunpack.c.l.b16 %v933
    %v1627 = vunpack.c.h.b16 %v933
    %v1628 = vunpack.c.l.b16 %v934
    %v1629 = vunpack.c.h.b16 %v934
    %v1630 = vunpack.c.l.b16 %v935
    %v1631 = vunpack.c.h.b16 %v935
    %v1632 = vunpack.c.l.b16 %v936
    %v1633 = vunpack.c.h.b16 %v936
    %v1634 = vunpack.c.l.b16 %v937
    %v1635 = vunpack.c.h.b16 %v937
    %v1636 = vunpack.c.l.b16 %v938
    %v1637 = vunpack.c.h.b16 %v938
    %v1638 = vunpack.c.l.b16 %v939
    %v1639 = vunpack.c.h.b16 %v939
    %v1640 = vunpack.c.l.b16 %v940
    %v1641 = vunpack.c.h.b16 %v940
    %v1642 = vunpack.c.l.b16 %v941
    %v1643 = vunpack.c.h.b16 %v941
    %v1644 = vunpack.c.l.b16 %v942
    %v1645 = vunpack.c.h.b16 %v942
    %v1646 = vunpack.c.l.b16 %v943
    %v1647 = vunpack.c.h.b16 %v943
    %v1648 = vunpack.c.l.b16 %v944
    %v1649 = vunpack.c.h.b16 %v944
    %v1650 = vunpack.c.l.b16 %v945
    %v1651 = vunpack.c.h.b16 %v945
    %v1652 = vunpack.c.l.b16 %v946
    %v1653 = vunpack.c.h.b16 %v946
    %v1654 = vunpack.c.l.b16 %v947
    %v1655 = vunpack.c.h.b16 %v947
    %v1656 = vunpack.c.l.b16 %v948
    %v1657 = vunpack.c.h.b16 %v948
    %v1658 = vunpack.c.l.b16 %v949
    %v1659 = vunpack.c.h.b16 %v949
    %v1660 = vunpack.c.l.b16 %v950
    %v1661 = vunpack.c.h.b16 %v950
    %v1662 = vunpack.c.l.b16 %v951
    %v1663 = vunpack.c.h.b16 %v951
    %v1664 = vunpack.c.l.b16 %v952
    %v1665 = vunpack.c.h.b16 %v952
    %v1666 = vunpack.c.l.b16 %v953
    %v1667 = vunpack.c.h.b16 %v953
    %v1668 = vunpack.c.l.b16 %v954
    %v1669 = vunpack.c.h.b16 %v954
    %v1670 = vunpack.c.l.b16 %v955
    %v1671 = vunpack.c.h.b16 %v955
    %v1672 = vunpack.c.l.b16 %v956
    %v1673 = vunpack.c.h.b16 %v956
    %v1674 = vunpack.c.l.b16 %v957
    %v1675 = vunpack.c.h.b16 %v957
    %v1676 = vunpack.c.l.b16 %v958
    %v1677 = vunpack.c.h.b16 %v958
    %v1678 = vunpack.c.l.b16 %v959
    %v1679 = vunpack.c.h.b16 %v959
    %v1680 = vunpack.c.l.b16 %v960
    %v1681 = vunpack.c.h.b16 %v960
    %v1682 = vunpack.c.l.b16 %v961
    %v1683 = vunpack.c.h.b16 %v961
    %v1684 = vunpack.c.l.b16 %v962
    %v1685 = vunpack.c.h.b16 %v962
    %v1686 = vunpack.c.l.b16 %v963
    %v1687 = vunpack.c.h.b16 %v963
    %v1688 = vunpack.c.l.b16 %v964
    %v1689 = vunpack.c.h.b16 %v964
    %v1690 = vunpack.c.l.b16 %v965
    %v1691 = vunpack.c.h.b16 %v965
    %v1692 = vunpack.c.l.b16 %v966
    %v1693 = vunpack.c.h.b16 %v966
    %v1694 = vunpack.c.l.b16 %v967
    %v1695 = vunpack.c.h.b16 %v967
    %v1696 = vunpack.c.l.b16 %v968
    %v1697 = vunpack.c.h.b16 %v968
    %v1698 = vunpack.c.l.b16 %v969
    %v1699 = vunpack.c.h.b16 %v969
    %v1700 = vunpack.c.l.b16 %v970
    %v1701 = vunpack.c.h.b16 %v970
    %v1702 = vunpack.c.l.b16 %v971
    %v1703 = vunpack.c.h.b16 %v971
    %v1704 = vunpack.c.l.b16 %v972
    %v1705 = vunpack.c.h.b16 %v972
    %v1706 = vunpack.c.l.b16 %v973
    %v1707 = vunpack.c.h.b16 %v973
    %v1708 = vunpack.c.l.b16 %v974
    %v1709 = vunpack.c.h.b16 %v974
    %v1710 = vunpack.c.l.b16 %v975
    %v1711 = vunpack.c.h.b16 %v975
    %v1712 = vunpack.c.l.b16 %v976
    %v1713 = vunpack.c.h.b16 %v976
    %v1714 = vunpack.c.l.b16 %v977
    %v1715 = vunpack.c.h.b16 %v977
    %v1716 = vunpack.c.l.b16 %v978
    %v1717 = vunpack.c.h.b16 %v978
    %v1718 = vunpack.c.l.b16 %v979
    %v1719 = vunpack.c.h.b16 %v979
    %v1720 = vunpack.c.l.b16 %v980
    %v1721 = vunpack.c.h.b16 %v980
    %v1722 = vunpack.c.l.b16 %v981
    %v1723 = vunpack.c.h.b16 %v981
    %v1724 = vunpack.c.l.b16 %v982
    %v1725 = vunpack.c.h.b16 %v982
    %v1726 = vunpack.c.l.b16 %v983
    %v1727 = vunpack.c.h.b16 %v983
    %v1728 = vunpack.c.l.b16 %v984
    %v1729 = vunpack.c.h.b16 %v984
    %v1730 = vunpack.c.l.b16 %v985
    %v1731 = vunpack.c.h.b16 %v985
    %v1732 = vunpack.c.l.b16 %v986
    %v1733 = vunpack.c.h.b16 %v986
    %v1734 = vunpack.c.l.b16 %v987
    %v1735 = vunpack.c.h.b16 %v987
    %v1736 = vunpack.c.l.b16 %v988
    %v1737 = vunpack.c.h.b16 %v988
    %v1738 = vunpack.c.l.b16 %v989
    %v1739 = vunpack.c.h.b16 %v989
    %v1740 = vunpack.c.l.b16 %v990
    %v1741 = vunpack.c.h.b16 %v990
    %v1742 = vunpack.c.l.b16 %v991
    %v1743 = vunpack.c.h.b16 %v991
    %v1744 = vunpack.c.l.b16 %v992
    %v1745 = vunpack.c.h.b16 %v992
    %v1746 = vunpack.c.l.b16 %v993
    %v1747 = vunpack.c.h.b16 %v993
    %v1748 = vunpack.c.l.b16 %v994
    %v1749 = vunpack.c.h.b16 %v994
    %v1750 = vunpack.c.l.b16 %v995
    %v1751 = vunpack.c.h.b16 %v995
    %v1752 = vunpack.c.l.b16 %v996
    %v1753 = vunpack.c.h.b16 %v996
    %v1754 = vunpack.c.l.b16 %v997
    %v1755 = vunpack.c.h.b16 %v997
    %v1756 = vunpack.c.l.b16 %v998
    %v1757 = vunpack.c.h.b16 %v998
    %v1758 = vunpack.c.l.b16 %v999
    %v1759 = vunpack.c.h.b16 %v999
    %v1760 = vunpack.c.l.b16 %v1000
    %v1761 = vunpack.c.h.b16 %v1000
    %v1762 = vunpack.c.l.b16 %v1001
    %v1763 = vunpack.c.h.b16 %v1001
    %v1764 = vunpack.c.l.b16 %v1002
    %v1765 = vunpack.c.h.b16 %v1002
    %v1766 = vunpack.c.l.b16 %v1003
    %v1767 = vunpack.c.h.b16 %v1003
    %v1768 = vunpack.c.l.b16 %v1004
    %v1769 = vunpack.c.h.b16 %v1004
    %v1770 = vunpack.c.l.b16 %v1005
    %v1771 = vunpack.c.h.b16 %v1005
    %v1772 = vunpack.c.l.b16 %v1006
    %v1773 = vunpack.c.h.b16 %v1006
    %v1774 = vunpack.c.l.b16 %v1007
    %v1775 = vunpack.c.h.b16 %v1007
    %v1776 = vunpack.c.l.b16 %v1008
    %v1777 = vunpack.c.h.b16 %v1008
    %v1778 = vunpack.c.l.b16 %v1009
    %v1779 = vunpack.c.h.b16 %v1009
    %v1780 = vunpack.c.l.b16 %v1010
    %v1781 = vunpack.c.h.b16 %v1010
    %v1782 = vunpack.c.l.b16 %v1011
    %v1783 = vunpack.c.h.b16 %v1011
    %v1784 = vunpack.c.l.b16 %v1012
    %v1785 = vunpack.c.h.b16 %v1012
    %v1786 = vunpack.c.l.b16 %v1013
    %v1787 = vunpack.c.h.b16 %v1013
    %v1788 = vunpack.c.l.b16 %v1014
    %v1789 = vunpack.c.h.b16 %v1014
    %v1790 = vunpack.c.l.b16 %v1015
    %v1791 = vunpack.c.h.b16 %v1015
    %v1792 = vunpack.c.l.b16 %v1016
    %v1793 = vunpack.c.h.b16 %v1016
    %v1794 = vunpack.c.l.b16 %v1017
    %v1795 = vunpack.c.h.b16 %v1017
    %v1796 = vunpack.c.l.b16 %v1018
    %v1797 = vunpack.c.h.b16 %v1018
    %v1798 = vunpack.c.l.b16 %v1019
    %v1799 = vunpack.c.h.b16 %v1019
    %v1800 = vunpack.c.l.b16 %v1020
    %v1801 = vunpack.c.h.b16 %v1020
    %v1802 = vunpack.c.l.b16 %v1021
    %v1803 = vunpack.c.h.b16 %v1021
    %v1804 = vunpack.c.l.b16 %v1022
    %v1805 = vunpack.c.h.b16 %v1022
    %v1806 = vunpack.c.l.b16 %v1023
    %v1807 = vunpack.c.h.b16 %v1023
    %v1808 = vunpack.c.l.b16 %v1024
    %v1809 = vunpack.c.h.b16 %v1024
    %v1810 = vunpack.c.l.b16 %v1025
    %v1811 = vunpack.c.h.b16 %v1025
    %v1812 = vunpack.c.l.b16 %v1026
    %v1813 = vunpack.c.h.b16 %v1026
    %v1814 = vunpack.c.l.b16 %v1027
    %v1815 = vunpack.c.h.b16 %v1027
    %v1816 = vunpack.c.l.b16 %v1028
    %v1817 = vunpack.c.h.b16 %v1028
    %v1818 = vunpack.c.l.b16 %v1029
    %v1819 = vunpack.c.h.b16 %v1029
    %v1820 = vunpack.c.l.b16 %v1030
    %v1821 = vunpack.c.h.b16 %v1030
    %v1822 = vunpack.c.l.b16 %v1031
    %v1823 = vunpack.c.h.b16 %v1031
    %v1824 = vunpack.c.l.b16 %v1032
    %v1825 = vunpack.c.h.b16 %v1032
    %v1826 = vunpack.c.l.b16 %v1033
    %v1827 = vunpack.c.h.b16 %v1033
    %v1828 = vunpack.c.l.b16 %v1034
    %v1829 = vunpack.c.h.b16 %v1034
    %v1830 = vunpack.c.l.b16 %v1035
    %v1831 = vunpack.c.h.b16 %v1035
    %v1832 = vunpack.c.l.b16 %v1036
    %v1833 = vunpack.c.h.b16 %v1036
    %v1834 = vunpack.c.l.b16 %v1037
    %v1835 = vunpack.c.h.b16 %v1037
    %v1836 = vunpack.c.l.b16 %v1038
    %v1837 = vunpack.c.h.b16 %v1038
    %v1838 = vunpack.c.l.b16 %v1039
    %v1839 = vunpack.c.h.b16 %v1039
    %v1840 = vunpack.c.l.b16 %v1040
    %v1841 = vunpack.c.h.b16 %v1040
    %v1842 = vunpack.c.l.b16 %v1041
    %v1843 = vunpack.c.h.b16 %v1041
    %v1844 = vunpack.c.l.b16 %v1042
    %v1845 = vunpack.c.h.b16 %v1042
    %v1846 = vunpack.c.l.b16 %v1043
    %v1847 = vunpack.c.h.b16 %v1043
    %v1848 = vunpack.c.l.b16 %v1044
    %v1849 = vunpack.c.h.b16 %v1044
    %v1850 = vunpack.c.l.b16 %v1045
    %v1851 = vunpack.c.h.b16 %v1045
    %v1852 = vunpack.c.l.b16 %v1046
    %v1853 = vunpack.c.h.b16 %v1046
    %v1854 = vunpack.c.l.b16 %v1047
    %v1855 = vunpack.c.h.b16 %v1047
    %v1856 = vunpack.c.l.b16 %v1048
    %v1857 = vunpack.c.h.b16 %v1048
    %v1858 = vunpack.c.l.b16 %v1049
    %v1859 = vunpack.c.h.b16 %v1049
    %v1860 = vunpack.c.l.b16 %v1050
    %v1861 = vunpack.c.h.b16 %v1050
    %v1862 = vunpack.c.l.b16 %v1051
    %v1863 = vunpack.c.h.b16 %v1051
    %v1864 = vunpack.c.l.b16 %v1052
    %v1865 = vunpack.c.h.b16 %v1052
    %v1866 = vunpack.c.l.b16 %v1053
    %v1867 = vunpack.c.h.b16 %v1053
    %v1868 = vpack.c.b16 %v1364, %v1356
    %v1869 = vpack.c.b16 %v1365, %v1357
    %v1870 = vpack.c.b16 %v1366, %v1358
    %v1871 = vpack.c.b16 %v1367, %v1359
    %v1872 = vpack.c.b16 %v1368, %v1360
    %v1873 = vpack.c.b16 %v1369, %v1361
    %v1874 = vpack.c.b16 %v1370, %v1362
    %v1875 = vpack.c.b16 %v1371, %v1363
    %v1876 = vpack.c.b16 %v1380, %v1372
    %v1877 = vpack.c.b16 %v1381, %v1373
    %v1878 = vpack.c.b16 %v1382, %v1374
    %v1879 = vpack.c.b16 %v1383, %v1375
    %v1880 = vpack.c.b16 %v1384, %v1376
    %v1881 = vpack.c.b16 %v1385, %v1377
    %v1882 = vpack.c.b16 %v1386, %v1378
    %v1883 = vpack.c.b16 %v1387, %v1379
    %v1884 = vpack.c.b16 %v1396, %v1388
    %v1885 = vpack.c.b16 %v1397, %v1389
    %v1886 = vpack.c.b16 %v1398, %v1390
    %v1887 = vpack.c.b16 %v1399, %v1391
    %v1888 = vpack.c.b16 %v1400, %v1392
    %v1889 = vpack.c.b16 %v1401, %v1393
    %v1890 = vpack.c.b16 %v1402, %v1394
    %v1891 = vpack.c.b16 %v1403, %v1395
    %v1892 = vpack.c.b16 %v1412, %v1404
    %v1893 = vpack.c.b16 %v1413, %v1405
    %v1894 = vpack.c.b16 %v1414, %v1406
    %v1895 = vpack.c.b16 %v1415, %v1407
    %v1896 = vpack.c.b16 %v1416, %v1408
    %v1897 = vpack.c.b16 %v1417, %v1409
    %v1898 = vpack.c.b16 %v1418, %v1410
    %v1899 = vpack.c.b16 %v1419, %v1411
    %v1900 = vpack.c.b16 %v1428, %v1420
    %v1901 = vpack.c.b16 %v1429, %v1421
    %v1902 = vpack.c.b16 %v1430, %v1422
    %v1903 = vpack.c.b16 %v1431, %v1423
    %v1904 = vpack.c.b16 %v1432, %v1424
    %v1905 = vpack.c.b16 %v1433, %v1425
    %v1906 = vpack.c.b16 %v1434, %v1426
    %v1907 = vpack.c.b16 %v1435, %v1427
    %v1908 = vpack.c.b16 %v1444, %v1436
    %v1909 = vpack.c.b16 %v1445, %v1437
    %v1910 = vpack.c.b16 %v1446, %v1438
    %v1911 = vpack.c.b16 %v1447, %v1439
    %v1912 = vpack.c.b16 %v1448, %v1440
    %v1913 = vpack.c.b16 %v1449, %v1441
    %v1914 = vpack.c.b16 %v1450, %v1442
    %v1915 = vpack.c.b16 %v1451, %v1443
    %v1916 = vpack.c.b16 %v1460, %v1452
    %v1917 = vpack.c.b16 %v1461, %v1453
    %v1918 = vpack.c.b16 %v1462, %v1454
    %v1919 = vpack.c.b16 %v1463, %v1455
    %v1920 = vpack.c.b16 %v1464, %v1456
    %v1921 = vpack.c.b16 %v1465, %v1457
    %v1922 = vpack.c.b16 %v1466, %v1458
    %v1923 = vpack.c.b16 %v1467, %v1459
    %v1924 = vpack.c.b16 %v1476, %v1468
    %v1925 = vpack.c.b16 %v1477, %v1469
    %v1926 = vpack.c.b16 %v1478, %v1470
    %v1927 = vpack.c.b16 %v1479, %v1471
    %v1928 = vpack.c.b16 %v1480, %v1472
    %v1929 = vpack.c.b16 %v1481, %v1473
    %v1930 = vpack.c.b16 %v1482, %v1474
    %v1931 = vpack.c.b16 %v1483, %v1475
    %v1932 = vpack.c.b16 %v1492, %v1484
    %v1933 = vpack.c.b16 %v1493, %v1485
    %v1934 = vpack.c.b16 %v1494, %v1486
    %v1935 = vpack.c.b16 %v1495, %v1487
    %v1936 = vpack.c.b16 %v1496, %v1488
    %v1937 = vpack.c.b16 %v1497, %v1489
    %v1938 = vpack.c.b16 %v1498, %v1490
    %v1939 = vpack.c.b16 %v1499, %v1491
    %v1940 = vpack.c.b16 %v1508, %v1500
    %v1941 = vpack.c.b16 %v1509, %v1501
    %v1942 = vpack.c.b16 %v1510, %v1502
    %v1943 = vpack.c.b16 %v1511, %v1503
    %v1944 = vpack.c.b16 %v1512, %v1504
    %v1945 = vpack.c.b16 %v1513, %v1505
    %v1946 = vpack.c.b16 %v1514, %v1506
    %v1947 = vpack.c.b16 %v1515, %v1507
    %v1948 = vpack.c.b16 %v1524, %v1516
    %v1949 = vpack.c.b16 %v1525, %v1517
    %v1950 = vpack.c.b16 %v1526, %v1518
    %v1951 = vpack.c.b16 %v1527, %v1519
    %v1952 = vpack.c.b16 %v1528, %v1520
    %v1953 = vpack.c.b16 %v1529, %v1521
    %v1954 = vpack.c.b16 %v1530, %v1522
    %v1955 = vpack.c.b16 %v1531, %v1523
    %v1956 = vpack.c.b16 %v1540, %v1532
    %v1957 = vpack.c.b16 %v1541, %v1533
    %v1958 = vpack.c.b16 %v1542, %v1534
    %v1959 = vpack.c.b16 %v1543, %v1535
    %v1960 = vpack.c.b16 %v1544, %v1536
    %v1961 = vpack.c.b16 %v1545, %v1537
    %v1962 = vpack.c.b16 %v1546, %v1538
    %v1963 = vpack.c.b16 %v1547, %v1539
    %v1964 = vpack.c.b16 %v1556, %v1548
    %v1965 = vpack.c.b16 %v1557, %v1549
    %v1966 = vpack.c.b16 %v1558, %v1550
    %v1967 = vpack.c.b16 %v1559, %v1551
    %v1968 = vpack.c.b16 %v1560, %v1552
    %v1969 = vpack.c.b16 %v1561, %v1553
    %v1970 = vpack.c.b16 %v1562, %v1554
    %v1971 = vpack.c.b16 %v1563, %v1555
    %v1972 = vpack.c.b16 %v1572, %v1564
    %v1973 = vpack.c.b16 %v1573, %v1565
    %v1974 = vpack.c.b16 %v1574, %v1566
    %v1975 = vpack.c.b16 %v1575, %v1567
    %v1976 = vpack.c.b16 %v1576, %v1568
    %v1977 = vpack.c.b16 %v1577, %v1569
    %v1978 = vpack.c.b16 %v1578, %v1570
    %v1979 = vpack.c.b16 %v1579, %v1571
    %v1980 = vpack.c.b16 %v1588, %v1580
    %v1981 = vpack.c.b16 %v1589, %v1581
    %v1982 = vpack.c.b16 %v1590, %v1582
    %v1983 = vpack.c.b16 %v1591, %v1583
    %v1984 = vpack.c.b16 %v1592, %v1584
    %v1985 = vpack.c.b16 %v1593, %v1585
    %v1986 = vpack.c.b16 %v1594, %v1586
    %v1987 = vpack.c.b16 %v1595, %v1587
    %v1988 = vpack.c.b16 %v1604, %v1596
    %v1989 = vpack.c.b16 %v1605, %v1597
    %v1990 = vpack.c.b16 %v1606, %v1598
    %v1991 = vpack.c.b16 %v1607, %v1599
    %v1992 = vpack.c.b16 %v1608, %v1600
    %v1993 = vpack.c.b16 %v1609, %v1601
    %v1994 = vpack.c.b16 %v1610, %v1602
    %v1995 = vpack.c.b16 %v1611, %v1603
    %v1996 = vpack.c.b16 %v1620, %v1612
    %v1997 = vpack.c.b16 %v1621, %v1613
    %v1998 = vpack.c.b16 %v1622, %v1614
    %v1999 = vpack.c.b16 %v1623, %v1615
    %v2000 = vpack.c.b16 %v1624, %v1616
    %v2001 = vpack.c.b16 %v1625, %v1617
    %v2002 = vpack.c.b16 %v1626, %v1618
    %v2003 = vpack.c.b16 %v1627, %v1619
    %v2004 = vpack.c.b16 %v1636, %v1628
    %v2005 = vpack.c.b16 %v1637, %v1629
    %v2006 = vpack.c.b16 %v1638, %v1630
    %v2007 = vpack.c.b16 %v1639, %v1631
    %v2008 = vpack.c.b16 %v1640, %v1632
    %v2009 = vpack.c.b16 %v1641, %v1633
    %v2010 = vpack.c.b16 %v1642, %v1634
    %v2011 = vpack.c.b16 %v1643, %v1635
    %v2012 = vpack.c.b16 %v1652, %v1644
    %v2013 = vpack.c.b16 %v1653, %v1645
    %v2014 = vpack.c.b16 %v1654, %v1646
    %v2015 = vpack.c.b16 %v1655, %v1647
    %v2016 = vpack.c.b16 %v1656, %v1648
    %v2017 = vpack.c.b16 %v1657, %v1649
    %v2018 = vpack.c.b16 %v1658, %v1650
    %v2019 = vpack.c.b16 %v1659, %v1651
    %v2020 = vpack.c.b16 %v1668, %v1660
    %v2021 = vpack.c.b16 %v1669, %v1661
    %v2022 = vpack.c.b16 %v1670, %v1662
    %v2023 = vpack.c.b16 %v1671, %v1663
    %v2024 = vpack.c.b16 %v1672, %v1664
    %v2025 = vpack.c.b16 %v1673, %v1665
    %v2026 = vpack.c.b16 %v1674, %v1666
    %v2027 = vpack.c.b16 %v1675, %v1667
    %v2028 = vpack.c.b16 %v1684, %v1676
    %v2029 = vpack.c.b16 %v1685, %v1677
    %v2030 = vpack.c.b16 %v1686, %v1678
    %v2031 = vpack.c.b16 %v1687, %v1679
    %v2032 = vpack.c.b16 %v1688, %v1680
    %v2033 = vpack.c.b16 %v1689, %v1681
    %v2034 = vpack.c.b16 %v1690, %v1682
    %v2035 = vpack.c.b16 %v1691, %v1683
    %v2036 = vpack.c.b16 %v1700, %v1692
    %v2037 = vpack.c.b16 %v1701, %v1693
    %v2038 = vpack.c.b16 %v1702, %v1694
    %v2039 = vpack.c.b16 %v1703, %v1695
    %v2040 = vpack.c.b16 %v1704, %v1696
    %v2041 = vpack.c.b16 %v1705, %v1697
    %v2042 = vpack.c.b16 %v1706, %v1698
    %v2043 = vpack.c.b16 %v1707, %v1699
    %v2044 = vpack.c.b16 %v1716, %v1708
    %v2045 = vpack.c.b16 %v1717, %v1709
    %v2046 = vpack.c.b16 %v1718, %v1710
    %v2047 = vpack.c.b16 %v1719, %v1711
    %v2048 = vpack.c.b16 %v1720, %v1712
    %v2049 = vpack.c.b16 %v1721, %v1713
    %v2050 = vpack.c.b16 %v1722, %v1714
    %v2051 = vpack.c.b16 %v1723, %v1715
    %v2052 = vpack.c.b16 %v1732, %v1724
    %v2053 = vpack.c.b16 %v1733, %v1725
    %v2054 = vpack.c.b16 %v1734, %v1726
    %v2055 = vpack.c.b16 %v1735, %v1727
    %v2056 = vpack.c.b16 %v1736, %v1728
    %v2057 = vpack.c.b16 %v1737, %v1729
    %v2058 = vpack.c.b16 %v1738, %v1730
    %v2059 = vpack.c.b16 %v1739, %v1731
    %v2060 = vpack.c.b16 %v1748, %v1740
    %v2061 = vpack.c.b16 %v1749, %v1741
    %v2062 = vpack.c.b16 %v1750, %v1742
    %v2063 = vpack.c.b16 %v1751, %v1743
    %v2064 = vpack.c.b16 %v1752, %v1744
    %v2065 = vpack.c.b16 %v1753, %v1745
    %v2066 = vpack.c.b16 %v1754, %v1746
    %v2067 = vpack.c.b16 %v1755, %v1747
    %v2068 = vpack.c.b16 %v1764, %v1756
    %v2069 = vpack.c.b16 %v1765, %v1757
    %v2070 = vpack.c.b16 %v1766, %v1758
    %v2071 = vpack.c.b16 %v1767, %v1759
    %v2072 = vpack.c.b16 %v1768, %v1760
    %v2073 = vpack.c.b16 %v1769, %v1761
    %v2074 = vpack.c.b16 %v1770, %v1762
    %v2075 = vpack.c.b16 %v1771, %v1763
    %v2076 = vpack.c.b16 %v1780, %v1772
    %v2077 = vpack.c.b16 %v1781, %v1773
    %v2078 = vpack.c.b16 %v1782, %v1774
    %v2079 = vpack.c.b16 %v1783, %v1775
    %v2080 = vpack.c.b16 %v1784, %v1776
    %v2081 = vpack.c.b16 %v1785, %v1777
    %v2082 = vpack.c.b16 %v1786, %v1778
    %v2083 = vpack.c.b16 %v1787, %v1779
    %v2084 = vpack.c.b16 %v1796, %v1788
    %v2085 = vpack.c.b16 %v1797, %v1789
    %v2086 = vpack.c.b16 %v1798, %v1790
    %v2087 = vpack.c.b16 %v1799, %v1791
    %v2088 = vpack.c.b16 %v1800, %v1792
    %v2089 = vpack.c.b16 %v1801, %v1793
    %v2090 = vpack.c.b16 %v1802, %v1794
    %v2091 = vpack.c.b16 %v1803, %v1795
    %v2092 = vpack.c.b16 %v1812, %v1804
    %v2093 = vpack.c.b16 %v1813, %v1805
    %v2094 = vpack.c.b16 %v1814, %v1806
    %v2095 = vpack.c.b16 %v1815, %v1807
    %v2096 = vpack.c.b16 %v1816, %v1808
    %v2097 = vpack.c.b16 %v1817, %v1809
    %v2098 = vpack.c.b16 %v1818, %v1810
    %v2099 = vpack.c.b16 %v1819, %v1811
    %v2100 = vpack.c.b16 %v1828, %v1820
    %v2101 = vpack.c.b16 %v1829, %v1821
    %v2102 = vpack.c.b16 %v1830, %v1822
    %v2103 = vpack.c.b16 %v1831, %v1823
    %v2104 = vpack.c.b16 %v1832, %v1824
    %v2105 = vpack.c.b16 %v1833, %v1825
    %v2106 = vpack.c.b16 %v1834, %v1826
    %v2107 = vpack.c.b16 %v1835, %v1827
    %v2108 = vpack.c.b16 %v1844, %v1836
    %v2109 = vpack.c.b16 %v1845, %v1837
    %v2110 = vpack.c.b16 %v1846, %v1838
    %v2111 = vpack.c.b16 %v1847, %v1839
    %v2112 = vpack.c.b16 %v1848, %v1840
    %v2113 = vpack.c.b16 %v1849, %v1841
    %v2114 = vpack.c.b16 %v1850, %v1842
    %v2115 = vpack.c.b16 %v1851, %v1843
    %v2116 = vpack.c.b16 %v1860, %v1852
    %v2117 = vpack.c.b16 %v1861, %v1853
    %v2118 = vpack.c.b16 %v1862, %v1854
    %v2119 = vpack.c.b16 %v1863, %v1855
    %v2120 = vpack.c.b16 %v1864, %v1856
    %v2121 = vpack.c.b16 %v1865, %v1857
    %v2122 = vpack.c.b16 %v1866, %v1858
    %v2123 = vpack.c.b16 %v1867, %v1859
    %2380 = vmatprep.subr.bf16.mxu0 %v1869
    %2381 = vmatpush1.bf16.msra.mxu0 %v1868
    %2382 = vmatprep.subr.bf16.mxu0 %v1877
    %2383 = vmatpush1.bf16.msra.mxu0 %v1876
    %2384 = vmatprep.subr.bf16.mxu0 %v1885
    %2385 = vmatpush1.bf16.msra.mxu0 %v1884
    %2386 = vmatprep.subr.bf16.mxu0 %v1893
    %2387 = vmatpush1.bf16.msra.mxu0 %v1892
    %2388 = vmatprep.subr.bf16.mxu0 %v1901
    %2389 = vmatpush1.bf16.msra.mxu0 %v1900
    %2390 = vmatprep.subr.bf16.mxu0 %v1909
    %2391 = vmatpush1.bf16.msra.mxu0 %v1908
    %2392 = vmatprep.subr.bf16.mxu0 %v1917
    %2393 = vmatpush1.bf16.msra.mxu0 %v1916
    %2394 = vmatprep.subr.bf16.mxu0 %v1925
    %2395 = vmatpush1.bf16.msra.mxu0 %v1924
    %2396 = vmatprep.subr.bf16.mxu0 %v1933
    %2397 = vmatpush1.bf16.msra.mxu0 %v1932
    %2398 = vmatprep.subr.bf16.mxu0 %v1941
    %2399 = vmatpush1.bf16.msra.mxu0 %v1940
    %2400 = vmatprep.subr.bf16.mxu0 %v1949
    %2401 = vmatpush1.bf16.msra.mxu0 %v1948
    %2402 = vmatprep.subr.bf16.mxu0 %v1957
    %2403 = vmatpush1.bf16.msra.mxu0 %v1956
    %2404 = vmatprep.subr.bf16.mxu0 %v1965
    %2405 = vmatpush1.bf16.msra.mxu0 %v1964
    %2406 = vmatprep.subr.bf16.mxu0 %v1973
    %2407 = vmatpush1.bf16.msra.mxu0 %v1972
    %2408 = vmatprep.subr.bf16.mxu0 %v1981
    %2409 = vmatpush1.bf16.msra.mxu0 %v1980
    %2410 = vmatprep.subr.bf16.mxu0 %v1989
    %2411 = vmatpush1.bf16.msra.mxu0 %v1988
    %2412 = vmatprep.mubr.bf16.mxu0 %v1056
    %2413 = vmatmul.mubr.bf16.gmra.mrb[0].mxu0 %v1055
    %v2414 = vpop.f32.mrb[0].mxu0
    %v2415 = vadd.f32 %v1063, %v2414
    %v2416 = vpop.f32.mrb[0].mxu0
    %v2417 = vadd.f32 %v1067, %v2416
    %v2418 = vpop.f32.mrb[0].mxu0
    %v2419 = vpop.f32.mrb[0].mxu0
    %2420 = vdwg.mxu0
    %2421 = vmatprep.subr.bf16.mxu0 %v1997
    %2422 = vmatpush1.bf16.msra.mxu0 %v1996
    %2423 = vmatprep.subr.bf16.mxu0 %v2005
    %2424 = vmatpush1.bf16.msra.mxu0 %v2004
    %2425 = vmatprep.subr.bf16.mxu0 %v2013
    %2426 = vmatpush1.bf16.msra.mxu0 %v2012
    %2427 = vmatprep.subr.bf16.mxu0 %v2021
    %2428 = vmatpush1.bf16.msra.mxu0 %v2020
    %2429 = vmatprep.subr.bf16.mxu0 %v2029
    %2430 = vmatpush1.bf16.msra.mxu0 %v2028
    %2431 = vmatprep.subr.bf16.mxu0 %v2037
    %2432 = vmatpush1.bf16.msra.mxu0 %v2036
    %2433 = vmatprep.subr.bf16.mxu0 %v2045
    %2434 = vmatpush1.bf16.msra.mxu0 %v2044
    %2435 = vmatprep.subr.bf16.mxu0 %v2053
    %2436 = vmatpush1.bf16.msra.mxu0 %v2052
    %2437 = vmatprep.subr.bf16.mxu0 %v2061
    %2438 = vmatpush1.bf16.msra.mxu0 %v2060
    %2439 = vmatprep.subr.bf16.mxu0 %v2069
    %2440 = vmatpush1.bf16.msra.mxu0 %v2068
    %2441 = vmatprep.subr.bf16.mxu0 %v2077
    %2442 = vmatpush1.bf16.msra.mxu0 %v2076
    %2443 = vmatprep.subr.bf16.mxu0 %v2085
    %2444 = vmatpush1.bf16.msra.mxu0 %v2084
    %2445 = vmatprep.subr.bf16.mxu0 %v2093
    %2446 = vmatpush1.bf16.msra.mxu0 %v2092
    %2447 = vmatprep.subr.bf16.mxu0 %v2101
    %2448 = vmatpush1.bf16.msra.mxu0 %v2100
    %2449 = vmatprep.subr.bf16.mxu0 %v2109
    %2450 = vmatpush1.bf16.msra.mxu0 %v2108
    %2451 = vmatprep.subr.bf16.mxu0 %v2117
    %2452 = vmatpush1.bf16.msra.mxu0 %v2116
    %2453 = vmatprep.mubr.bf16.mxu0 %v1058
    %2454 = vmatmul.mubr.bf16.gmra.mrb[0].mxu0 %v1057
    %v2455 = vpop.f32.mrb[0].mxu0
    %v2456 = vadd.f32 %v2415, %v2455
    %v2457 = vpop.f32.mrb[0].mxu0
    %v2458 = vadd.f32 %v2417, %v2457
    %v2459 = vpop.f32.mrb[0].mxu0
    %v2460 = vpop.f32.mrb[0].mxu0
    %2461 = vdwg.mxu0
    %2462 = vmatprep.subr.bf16.mxu0 %v1871
    %2463 = vmatpush1.bf16.msra.mxu0 %v1870
    %2464 = vmatprep.subr.bf16.mxu0 %v1879
    %2465 = vmatpush1.bf16.msra.mxu0 %v1878
    %2466 = vmatprep.subr.bf16.mxu0 %v1887
    %2467 = vmatpush1.bf16.msra.mxu0 %v1886
    %2468 = vmatprep.subr.bf16.mxu0 %v1895
    %2469 = vmatpush1.bf16.msra.mxu0 %v1894
    %2470 = vmatprep.subr.bf16.mxu0 %v1903
    %2471 = vmatpush1.bf16.msra.mxu0 %v1902
    %2472 = vmatprep.subr.bf16.mxu0 %v1911
    %2473 = vmatpush1.bf16.msra.mxu0 %v1910
    %2474 = vmatprep.subr.bf16.mxu0 %v1919
    %2475 = vmatpush1.bf16.msra.mxu0 %v1918
    %2476 = vmatprep.subr.bf16.mxu0 %v1927
    %2477 = vmatpush1.bf16.msra.mxu0 %v1926
    %2478 = vmatprep.subr.bf16.mxu0 %v1935
    %2479 = vmatpush1.bf16.msra.mxu0 %v1934
    %2480 = vmatprep.subr.bf16.mxu0 %v1943
    %2481 = vmatpush1.bf16.msra.mxu0 %v1942
    %2482 = vmatprep.subr.bf16.mxu0 %v1951
    %2483 = vmatpush1.bf16.msra.mxu0 %v1950
    %2484 = vmatprep.subr.bf16.mxu0 %v1959
    %2485 = vmatpush1.bf16.msra.mxu0 %v1958
    %2486 = vmatprep.subr.bf16.mxu0 %v1967
    %2487 = vmatpush1.bf16.msra.mxu0 %v1966
    %2488 = vmatprep.subr.bf16.mxu0 %v1975
    %2489 = vmatpush1.bf16.msra.mxu0 %v1974
    %2490 = vmatprep.subr.bf16.mxu0 %v1983
    %2491 = vmatpush1.bf16.msra.mxu0 %v1982
    %2492 = vmatprep.subr.bf16.mxu0 %v1991
    %2493 = vmatpush1.bf16.msra.mxu0 %v1990
    %2494 = vmatprep.mubr.bf16.mxu0 %v1056
    %2495 = vmatmul.mubr.bf16.gmra.mrb[0].mxu0 %v1055
    %v2496 = vpop.f32.mrb[0].mxu0
    %v2497 = vadd.f32 %v1071, %v2496
    %v2498 = vpop.f32.mrb[0].mxu0
    %v2499 = vadd.f32 %v1075, %v2498
    %v2500 = vpop.f32.mrb[0].mxu0
    %v2501 = vpop.f32.mrb[0].mxu0
    %2502 = vdwg.mxu0
    %2503 = vmatprep.subr.bf16.mxu0 %v1999
    %2504 = vmatpush1.bf16.msra.mxu0 %v1998
    %2505 = vmatprep.subr.bf16.mxu0 %v2007
    %2506 = vmatpush1.bf16.msra.mxu0 %v2006
    %2507 = vmatprep.subr.bf16.mxu0 %v2015
    %2508 = vmatpush1.bf16.msra.mxu0 %v2014
    %2509 = vmatprep.subr.bf16.mxu0 %v2023
    %2510 = vmatpush1.bf16.msra.mxu0 %v2022
    %2511 = vmatprep.subr.bf16.mxu0 %v2031
    %2512 = vmatpush1.bf16.msra.mxu0 %v2030
    %2513 = vmatprep.subr.bf16.mxu0 %v2039
    %2514 = vmatpush1.bf16.msra.mxu0 %v2038
    %2515 = vmatprep.subr.bf16.mxu0 %v2047
    %2516 = vmatpush1.bf16.msra.mxu0 %v2046
    %2517 = vmatprep.subr.bf16.mxu0 %v2055
    %2518 = vmatpush1.bf16.msra.mxu0 %v2054
    %2519 = vmatprep.subr.bf16.mxu0 %v2063
    %2520 = vmatpush1.bf16.msra.mxu0 %v2062
    %2521 = vmatprep.subr.bf16.mxu0 %v2071
    %2522 = vmatpush1.bf16.msra.mxu0 %v2070
    %2523 = vmatprep.subr.bf16.mxu0 %v2079
    %2524 = vmatpush1.bf16.msra.mxu0 %v2078
    %2525 = vmatprep.subr.bf16.mxu0 %v2087
    %2526 = vmatpush1.bf16.msra.mxu0 %v2086
    %2527 = vmatprep.subr.bf16.mxu0 %v2095
    %2528 = vmatpush1.bf16.msra.mxu0 %v2094
    %2529 = vmatprep.subr.bf16.mxu0 %v2103
    %2530 = vmatpush1.bf16.msra.mxu0 %v2102
    %2531 = vmatprep.subr.bf16.mxu0 %v2111
    %2532 = vmatpush1.bf16.msra.mxu0 %v2110
    %2533 = vmatprep.subr.bf16.mxu0 %v2119
    %2534 = vmatpush1.bf16.msra.mxu0 %v2118
    %2535 = vmatprep.mubr.bf16.mxu0 %v1058
    %2536 = vmatmul.mubr.bf16.gmra.mrb[0].mxu0 %v1057
    %v2537 = vpop.f32.mrb[0].mxu0
    %v2538 = vadd.f32 %v2497, %v2537
    %v2539 = vpop.f32.mrb[0].mxu0
    %v2540 = vadd.f32 %v2499, %v2539
    %v2541 = vpop.f32.mrb[0].mxu0
    %v2542 = vpop.f32.mrb[0].mxu0
    %2543 = vdwg.mxu0
    %2544 = vmatprep.subr.bf16.mxu0 %v1873
    %2545 = vmatpush1.bf16.msra.mxu0 %v1872
    %2546 = vmatprep.subr.bf16.mxu0 %v1881
    %2547 = vmatpush1.bf16.msra.mxu0 %v1880
    %2548 = vmatprep.subr.bf16.mxu0 %v1889
    %2549 = vmatpush1.bf16.msra.mxu0 %v1888
    %2550 = vmatprep.subr.bf16.mxu0 %v1897
    %2551 = vmatpush1.bf16.msra.mxu0 %v1896
    %2552 = vmatprep.subr.bf16.mxu0 %v1905
    %2553 = vmatpush1.bf16.msra.mxu0 %v1904
    %2554 = vmatprep.subr.bf16.mxu0 %v1913
    %2555 = vmatpush1.bf16.msra.mxu0 %v1912
    %2556 = vmatprep.subr.bf16.mxu0 %v1921
    %2557 = vmatpush1.bf16.msra.mxu0 %v1920
    %2558 = vmatprep.subr.bf16.mxu0 %v1929
    %2559 = vmatpush1.bf16.msra.mxu0 %v1928
    %2560 = vmatprep.subr.bf16.mxu0 %v1937
    %2561 = vmatpush1.bf16.msra.mxu0 %v1936
    %2562 = vmatprep.subr.bf16.mxu0 %v1945
    %2563 = vmatpush1.bf16.msra.mxu0 %v1944
    %2564 = vmatprep.subr.bf16.mxu0 %v1953
    %2565 = vmatpush1.bf16.msra.mxu0 %v1952
    %2566 = vmatprep.subr.bf16.mxu0 %v1961
    %2567 = vmatpush1.bf16.msra.mxu0 %v1960
    %2568 = vmatprep.subr.bf16.mxu0 %v1969
    %2569 = vmatpush1.bf16.msra.mxu0 %v1968
    %2570 = vmatprep.subr.bf16.mxu0 %v1977
    %2571 = vmatpush1.bf16.msra.mxu0 %v1976
    %2572 = vmatprep.subr.bf16.mxu0 %v1985
    %2573 = vmatpush1.bf16.msra.mxu0 %v1984
    %2574 = vmatprep.subr.bf16.mxu0 %v1993
    %2575 = vmatpush1.bf16.msra.mxu0 %v1992
    %2576 = vmatprep.mubr.bf16.mxu0 %v1056
    %2577 = vmatmul.mubr.bf16.gmra.mrb[0].mxu0 %v1055
    %v2578 = vpop.f32.mrb[0].mxu0
    %v2579 = vadd.f32 %v1079, %v2578
    %v2580 = vpop.f32.mrb[0].mxu0
    %v2581 = vadd.f32 %v1083, %v2580
    %v2582 = vpop.f32.mrb[0].mxu0
    %v2583 = vpop.f32.mrb[0].mxu0
    %2584 = vdwg.mxu0
    %2585 = vmatprep.subr.bf16.mxu0 %v2001
    %2586 = vmatpush1.bf16.msra.mxu0 %v2000
    %2587 = vmatprep.subr.bf16.mxu0 %v2009
    %2588 = vmatpush1.bf16.msra.mxu0 %v2008
    %2589 = vmatprep.subr.bf16.mxu0 %v2017
    %2590 = vmatpush1.bf16.msra.mxu0 %v2016
    %2591 = vmatprep.subr.bf16.mxu0 %v2025
    %2592 = vmatpush1.bf16.msra.mxu0 %v2024
    %2593 = vmatprep.subr.bf16.mxu0 %v2033
    %2594 = vmatpush1.bf16.msra.mxu0 %v2032
    %2595 = vmatprep.subr.bf16.mxu0 %v2041
    %2596 = vmatpush1.bf16.msra.mxu0 %v2040
    %2597 = vmatprep.subr.bf16.mxu0 %v2049
    %2598 = vmatpush1.bf16.msra.mxu0 %v2048
    %2599 = vmatprep.subr.bf16.mxu0 %v2057
    %2600 = vmatpush1.bf16.msra.mxu0 %v2056
    %2601 = vmatprep.subr.bf16.mxu0 %v2065
    %2602 = vmatpush1.bf16.msra.mxu0 %v2064
    %2603 = vmatprep.subr.bf16.mxu0 %v2073
    %2604 = vmatpush1.bf16.msra.mxu0 %v2072
    %2605 = vmatprep.subr.bf16.mxu0 %v2081
    %2606 = vmatpush1.bf16.msra.mxu0 %v2080
    %2607 = vmatprep.subr.bf16.mxu0 %v2089
    %2608 = vmatpush1.bf16.msra.mxu0 %v2088
    %2609 = vmatprep.subr.bf16.mxu0 %v2097
    %2610 = vmatpush1.bf16.msra.mxu0 %v2096
    %2611 = vmatprep.subr.bf16.mxu0 %v2105
    %2612 = vmatpush1.bf16.msra.mxu0 %v2104
    %2613 = vmatprep.subr.bf16.mxu0 %v2113
    %2614 = vmatpush1.bf16.msra.mxu0 %v2112
    %2615 = vmatprep.subr.bf16.mxu0 %v2121
    %2616 = vmatpush1.bf16.msra.mxu0 %v2120
    %2617 = vmatprep.mubr.bf16.mxu0 %v1058
    %2618 = vmatmul.mubr.bf16.gmra.mrb[0].mxu0 %v1057
    %v2619 = vpop.f32.mrb[0].mxu0
    %v2620 = vadd.f32 %v2579, %v2619
    %v2621 = vpop.f32.mrb[0].mxu0
    %v2622 = vadd.f32 %v2581, %v2621
    %v2623 = vpop.f32.mrb[0].mxu0
    %v2624 = vpop.f32.mrb[0].mxu0
    %2625 = vdwg.mxu0
    %2626 = vmatprep.subr.bf16.mxu0 %v1875
    %2627 = vmatpush1.bf16.msra.mxu0 %v1874
    %2628 = vmatprep.subr.bf16.mxu0 %v1883
    %2629 = vmatpush1.bf16.msra.mxu0 %v1882
    %2630 = vmatprep.subr.bf16.mxu0 %v1891
    %2631 = vmatpush1.bf16.msra.mxu0 %v1890
    %2632 = vmatprep.subr.bf16.mxu0 %v1899
    %2633 = vmatpush1.bf16.msra.mxu0 %v1898
    %2634 = vmatprep.subr.bf16.mxu0 %v1907
    %2635 = vmatpush1.bf16.msra.mxu0 %v1906
    %2636 = vmatprep.subr.bf16.mxu0 %v1915
    %2637 = vmatpush1.bf16.msra.mxu0 %v1914
    %2638 = vmatprep.subr.bf16.mxu0 %v1923
    %2639 = vmatpush1.bf16.msra.mxu0 %v1922
    %2640 = vmatprep.subr.bf16.mxu0 %v1931
    %2641 = vmatpush1.bf16.msra.mxu0 %v1930
    %2642 = vmatprep.subr.bf16.mxu0 %v1939
    %2643 = vmatpush1.bf16.msra.mxu0 %v1938
    %2644 = vmatprep.subr.bf16.mxu0 %v1947
    %2645 = vmatpush1.bf16.msra.mxu0 %v1946
    %2646 = vmatprep.subr.bf16.mxu0 %v1955
    %2647 = vmatpush1.bf16.msra.mxu0 %v1954
    %2648 = vmatprep.subr.bf16.mxu0 %v1963
    %2649 = vmatpush1.bf16.msra.mxu0 %v1962
    %2650 = vmatprep.subr.bf16.mxu0 %v1971
    %2651 = vmatpush1.bf16.msra.mxu0 %v1970
    %2652 = vmatprep.subr.bf16.mxu0 %v1979
    %2653 = vmatpush1.bf16.msra.mxu0 %v1978
    %2654 = vmatprep.subr.bf16.mxu0 %v1987
    %2655 = vmatpush1.bf16.msra.mxu0 %v1986
    %2656 = vmatprep.subr.bf16.mxu0 %v1995
    %2657 = vmatpush1.bf16.msra.mxu0 %v1994
    %2658 = vmatprep.mubr.bf16.mxu0 %v1056
    %2659 = vmatmul.mubr.bf16.gmra.mrb[0].mxu0 %v1055
    %v2660 = vpop.f32.mrb[0].mxu0
    %v2661 = vadd.f32 %v1087, %v2660
    %v2662 = vpop.f32.mrb[0].mxu0
    %v2663 = vadd.f32 %v1091, %v2662
    %v2664 = vpop.f32.mrb[0].mxu0
    %v2665 = vpop.f32.mrb[0].mxu0
    %2666 = vdwg.mxu0
    %2667 = vmatprep.subr.bf16.mxu0 %v2003
    %2668 = vmatpush1.bf16.msra.mxu0 %v2002
    %2669 = vmatprep.subr.bf16.mxu0 %v2011
    %2670 = vmatpush1.bf16.msra.mxu0 %v2010
    %2671 = vmatprep.subr.bf16.mxu0 %v2019
    %2672 = vmatpush1.bf16.msra.mxu0 %v2018
    %2673 = vmatprep.subr.bf16.mxu0 %v2027
    %2674 = vmatpush1.bf16.msra.mxu0 %v2026
    %2675 = vmatprep.subr.bf16.mxu0 %v2035
    %2676 = vmatpush1.bf16.msra.mxu0 %v2034
    %2677 = vmatprep.subr.bf16.mxu0 %v2043
    %2678 = vmatpush1.bf16.msra.mxu0 %v2042
    %2679 = vmatprep.subr.bf16.mxu0 %v2051
    %2680 = vmatpush1.bf16.msra.mxu0 %v2050
    %2681 = vmatprep.subr.bf16.mxu0 %v2059
    %2682 = vmatpush1.bf16.msra.mxu0 %v2058
    %2683 = vmatprep.subr.bf16.mxu0 %v2067
    %2684 = vmatpush1.bf16.msra.mxu0 %v2066
    %2685 = vmatprep.subr.bf16.mxu0 %v2075
    %2686 = vmatpush1.bf16.msra.mxu0 %v2074
    %2687 = vmatprep.subr.bf16.mxu0 %v2083
    %2688 = vmatpush1.bf16.msra.mxu0 %v2082
    %2689 = vmatprep.subr.bf16.mxu0 %v2091
    %2690 = vmatpush1.bf16.msra.mxu0 %v2090
    %2691 = vmatprep.subr.bf16.mxu0 %v2099
    %2692 = vmatpush1.bf16.msra.mxu0 %v2098
    %2693 = vmatprep.subr.bf16.mxu0 %v2107
    %2694 = vmatpush1.bf16.msra.mxu0 %v2106
    %2695 = vmatprep.subr.bf16.mxu0 %v2115
    %2696 = vmatpush1.bf16.msra.mxu0 %v2114
    %2697 = vmatprep.subr.bf16.mxu0 %v2123
    %2698 = vmatpush1.bf16.msra.mxu0 %v2122
    %2699 = vmatprep.mubr.bf16.mxu0 %v1058
    %2700 = vmatmul.mubr.bf16.gmra.mrb[0].mxu0 %v1057
    %v2701 = vpop.f32.mrb[0].mxu0
    %v2702 = vadd.f32 %v2661, %v2701
    %v2703 = vpop.f32.mrb[0].mxu0
    %v2704 = vadd.f32 %v2663, %v2703
    %v2705 = vpop.f32.mrb[0].mxu0
    %v2706 = vpop.f32.mrb[0].mxu0
    %2707 = vdwg.mxu0
    %v2708 = vxor.u32 %v2456, 2147483648
    %v2709 = vxor.u32 %v2458, 2147483648
    %v2710 = vxor.u32 %v2538, 2147483648
    %v2711 = vxor.u32 %v2540, 2147483648
    %v2712 = vxor.u32 %v2620, 2147483648
    %v2713 = vxor.u32 %v2622, 2147483648
    %v2714 = vxor.u32 %v2702, 2147483648
    %v2715 = vxor.u32 %v2704, 2147483648
    %v2716 = vmul.f32 %v2708, 1.442695
    %v2717 = vpow.pop %v2716
    %v2718 = vmul.f32 %v2709, 1.442695
    %v2719 = vpow.pop %v2718
    %v2720 = vmul.f32 %v2710, 1.442695
    %v2721 = vpow.pop %v2720
    %v2722 = vmul.f32 %v2711, 1.442695
    %v2723 = vpow.pop %v2722
    %v2724 = vmul.f32 %v2712, 1.442695
    %v2725 = vpow.pop %v2724
    %v2726 = vmul.f32 %v2713, 1.442695
    %v2727 = vpow.pop %v2726
    %v2728 = vmul.f32 %v2714, 1.442695
    %v2729 = vpow.pop %v2728
    %v2730 = vmul.f32 %v2715, 1.442695
    %v2731 = vpow.pop %v2730
    %v2732 = vadd.f32 %v2717, 1.0
    %v2733 = vadd.f32 %v2719, 1.0
    %v2734 = vadd.f32 %v2721, 1.0
    %v2735 = vadd.f32 %v2723, 1.0
    %v2736 = vadd.f32 %v2725, 1.0
    %v2737 = vadd.f32 %v2727, 1.0
    %v2738 = vadd.f32 %v2729, 1.0
    %v2739 = vadd.f32 %v2731, 1.0
    %v2740 = vrcp.pop %v2732
    %v2741 = vmul.f32 1.0, %v2740
    %v2742 = vrcp.pop %v2733
    %v2743 = vmul.f32 1.0, %v2742
    %v2744 = vrcp.pop %v2734
    %v2745 = vmul.f32 1.0, %v2744
    %v2746 = vrcp.pop %v2735
    %v2747 = vmul.f32 1.0, %v2746
    %v2748 = vrcp.pop %v2736
    %v2749 = vmul.f32 1.0, %v2748
    %v2750 = vrcp.pop %v2737
    %v2751 = vmul.f32 1.0, %v2750
    %v2752 = vrcp.pop %v2738
    %v2753 = vmul.f32 1.0, %v2752
    %v2754 = vrcp.pop %v2739
    %v2755 = vmul.f32 1.0, %v2754
    %v2756 = vmul.f32 %v2456, %v2741
    %v2757 = vmul.f32 %v2458, %v2743
    %v2758 = vmul.f32 %v2538, %v2745
    %v2759 = vmul.f32 %v2540, %v2747
    %v2760 = vmul.f32 %v2620, %v2749
    %v2761 = vmul.f32 %v2622, %v2751
    %v2762 = vmul.f32 %v2702, %v2753
    %v2763 = vmul.f32 %v2704, %v2755
    %v2764 = vld [vmem:[%s9] sm:$0xf]
    %v2765 = vld [vmem:[%s9 + $0x4] sm:$0xf]
    %v2766 = vld [vmem:[%s9 + $0x8] sm:$0xf]
    %v2767 = vld [vmem:[%s9 + $0xc] sm:$0xf]
    %v2768 = vld [vmem:[%s9 + $0x10] sm:$0xf]
    %v2769 = vld [vmem:[%s9 + $0x14] sm:$0xf]
    %v2770 = vld [vmem:[%s9 + $0x18] sm:$0xf]
    %v2771 = vld [vmem:[%s9 + $0x1c] sm:$0xf]
    %v2772 = vld [vmem:[%s9 + $0x20] sm:$0xf]
    %v2773 = vld [vmem:[%s9 + $0x24] sm:$0xf]
    %v2774 = vld [vmem:[%s9 + $0x28] sm:$0xf]
    %v2775 = vld [vmem:[%s9 + $0x2c] sm:$0xf]
    %v2776 = vld [vmem:[%s9 + $0x30] sm:$0xf]
    %v2777 = vld [vmem:[%s9 + $0x34] sm:$0xf]
    %v2778 = vld [vmem:[%s9 + $0x38] sm:$0xf]
    %v2779 = vld [vmem:[%s9 + $0x3c] sm:$0xf]
    %v2780 = vld [vmem:[%s9 + $0x40] sm:$0xf]
    %v2781 = vld [vmem:[%s9 + $0x44] sm:$0xf]
    %v2782 = vld [vmem:[%s9 + $0x48] sm:$0xf]
    %v2783 = vld [vmem:[%s9 + $0x4c] sm:$0xf]
    %v2784 = vld [vmem:[%s9 + $0x50] sm:$0xf]
    %v2785 = vld [vmem:[%s9 + $0x54] sm:$0xf]
    %v2786 = vld [vmem:[%s9 + $0x58] sm:$0xf]
    %v2787 = vld [vmem:[%s9 + $0x5c] sm:$0xf]
    %v2788 = vld [vmem:[%s9 + $0x60] sm:$0xf]
    %v2789 = vld [vmem:[%s9 + $0x64] sm:$0xf]
    %v2790 = vld [vmem:[%s9 + $0x68] sm:$0xf]
    %v2791 = vld [vmem:[%s9 + $0x6c] sm:$0xf]
    %v2792 = vld [vmem:[%s9 + $0x70] sm:$0xf]
    %v2793 = vld [vmem:[%s9 + $0x74] sm:$0xf]
    %v2794 = vld [vmem:[%s9 + $0x78] sm:$0xf]
    %v2795 = vld [vmem:[%s9 + $0x7c] sm:$0xf]
    %v2796 = vld [vmem:[%s9 + $0x80] sm:$0xf]
    %v2797 = vld [vmem:[%s9 + $0x84] sm:$0xf]
    %v2798 = vld [vmem:[%s9 + $0x88] sm:$0xf]
    %v2799 = vld [vmem:[%s9 + $0x8c] sm:$0xf]
    %v2800 = vld [vmem:[%s9 + $0x90] sm:$0xf]
    %v2801 = vld [vmem:[%s9 + $0x94] sm:$0xf]
    %v2802 = vld [vmem:[%s9 + $0x98] sm:$0xf]
    %v2803 = vld [vmem:[%s9 + $0x9c] sm:$0xf]
    %v2804 = vld [vmem:[%s9 + $0xa0] sm:$0xf]
    %v2805 = vld [vmem:[%s9 + $0xa4] sm:$0xf]
    %v2806 = vld [vmem:[%s9 + $0xa8] sm:$0xf]
    %v2807 = vld [vmem:[%s9 + $0xac] sm:$0xf]
    %v2808 = vld [vmem:[%s9 + $0xb0] sm:$0xf]
    %v2809 = vld [vmem:[%s9 + $0xb4] sm:$0xf]
    %v2810 = vld [vmem:[%s9 + $0xb8] sm:$0xf]
    %v2811 = vld [vmem:[%s9 + $0xbc] sm:$0xf]
    %v2812 = vld [vmem:[%s9 + $0xc0] sm:$0xf]
    %v2813 = vld [vmem:[%s9 + $0xc4] sm:$0xf]
    %v2814 = vld [vmem:[%s9 + $0xc8] sm:$0xf]
    %v2815 = vld [vmem:[%s9 + $0xcc] sm:$0xf]
    %v2816 = vld [vmem:[%s9 + $0xd0] sm:$0xf]
    %v2817 = vld [vmem:[%s9 + $0xd4] sm:$0xf]
    %v2818 = vld [vmem:[%s9 + $0xd8] sm:$0xf]
    %v2819 = vld [vmem:[%s9 + $0xdc] sm:$0xf]
    %v2820 = vld [vmem:[%s9 + $0xe0] sm:$0xf]
    %v2821 = vld [vmem:[%s9 + $0xe4] sm:$0xf]
    %v2822 = vld [vmem:[%s9 + $0xe8] sm:$0xf]
    %v2823 = vld [vmem:[%s9 + $0xec] sm:$0xf]
    %v2824 = vld [vmem:[%s9 + $0xf0] sm:$0xf]
    %v2825 = vld [vmem:[%s9 + $0xf4] sm:$0xf]
    %v2826 = vld [vmem:[%s9 + $0xf8] sm:$0xf]
    %v2827 = vld [vmem:[%s9 + $0xfc] sm:$0xf]
    %v2828 = vld [vmem:[%s9 + $0x100] sm:$0xf]
    %v2829 = vld [vmem:[%s9 + $0x104] sm:$0xf]
    %v2830 = vld [vmem:[%s9 + $0x108] sm:$0xf]
    %v2831 = vld [vmem:[%s9 + $0x10c] sm:$0xf]
    %v2832 = vld [vmem:[%s9 + $0x110] sm:$0xf]
    %v2833 = vld [vmem:[%s9 + $0x114] sm:$0xf]
    %v2834 = vld [vmem:[%s9 + $0x118] sm:$0xf]
    %v2835 = vld [vmem:[%s9 + $0x11c] sm:$0xf]
    %v2836 = vld [vmem:[%s9 + $0x120] sm:$0xf]
    %v2837 = vld [vmem:[%s9 + $0x124] sm:$0xf]
    %v2838 = vld [vmem:[%s9 + $0x128] sm:$0xf]
    %v2839 = vld [vmem:[%s9 + $0x12c] sm:$0xf]
    %v2840 = vld [vmem:[%s9 + $0x130] sm:$0xf]
    %v2841 = vld [vmem:[%s9 + $0x134] sm:$0xf]
    %v2842 = vld [vmem:[%s9 + $0x138] sm:$0xf]
    %v2843 = vld [vmem:[%s9 + $0x13c] sm:$0xf]
    %v2844 = vld [vmem:[%s9 + $0x140] sm:$0xf]
    %v2845 = vld [vmem:[%s9 + $0x144] sm:$0xf]
    %v2846 = vld [vmem:[%s9 + $0x148] sm:$0xf]
    %v2847 = vld [vmem:[%s9 + $0x14c] sm:$0xf]
    %v2848 = vld [vmem:[%s9 + $0x150] sm:$0xf]
    %v2849 = vld [vmem:[%s9 + $0x154] sm:$0xf]
    %v2850 = vld [vmem:[%s9 + $0x158] sm:$0xf]
    %v2851 = vld [vmem:[%s9 + $0x15c] sm:$0xf]
    %v2852 = vld [vmem:[%s9 + $0x160] sm:$0xf]
    %v2853 = vld [vmem:[%s9 + $0x164] sm:$0xf]
    %v2854 = vld [vmem:[%s9 + $0x168] sm:$0xf]
    %v2855 = vld [vmem:[%s9 + $0x16c] sm:$0xf]
    %v2856 = vld [vmem:[%s9 + $0x170] sm:$0xf]
    %v2857 = vld [vmem:[%s9 + $0x174] sm:$0xf]
    %v2858 = vld [vmem:[%s9 + $0x178] sm:$0xf]
    %v2859 = vld [vmem:[%s9 + $0x17c] sm:$0xf]
    %v2860 = vld [vmem:[%s9 + $0x180] sm:$0xf]
    %v2861 = vld [vmem:[%s9 + $0x184] sm:$0xf]
    %v2862 = vld [vmem:[%s9 + $0x188] sm:$0xf]
    %v2863 = vld [vmem:[%s9 + $0x18c] sm:$0xf]
    %v2864 = vld [vmem:[%s9 + $0x190] sm:$0xf]
    %v2865 = vld [vmem:[%s9 + $0x194] sm:$0xf]
    %v2866 = vld [vmem:[%s9 + $0x198] sm:$0xf]
    %v2867 = vld [vmem:[%s9 + $0x19c] sm:$0xf]
    %v2868 = vld [vmem:[%s9 + $0x1a0] sm:$0xf]
    %v2869 = vld [vmem:[%s9 + $0x1a4] sm:$0xf]
    %v2870 = vld [vmem:[%s9 + $0x1a8] sm:$0xf]
    %v2871 = vld [vmem:[%s9 + $0x1ac] sm:$0xf]
    %v2872 = vld [vmem:[%s9 + $0x1b0] sm:$0xf]
    %v2873 = vld [vmem:[%s9 + $0x1b4] sm:$0xf]
    %v2874 = vld [vmem:[%s9 + $0x1b8] sm:$0xf]
    %v2875 = vld [vmem:[%s9 + $0x1bc] sm:$0xf]
    %v2876 = vld [vmem:[%s9 + $0x1c0] sm:$0xf]
    %v2877 = vld [vmem:[%s9 + $0x1c4] sm:$0xf]
    %v2878 = vld [vmem:[%s9 + $0x1c8] sm:$0xf]
    %v2879 = vld [vmem:[%s9 + $0x1cc] sm:$0xf]
    %v2880 = vld [vmem:[%s9 + $0x1d0] sm:$0xf]
    %v2881 = vld [vmem:[%s9 + $0x1d4] sm:$0xf]
    %v2882 = vld [vmem:[%s9 + $0x1d8] sm:$0xf]
    %v2883 = vld [vmem:[%s9 + $0x1dc] sm:$0xf]
    %v2884 = vld [vmem:[%s9 + $0x1e0] sm:$0xf]
    %v2885 = vld [vmem:[%s9 + $0x1e4] sm:$0xf]
    %v2886 = vld [vmem:[%s9 + $0x1e8] sm:$0xf]
    %v2887 = vld [vmem:[%s9 + $0x1ec] sm:$0xf]
    %v2888 = vld [vmem:[%s9 + $0x1f0] sm:$0xf]
    %v2889 = vld [vmem:[%s9 + $0x1f4] sm:$0xf]
    %v2890 = vld [vmem:[%s9 + $0x1f8] sm:$0xf]
    %v2891 = vld [vmem:[%s9 + $0x1fc] sm:$0xf]
    %v2892 = vld [vmem:[%s10] sm:$0x1]
    %v2893 = vpack.c.bf16 %v2756, %v2756
    %v2894 = vpack.c.bf16 %v2757, %v2757
    %v2895 = vpack.c.bf16 %v2758, %v2758
    %v2896 = vpack.c.bf16 %v2759, %v2759
    %v2897 = vpack.c.bf16 %v2760, %v2760
    %v2898 = vpack.c.bf16 %v2761, %v2761
    %v2899 = vpack.c.bf16 %v2762, %v2762
    %v2900 = vpack.c.bf16 %v2763, %v2763
    %v2902 = vlaneseq
    %v2903 = vshrl.u32 %v2902, 7
    %v2904 = vsub.s32 0, %v2903
    %v2905 = vrot.slane %v2892, %v2904
    %v3035 = vunpack.c.l.b16 %v2764
    %v3036 = vunpack.c.l.b16 %v2765
    %v3037 = vunpack.c.l.b16 %v2766
    %v3038 = vunpack.c.l.b16 %v2767
    %v3039 = vunpack.c.l.b16 %v2768
    %v3040 = vunpack.c.l.b16 %v2769
    %v3041 = vunpack.c.l.b16 %v2770
    %v3042 = vunpack.c.l.b16 %v2771
    %v3043 = vunpack.c.l.b16 %v2772
    %v3044 = vunpack.c.l.b16 %v2773
    %v3045 = vunpack.c.l.b16 %v2774
    %v3046 = vunpack.c.l.b16 %v2775
    %v3047 = vunpack.c.l.b16 %v2776
    %v3048 = vunpack.c.l.b16 %v2777
    %v3049 = vunpack.c.l.b16 %v2778
    %v3050 = vunpack.c.l.b16 %v2779
    %v3051 = vunpack.c.l.b16 %v2780
    %v3052 = vunpack.c.l.b16 %v2781
    %v3053 = vunpack.c.l.b16 %v2782
    %v3054 = vunpack.c.l.b16 %v2783
    %v3055 = vunpack.c.l.b16 %v2784
    %v3056 = vunpack.c.l.b16 %v2785
    %v3057 = vunpack.c.l.b16 %v2786
    %v3058 = vunpack.c.l.b16 %v2787
    %v3059 = vunpack.c.l.b16 %v2788
    %v3060 = vunpack.c.l.b16 %v2789
    %v3061 = vunpack.c.l.b16 %v2790
    %v3062 = vunpack.c.l.b16 %v2791
    %v3063 = vunpack.c.l.b16 %v2792
    %v3064 = vunpack.c.l.b16 %v2793
    %v3065 = vunpack.c.l.b16 %v2794
    %v3066 = vunpack.c.l.b16 %v2795
    %v3067 = vunpack.c.l.b16 %v2796
    %v3068 = vunpack.c.l.b16 %v2797
    %v3069 = vunpack.c.l.b16 %v2798
    %v3070 = vunpack.c.l.b16 %v2799
    %v3071 = vunpack.c.l.b16 %v2800
    %v3072 = vunpack.c.l.b16 %v2801
    %v3073 = vunpack.c.l.b16 %v2802
    %v3074 = vunpack.c.l.b16 %v2803
    %v3075 = vunpack.c.l.b16 %v2804
    %v3076 = vunpack.c.l.b16 %v2805
    %v3077 = vunpack.c.l.b16 %v2806
    %v3078 = vunpack.c.l.b16 %v2807
    %v3079 = vunpack.c.l.b16 %v2808
    %v3080 = vunpack.c.l.b16 %v2809
    %v3081 = vunpack.c.l.b16 %v2810
    %v3082 = vunpack.c.l.b16 %v2811
    %v3083 = vunpack.c.l.b16 %v2812
    %v3084 = vunpack.c.l.b16 %v2813
    %v3085 = vunpack.c.l.b16 %v2814
    %v3086 = vunpack.c.l.b16 %v2815
    %v3087 = vunpack.c.l.b16 %v2816
    %v3088 = vunpack.c.l.b16 %v2817
    %v3089 = vunpack.c.l.b16 %v2818
    %v3090 = vunpack.c.l.b16 %v2819
    %v3091 = vunpack.c.l.b16 %v2820
    %v3092 = vunpack.c.l.b16 %v2821
    %v3093 = vunpack.c.l.b16 %v2822
    %v3094 = vunpack.c.l.b16 %v2823
    %v3095 = vunpack.c.l.b16 %v2824
    %v3096 = vunpack.c.l.b16 %v2825
    %v3097 = vunpack.c.l.b16 %v2826
    %v3098 = vunpack.c.l.b16 %v2827
    %v3099 = vunpack.c.l.b16 %v2828
    %v3100 = vunpack.c.l.b16 %v2829
    %v3101 = vunpack.c.l.b16 %v2830
    %v3102 = vunpack.c.l.b16 %v2831
    %v3103 = vunpack.c.l.b16 %v2832
    %v3104 = vunpack.c.l.b16 %v2833
    %v3105 = vunpack.c.l.b16 %v2834
    %v3106 = vunpack.c.l.b16 %v2835
    %v3107 = vunpack.c.l.b16 %v2836
    %v3108 = vunpack.c.l.b16 %v2837
    %v3109 = vunpack.c.l.b16 %v2838
    %v3110 = vunpack.c.l.b16 %v2839
    %v3111 = vunpack.c.l.b16 %v2840
    %v3112 = vunpack.c.l.b16 %v2841
    %v3113 = vunpack.c.l.b16 %v2842
    %v3114 = vunpack.c.l.b16 %v2843
    %v3115 = vunpack.c.l.b16 %v2844
    %v3116 = vunpack.c.l.b16 %v2845
    %v3117 = vunpack.c.l.b16 %v2846
    %v3118 = vunpack.c.l.b16 %v2847
    %v3119 = vunpack.c.l.b16 %v2848
    %v3120 = vunpack.c.l.b16 %v2849
    %v3121 = vunpack.c.l.b16 %v2850
    %v3122 = vunpack.c.l.b16 %v2851
    %v3123 = vunpack.c.l.b16 %v2852
    %v3124 = vunpack.c.l.b16 %v2853
    %v3125 = vunpack.c.l.b16 %v2854
    %v3126 = vunpack.c.l.b16 %v2855
    %v3127 = vunpack.c.l.b16 %v2856
    %v3128 = vunpack.c.l.b16 %v2857
    %v3129 = vunpack.c.l.b16 %v2858
    %v3130 = vunpack.c.l.b16 %v2859
    %v3131 = vunpack.c.l.b16 %v2860
    %v3132 = vunpack.c.l.b16 %v2861
    %v3133 = vunpack.c.l.b16 %v2862
    %v3134 = vunpack.c.l.b16 %v2863
    %v3135 = vunpack.c.l.b16 %v2864
    %v3136 = vunpack.c.l.b16 %v2865
    %v3137 = vunpack.c.l.b16 %v2866
    %v3138 = vunpack.c.l.b16 %v2867
    %v3139 = vunpack.c.l.b16 %v2868
    %v3140 = vunpack.c.l.b16 %v2869
    %v3141 = vunpack.c.l.b16 %v2870
    %v3142 = vunpack.c.l.b16 %v2871
    %v3143 = vunpack.c.l.b16 %v2872
    %v3144 = vunpack.c.l.b16 %v2873
    %v3145 = vunpack.c.l.b16 %v2874
    %v3146 = vunpack.c.l.b16 %v2875
    %v3147 = vunpack.c.l.b16 %v2876
    %v3148 = vunpack.c.l.b16 %v2877
    %v3149 = vunpack.c.l.b16 %v2878
    %v3150 = vunpack.c.l.b16 %v2879
    %v3151 = vunpack.c.l.b16 %v2880
    %v3152 = vunpack.c.l.b16 %v2881
    %v3153 = vunpack.c.l.b16 %v2882
    %v3154 = vunpack.c.l.b16 %v2883
    %v3155 = vunpack.c.l.b16 %v2884
    %v3156 = vunpack.c.l.b16 %v2885
    %v3157 = vunpack.c.l.b16 %v2886
    %v3158 = vunpack.c.l.b16 %v2887
    %v3159 = vunpack.c.l.b16 %v2888
    %v3160 = vunpack.c.l.b16 %v2889
    %v3161 = vunpack.c.l.b16 %v2890
    %v3162 = vunpack.c.l.b16 %v2891
    %v3163 = vpack.c.b16 %v3036, %v3035
    %v3164 = vpack.c.b16 %v3038, %v3037
    %v3165 = vpack.c.b16 %v3040, %v3039
    %v3166 = vpack.c.b16 %v3042, %v3041
    %v3167 = vpack.c.b16 %v3044, %v3043
    %v3168 = vpack.c.b16 %v3046, %v3045
    %v3169 = vpack.c.b16 %v3048, %v3047
    %v3170 = vpack.c.b16 %v3050, %v3049
    %v3171 = vpack.c.b16 %v3052, %v3051
    %v3172 = vpack.c.b16 %v3054, %v3053
    %v3173 = vpack.c.b16 %v3056, %v3055
    %v3174 = vpack.c.b16 %v3058, %v3057
    %v3175 = vpack.c.b16 %v3060, %v3059
    %v3176 = vpack.c.b16 %v3062, %v3061
    %v3177 = vpack.c.b16 %v3064, %v3063
    %v3178 = vpack.c.b16 %v3066, %v3065
    %v3179 = vpack.c.b16 %v3068, %v3067
    %v3180 = vpack.c.b16 %v3070, %v3069
    %v3181 = vpack.c.b16 %v3072, %v3071
    %v3182 = vpack.c.b16 %v3074, %v3073
    %v3183 = vpack.c.b16 %v3076, %v3075
    %v3184 = vpack.c.b16 %v3078, %v3077
    %v3185 = vpack.c.b16 %v3080, %v3079
    %v3186 = vpack.c.b16 %v3082, %v3081
    %v3187 = vpack.c.b16 %v3084, %v3083
    %v3188 = vpack.c.b16 %v3086, %v3085
    %v3189 = vpack.c.b16 %v3088, %v3087
    %v3190 = vpack.c.b16 %v3090, %v3089
    %v3191 = vpack.c.b16 %v3092, %v3091
    %v3192 = vpack.c.b16 %v3094, %v3093
    %v3193 = vpack.c.b16 %v3096, %v3095
    %v3194 = vpack.c.b16 %v3098, %v3097
    %v3195 = vpack.c.b16 %v3100, %v3099
    %v3196 = vpack.c.b16 %v3102, %v3101
    %v3197 = vpack.c.b16 %v3104, %v3103
    %v3198 = vpack.c.b16 %v3106, %v3105
    %v3199 = vpack.c.b16 %v3108, %v3107
    %v3200 = vpack.c.b16 %v3110, %v3109
    %v3201 = vpack.c.b16 %v3112, %v3111
    %v3202 = vpack.c.b16 %v3114, %v3113
    %v3203 = vpack.c.b16 %v3116, %v3115
    %v3204 = vpack.c.b16 %v3118, %v3117
    %v3205 = vpack.c.b16 %v3120, %v3119
    %v3206 = vpack.c.b16 %v3122, %v3121
    %v3207 = vpack.c.b16 %v3124, %v3123
    %v3208 = vpack.c.b16 %v3126, %v3125
    %v3209 = vpack.c.b16 %v3128, %v3127
    %v3210 = vpack.c.b16 %v3130, %v3129
    %v3211 = vpack.c.b16 %v3132, %v3131
    %v3212 = vpack.c.b16 %v3134, %v3133
    %v3213 = vpack.c.b16 %v3136, %v3135
    %v3214 = vpack.c.b16 %v3138, %v3137
    %v3215 = vpack.c.b16 %v3140, %v3139
    %v3216 = vpack.c.b16 %v3142, %v3141
    %v3217 = vpack.c.b16 %v3144, %v3143
    %v3218 = vpack.c.b16 %v3146, %v3145
    %v3219 = vpack.c.b16 %v3148, %v3147
    %v3220 = vpack.c.b16 %v3150, %v3149
    %v3221 = vpack.c.b16 %v3152, %v3151
    %v3222 = vpack.c.b16 %v3154, %v3153
    %v3223 = vpack.c.b16 %v3156, %v3155
    %v3224 = vpack.c.b16 %v3158, %v3157
    %v3225 = vpack.c.b16 %v3160, %v3159
    %v3226 = vpack.c.b16 %v3162, %v3161
    %3291 = vmatprep.subr.bf16.mxu0 0
    %3292 = vmatpush1.bf16.msra.mxu0 %v3163
    %3293 = vmatprep.subr.bf16.mxu0 0
    %3294 = vmatpush1.bf16.msra.mxu0 %v3164
    %3295 = vmatprep.subr.bf16.mxu0 0
    %3296 = vmatpush1.bf16.msra.mxu0 %v3165
    %3297 = vmatprep.subr.bf16.mxu0 0
    %3298 = vmatpush1.bf16.msra.mxu0 %v3166
    %3299 = vmatprep.subr.bf16.mxu0 0
    %3300 = vmatpush1.bf16.msra.mxu0 %v3167
    %3301 = vmatprep.subr.bf16.mxu0 0
    %3302 = vmatpush1.bf16.msra.mxu0 %v3168
    %3303 = vmatprep.subr.bf16.mxu0 0
    %3304 = vmatpush1.bf16.msra.mxu0 %v3169
    %3305 = vmatprep.subr.bf16.mxu0 0
    %3306 = vmatpush1.bf16.msra.mxu0 %v3170
    %3307 = vmatprep.subr.bf16.mxu0 0
    %3308 = vmatpush1.bf16.msra.mxu0 %v3171
    %3309 = vmatprep.subr.bf16.mxu0 0
    %3310 = vmatpush1.bf16.msra.mxu0 %v3172
    %3311 = vmatprep.subr.bf16.mxu0 0
    %3312 = vmatpush1.bf16.msra.mxu0 %v3173
    %3313 = vmatprep.subr.bf16.mxu0 0
    %3314 = vmatpush1.bf16.msra.mxu0 %v3174
    %3315 = vmatprep.subr.bf16.mxu0 0
    %3316 = vmatpush1.bf16.msra.mxu0 %v3175
    %3317 = vmatprep.subr.bf16.mxu0 0
    %3318 = vmatpush1.bf16.msra.mxu0 %v3176
    %3319 = vmatprep.subr.bf16.mxu0 0
    %3320 = vmatpush1.bf16.msra.mxu0 %v3177
    %3321 = vmatprep.subr.bf16.mxu0 0
    %3322 = vmatpush1.bf16.msra.mxu0 %v3178
    %3323 = vmatprep.mubr.bf16.mxu0 %v2894
    %3324 = vmatmul.mubr.bf16.gmra.mrb[0].mxu0 %v2893
    %v3325 = vpop.f32.mrb[0].mxu0
    %v3326 = vadd.f32 %v2905, %v3325
    %v3327 = vpop.f32.mrb[0].mxu0
    %v3328 = vpop.f32.mrb[0].mxu0
    %v3329 = vpop.f32.mrb[0].mxu0
    %3330 = vdwg.mxu0
    %3331 = vmatprep.subr.bf16.mxu0 0
    %3332 = vmatpush1.bf16.msra.mxu0 %v3179
    %3333 = vmatprep.subr.bf16.mxu0 0
    %3334 = vmatpush1.bf16.msra.mxu0 %v3180
    %3335 = vmatprep.subr.bf16.mxu0 0
    %3336 = vmatpush1.bf16.msra.mxu0 %v3181
    %3337 = vmatprep.subr.bf16.mxu0 0
    %3338 = vmatpush1.bf16.msra.mxu0 %v3182
    %3339 = vmatprep.subr.bf16.mxu0 0
    %3340 = vmatpush1.bf16.msra.mxu0 %v3183
    %3341 = vmatprep.subr.bf16.mxu0 0
    %3342 = vmatpush1.bf16.msra.mxu0 %v3184
    %3343 = vmatprep.subr.bf16.mxu0 0
    %3344 = vmatpush1.bf16.msra.mxu0 %v3185
    %3345 = vmatprep.subr.bf16.mxu0 0
    %3346 = vmatpush1.bf16.msra.mxu0 %v3186
    %3347 = vmatprep.subr.bf16.mxu0 0
    %3348 = vmatpush1.bf16.msra.mxu0 %v3187
    %3349 = vmatprep.subr.bf16.mxu0 0
    %3350 = vmatpush1.bf16.msra.mxu0 %v3188
    %3351 = vmatprep.subr.bf16.mxu0 0
    %3352 = vmatpush1.bf16.msra.mxu0 %v3189
    %3353 = vmatprep.subr.bf16.mxu0 0
    %3354 = vmatpush1.bf16.msra.mxu0 %v3190
    %3355 = vmatprep.subr.bf16.mxu0 0
    %3356 = vmatpush1.bf16.msra.mxu0 %v3191
    %3357 = vmatprep.subr.bf16.mxu0 0
    %3358 = vmatpush1.bf16.msra.mxu0 %v3192
    %3359 = vmatprep.subr.bf16.mxu0 0
    %3360 = vmatpush1.bf16.msra.mxu0 %v3193
    %3361 = vmatprep.subr.bf16.mxu0 0
    %3362 = vmatpush1.bf16.msra.mxu0 %v3194
    %3363 = vmatprep.mubr.bf16.mxu0 %v2896
    %3364 = vmatmul.mubr.bf16.gmra.mrb[0].mxu0 %v2895
    %v3365 = vpop.f32.mrb[0].mxu0
    %v3366 = vadd.f32 %v3326, %v3365
    %v3367 = vpop.f32.mrb[0].mxu0
    %v3368 = vpop.f32.mrb[0].mxu0
    %v3369 = vpop.f32.mrb[0].mxu0
    %3370 = vdwg.mxu0
    %3371 = vmatprep.subr.bf16.mxu0 0
    %3372 = vmatpush1.bf16.msra.mxu0 %v3195
    %3373 = vmatprep.subr.bf16.mxu0 0
    %3374 = vmatpush1.bf16.msra.mxu0 %v3196
    %3375 = vmatprep.subr.bf16.mxu0 0
    %3376 = vmatpush1.bf16.msra.mxu0 %v3197
    %3377 = vmatprep.subr.bf16.mxu0 0
    %3378 = vmatpush1.bf16.msra.mxu0 %v3198
    %3379 = vmatprep.subr.bf16.mxu0 0
    %3380 = vmatpush1.bf16.msra.mxu0 %v3199
    %3381 = vmatprep.subr.bf16.mxu0 0
    %3382 = vmatpush1.bf16.msra.mxu0 %v3200
    %3383 = vmatprep.subr.bf16.mxu0 0
    %3384 = vmatpush1.bf16.msra.mxu0 %v3201
    %3385 = vmatprep.subr.bf16.mxu0 0
    %3386 = vmatpush1.bf16.msra.mxu0 %v3202
    %3387 = vmatprep.subr.bf16.mxu0 0
    %3388 = vmatpush1.bf16.msra.mxu0 %v3203
    %3389 = vmatprep.subr.bf16.mxu0 0
    %3390 = vmatpush1.bf16.msra.mxu0 %v3204
    %3391 = vmatprep.subr.bf16.mxu0 0
    %3392 = vmatpush1.bf16.msra.mxu0 %v3205
    %3393 = vmatprep.subr.bf16.mxu0 0
    %3394 = vmatpush1.bf16.msra.mxu0 %v3206
    %3395 = vmatprep.subr.bf16.mxu0 0
    %3396 = vmatpush1.bf16.msra.mxu0 %v3207
    %3397 = vmatprep.subr.bf16.mxu0 0
    %3398 = vmatpush1.bf16.msra.mxu0 %v3208
    %3399 = vmatprep.subr.bf16.mxu0 0
    %3400 = vmatpush1.bf16.msra.mxu0 %v3209
    %3401 = vmatprep.subr.bf16.mxu0 0
    %3402 = vmatpush1.bf16.msra.mxu0 %v3210
    %3403 = vmatprep.mubr.bf16.mxu0 %v2898
    %3404 = vmatmul.mubr.bf16.gmra.mrb[0].mxu0 %v2897
    %v3405 = vpop.f32.mrb[0].mxu0
    %v3406 = vadd.f32 %v3366, %v3405
    %v3407 = vpop.f32.mrb[0].mxu0
    %v3408 = vpop.f32.mrb[0].mxu0
    %v3409 = vpop.f32.mrb[0].mxu0
    %3410 = vdwg.mxu0
    %3411 = vmatprep.subr.bf16.mxu0 0
    %3412 = vmatpush1.bf16.msra.mxu0 %v3211
    %3413 = vmatprep.subr.bf16.mxu0 0
    %3414 = vmatpush1.bf16.msra.mxu0 %v3212
    %3415 = vmatprep.subr.bf16.mxu0 0
    %3416 = vmatpush1.bf16.msra.mxu0 %v3213
    %3417 = vmatprep.subr.bf16.mxu0 0
    %3418 = vmatpush1.bf16.msra.mxu0 %v3214
    %3419 = vmatprep.subr.bf16.mxu0 0
    %3420 = vmatpush1.bf16.msra.mxu0 %v3215
    %3421 = vmatprep.subr.bf16.mxu0 0
    %3422 = vmatpush1.bf16.msra.mxu0 %v3216
    %3423 = vmatprep.subr.bf16.mxu0 0
    %3424 = vmatpush1.bf16.msra.mxu0 %v3217
    %3425 = vmatprep.subr.bf16.mxu0 0
    %3426 = vmatpush1.bf16.msra.mxu0 %v3218
    %3427 = vmatprep.subr.bf16.mxu0 0
    %3428 = vmatpush1.bf16.msra.mxu0 %v3219
    %3429 = vmatprep.subr.bf16.mxu0 0
    %3430 = vmatpush1.bf16.msra.mxu0 %v3220
    %3431 = vmatprep.subr.bf16.mxu0 0
    %3432 = vmatpush1.bf16.msra.mxu0 %v3221
    %3433 = vmatprep.subr.bf16.mxu0 0
    %3434 = vmatpush1.bf16.msra.mxu0 %v3222
    %3435 = vmatprep.subr.bf16.mxu0 0
    %3436 = vmatpush1.bf16.msra.mxu0 %v3223
    %3437 = vmatprep.subr.bf16.mxu0 0
    %3438 = vmatpush1.bf16.msra.mxu0 %v3224
    %3439 = vmatprep.subr.bf16.mxu0 0
    %3440 = vmatpush1.bf16.msra.mxu0 %v3225
    %3441 = vmatprep.subr.bf16.mxu0 0
    %3442 = vmatpush1.bf16.msra.mxu0 %v3226
    %3443 = vmatprep.mubr.bf16.mxu0 %v2900
    %3444 = vmatmul.mubr.bf16.gmra.mrb[0].mxu0 %v2899
    %v3445 = vpop.f32.mrb[0].mxu0
    %v3446 = vadd.f32 %v3406, %v3445
    %v3447 = vpop.f32.mrb[0].mxu0
    %v3448 = vpop.f32.mrb[0].mxu0
    %v3449 = vpop.f32.mrb[0].mxu0
    %3450 = vdwg.mxu0
    %vm3451 = vcmask 523264
    %3452 = vst.msk [vmem:[#allocation2] sm:$0xff] %vm3451, %v3446
    // Predicated region
    $region46: #{cvae_forward.3} parent=1 // pred_check
      _
    $region47: #{cvae_forward.3} parent=1 // pred_check_branch
      %3454 = sbr.rel (0) target = $region49
    $region48: #{cvae_forward.3} parent=1 // pred_region
      %s3456 = ssub.s32 128, 128
      %3457 = vsyncadd [#allocation3], %s3456
      %s3459 = sshll.u32 [#allocation2], 4
      %s3460 = int_to_ptr.vmem [resolvable:$true] %s3459
      %3462 = dma.vmem_to_hbm [thread:$0]  %s3460, 128, %s11, [#allocation3]
    $region49: #{cvae_forward.3} parent=1 // pred_fallthru
      _
    // Predicated region
    $region50: #{cvae_forward.3} parent=1 // pred_check
      _
    $region51: #{cvae_forward.3} parent=1 // pred_check_branch
      %3464 = sbr.rel (0) target = $region53
    $region52: #{cvae_forward.3} parent=1 // pred_region
      %3465 = dma.done [#allocation3], 128
    $region53: #{cvae_forward.3} parent=1 // pred_fallthru
      _
    %3466 = vsyncpa [#allocation3], 1

// kernel: cvae_forward.2
$region0: #{cvae_forward.2}
  #allocation0 [shape = 'u32[]', space=smem, size = 0x4, offset = 0x4, fixed_abs, tag = 'smem constant byte address 0x4 - core index']
  #allocation1 [shape = 'u32[144,128]{1,0:T(1,128)}', space=vmem, size = 0x12000, scoped, tag = 'internal scratch']
  %s0 = inlined_call_operand.vmem [shape: f32[8,64], index: 0, kind: input, shape index: {}]
  %s1 = inlined_call_operand.vmem [shape: bf16[64,1024], index: 1, kind: input, shape index: {}]
  %s2 = inlined_call_operand.vmem [shape: f32[1,1024], index: 2, kind: input, shape index: {}]
  %s3 = inlined_call_operand.hbm [shape: bf16[1024,512], index: 3, kind: input, shape index: {}]
  %s4 = inlined_call_operand.vmem [shape: f32[1,512], index: 4, kind: input, shape index: {}]
  %s5 = inlined_call_operand.hbm [shape: bf16[512,256], index: 5, kind: input, shape index: {}]
  %s6 = inlined_call_operand.vmem [shape: f32[1,256], index: 6, kind: input, shape index: {}]
  %s7 = inlined_call_operand.vmem [shape: bf16[256,128], index: 7, kind: input, shape index: {}]
  %s8 = inlined_call_operand.vmem [shape: f32[1,128], index: 8, kind: input, shape index: {}]
  %s9 = inlined_call_operand.vmem [shape: bf16[128,160], index: 9, kind: input, shape index: {}]
  %s10 = inlined_call_operand.vmem [shape: f32[1,160], index: 10, kind: input, shape index: {}]
  %s11 = inlined_call_operand.vmem [shape: bf16[128,5], index: 11, kind: input, shape index: {}]
  %s12 = inlined_call_operand.vmem [shape: f32[1,5], index: 12, kind: input, shape index: {}]
  %s13 = inlined_call_operand.vmem [shape: f32[8,160], index: 13, kind: output, shape index: {0}]
  %s14 = inlined_call_operand.vmem [shape: f32[8,5], index: 14, kind: output, shape index: {1}]
  %15 = xla_tuple %s13, %s14
  %s16 = sld [smem:[#allocation0]]
  $region78: #{cvae_forward.2} parent=0
    _
  %s18 = ssub.s32 1, %s16
  %s19 = scalar_select 0, %s18, %s16
  $region1: #{cvae_forward.2} parent=0
    #allocation2 [shape = 'u8[1048576]{0}', space=vmem, size = 0x100000, scoped, tag = 'input window, operand 3, single buffered']
    #allocation3 [shape = 's32[1]{0}', space=sflag, size = 0x4, scoped, tag = 'scoped memory for cvae_forward.2']
    #allocation4 [shape = 'u8[262144]{0}', space=vmem, size = 0x40000, scoped, tag = 'input window, operand 5, single buffered']
    #allocation5 [shape = 's32[1]{0}', space=sflag, size = 0x4, scoped, tag = 'scoped memory for cvae_forward.2']
    %20 = vsyncpa [#allocation3], 0
    %21 = vsyncpa [#allocation5], 0
    // Predicated region
    $region2: #{cvae_forward.2} parent=1 // pred_check
      _
    $region3: #{cvae_forward.2} parent=1 // pred_check_branch
      %23 = sbr.rel (0) target = $region5
    $region4: #{cvae_forward.2} parent=1 // pred_region
      _
    $region5: #{cvae_forward.2} parent=1 // pred_fallthru
      _
    // Predicated region
    $region6: #{cvae_forward.2} parent=1 // pred_check
      _
    $region7: #{cvae_forward.2} parent=1 // pred_check_branch
      %25 = sbr.rel (0) target = $region9
    $region8: #{cvae_forward.2} parent=1 // pred_region
      _
    $region9: #{cvae_forward.2} parent=1 // pred_fallthru
      _
    // Predicated region
    $region10: #{cvae_forward.2} parent=1 // pred_check
      _
    $region11: #{cvae_forward.2} parent=1 // pred_check_branch
      %27 = sbr.rel (0) target = $region13
    $region12: #{cvae_forward.2} parent=1 // pred_region
      _
    $region13: #{cvae_forward.2} parent=1 // pred_fallthru
      _
    // Predicated region
    $region14: #{cvae_forward.2} parent=1 // pred_check
      _
    $region15: #{cvae_forward.2} parent=1 // pred_check_branch
      %29 = sbr.rel (0) target = $region17
    $region16: #{cvae_forward.2} parent=1 // pred_region
      %s31 = ssub.s32 32768, 32768
      %32 = vsyncadd [#allocation3], %s31
      %s33 = sshll.u32 [#allocation2], 4
      %s34 = int_to_ptr.vmem [resolvable:$true] %s33
      %39 = dma.hbm_to_vmem [thread:$0]  %s3, 32768, %s34, [#allocation3], 256, 256, 16
    $region17: #{cvae_forward.2} parent=1 // pred_fallthru
      _
    // Predicated region
    $region18: #{cvae_forward.2} parent=1 // pred_check
      _
    $region19: #{cvae_forward.2} parent=1 // pred_check_branch
      %41 = sbr.rel (0) target = $region21
    $region20: #{cvae_forward.2} parent=1 // pred_region
      _
    $region21: #{cvae_forward.2} parent=1 // pred_fallthru
      _
    // Predicated region
    $region22: #{cvae_forward.2} parent=1 // pred_check
      _
    $region23: #{cvae_forward.2} parent=1 // pred_check_branch
      %43 = sbr.rel (0) target = $region25
    $region24: #{cvae_forward.2} parent=1 // pred_region
      %s45 = ssub.s32 8192, 8192
      %46 = vsyncadd [#allocation5], %s45
      %s47 = sshll.u32 [#allocation4], 4
      %s48 = int_to_ptr.vmem [resolvable:$true] %s47
      %53 = dma.hbm_to_vmem [thread:$0]  %s5, 8192, %s48, [#allocation5], 128, 128, 8
    $region25: #{cvae_forward.2} parent=1 // pred_fallthru
      _
    // Predicated region
    $region26: #{cvae_forward.2} parent=1 // pred_check
      _
    $region27: #{cvae_forward.2} parent=1 // pred_check_branch
      %55 = sbr.rel (0) target = $region29
    $region28: #{cvae_forward.2} parent=1 // pred_region
      _
    $region29: #{cvae_forward.2} parent=1 // pred_fallthru
      _
    // Predicated region
    $region30: #{cvae_forward.2} parent=1 // pred_check
      _
    $region31: #{cvae_forward.2} parent=1 // pred_check_branch
      %57 = sbr.rel (0) target = $region33
    $region32: #{cvae_forward.2} parent=1 // pred_region
      _
    $region33: #{cvae_forward.2} parent=1 // pred_fallthru
      _
    // Predicated region
    $region34: #{cvae_forward.2} parent=1 // pred_check
      _
    $region35: #{cvae_forward.2} parent=1 // pred_check_branch
      %59 = sbr.rel (0) target = $region37
    $region36: #{cvae_forward.2} parent=1 // pred_region
      _
    $region37: #{cvae_forward.2} parent=1 // pred_fallthru
      _
    // Predicated region
    $region38: #{cvae_forward.2} parent=1 // pred_check
      _
    $region39: #{cvae_forward.2} parent=1 // pred_check_branch
      %61 = sbr.rel (0) target = $region41
    $region40: #{cvae_forward.2} parent=1 // pred_region
      _
    $region41: #{cvae_forward.2} parent=1 // pred_fallthru
      _
    // Predicated region
    $region42: #{cvae_forward.2} parent=1 // pred_check
      _
    $region43: #{cvae_forward.2} parent=1 // pred_check_branch
      %63 = sbr.rel (0) target = $region45
    $region44: #{cvae_forward.2} parent=1 // pred_region
      _
    $region45: #{cvae_forward.2} parent=1 // pred_fallthru
      _
    // Predicated region
    $region46: #{cvae_forward.2} parent=1 // pred_check
      _
    $region47: #{cvae_forward.2} parent=1 // pred_check_branch
      %65 = sbr.rel (0) target = $region49
    $region48: #{cvae_forward.2} parent=1 // pred_region
      _
    $region49: #{cvae_forward.2} parent=1 // pred_fallthru
      _
    // Predicated region
    $region50: #{cvae_forward.2} parent=1 // pred_check
      _
    $region51: #{cvae_forward.2} parent=1 // pred_check_branch
      %67 = sbr.rel (0) target = $region53
    $region52: #{cvae_forward.2} parent=1 // pred_region
      _
    $region53: #{cvae_forward.2} parent=1 // pred_fallthru
      _
    // Predicated region
    $region54: #{cvae_forward.2} parent=1 // pred_check
      _
    $region55: #{cvae_forward.2} parent=1 // pred_check_branch
      %69 = sbr.rel (0) target = $region57
    $region56: #{cvae_forward.2} parent=1 // pred_region
      %70 = dma.done [#allocation3], 32768
    $region57: #{cvae_forward.2} parent=1 // pred_fallthru
      _
    // Predicated region
    $region58: #{cvae_forward.2} parent=1 // pred_check
      _
    $region59: #{cvae_forward.2} parent=1 // pred_check_branch
      %72 = sbr.rel (0) target = $region61
    $region60: #{cvae_forward.2} parent=1 // pred_region
      %73 = dma.done [#allocation5], 8192
    $region61: #{cvae_forward.2} parent=1 // pred_fallthru
      _
    %v75 = vld [vmem:[%s0] sm:$0xff]
    %v76 = vld [vmem:[%s1] sm:$0xff]
    %v77 = vld [vmem:[%s1 + $0x8] sm:$0xff]
    %v78 = vld [vmem:[%s1 + $0x10] sm:$0xff]
    %v79 = vld [vmem:[%s1 + $0x18] sm:$0xff]
    %v80 = vld [vmem:[%s1 + $0x20] sm:$0xff]
    %v81 = vld [vmem:[%s1 + $0x28] sm:$0xff]
    %v82 = vld [vmem:[%s1 + $0x30] sm:$0xff]
    %v83 = vld [vmem:[%s1 + $0x38] sm:$0xff]
    %v84 = vld [vmem:[%s1 + $0x40] sm:$0xff]
    %v85 = vld [vmem:[%s1 + $0x48] sm:$0xff]
    %v86 = vld [vmem:[%s1 + $0x50] sm:$0xff]
    %v87 = vld [vmem:[%s1 + $0x58] sm:$0xff]
    %v88 = vld [vmem:[%s1 + $0x60] sm:$0xff]
    %v89 = vld [vmem:[%s1 + $0x68] sm:$0xff]
    %v90 = vld [vmem:[%s1 + $0x70] sm:$0xff]
    %v91 = vld [vmem:[%s1 + $0x78] sm:$0xff]
    %v92 = vld [vmem:[%s1 + $0x80] sm:$0xff]
    %v93 = vld [vmem:[%s1 + $0x88] sm:$0xff]
    %v94 = vld [vmem:[%s1 + $0x90] sm:$0xff]
    %v95 = vld [vmem:[%s1 + $0x98] sm:$0xff]
    %v96 = vld [vmem:[%s1 + $0xa0] sm:$0xff]
    %v97 = vld [vmem:[%s1 + $0xa8] sm:$0xff]
    %v98 = vld [vmem:[%s1 + $0xb0] sm:$0xff]
    %v99 = vld [vmem:[%s1 + $0xb8] sm:$0xff]
    %v100 = vld [vmem:[%s1 + $0xc0] sm:$0xff]
    %v101 = vld [vmem:[%s1 + $0xc8] sm:$0xff]
    %v102 = vld [vmem:[%s1 + $0xd0] sm:$0xff]
    %v103 = vld [vmem:[%s1 + $0xd8] sm:$0xff]
    %v104 = vld [vmem:[%s1 + $0xe0] sm:$0xff]
    %v105 = vld [vmem:[%s1 + $0xe8] sm:$0xff]
    %v106 = vld [vmem:[%s1 + $0xf0] sm:$0xff]
    %v107 = vld [vmem:[%s1 + $0xf8] sm:$0xff]
    %v108 = vld [vmem:[%s2] sm:$0xff]
    %v109 = vpack.c.bf16 %v75, %v75
    %v111 = vlaneseq
    %v112 = vshrl.u32 %v111, 7
    %v113 = vsub.s32 0, %v112
    %v114 = vrot.slane %v108, %v113
    %v115 = vlaneseq
    %v116 = vshrl.u32 %v115, 7
    %v117 = vsub.s32 1, %v116
    %v118 = vrot.slane %v108, %v117
    %v119 = vlaneseq
    %v120 = vshrl.u32 %v119, 7
    %v121 = vsub.s32 2, %v120
    %v122 = vrot.slane %v108, %v121
    %v123 = vlaneseq
    %v124 = vshrl.u32 %v123, 7
    %v125 = vsub.s32 3, %v124
    %v126 = vrot.slane %v108, %v125
    %v127 = vlaneseq
    %v128 = vshrl.u32 %v127, 7
    %v129 = vsub.s32 4, %v128
    %v130 = vrot.slane %v108, %v129
    %v131 = vlaneseq
    %v132 = vshrl.u32 %v131, 7
    %v133 = vsub.s32 5, %v132
    %v134 = vrot.slane %v108, %v133
    %v135 = vlaneseq
    %v136 = vshrl.u32 %v135, 7
    %v137 = vsub.s32 6, %v136
    %v138 = vrot.slane %v108, %v137
    %v139 = vlaneseq
    %v140 = vshrl.u32 %v139, 7
    %v141 = vsub.s32 7, %v140
    %v142 = vrot.slane %v108, %v141
    %v183 = vunpack.c.l.b16 %v76
    %v184 = vunpack.c.h.b16 %v76
    %v185 = vunpack.c.l.b16 %v77
    %v186 = vunpack.c.h.b16 %v77
    %v187 = vunpack.c.l.b16 %v78
    %v188 = vunpack.c.h.b16 %v78
    %v189 = vunpack.c.l.b16 %v79
    %v190 = vunpack.c.h.b16 %v79
    %v191 = vunpack.c.l.b16 %v80
    %v192 = vunpack.c.h.b16 %v80
    %v193 = vunpack.c.l.b16 %v81
    %v194 = vunpack.c.h.b16 %v81
    %v195 = vunpack.c.l.b16 %v82
    %v196 = vunpack.c.h.b16 %v82
    %v197 = vunpack.c.l.b16 %v83
    %v198 = vunpack.c.h.b16 %v83
    %v199 = vunpack.c.l.b16 %v84
    %v200 = vunpack.c.h.b16 %v84
    %v201 = vunpack.c.l.b16 %v85
    %v202 = vunpack.c.h.b16 %v85
    %v203 = vunpack.c.l.b16 %v86
    %v204 = vunpack.c.h.b16 %v86
    %v205 = vunpack.c.l.b16 %v87
    %v206 = vunpack.c.h.b16 %v87
    %v207 = vunpack.c.l.b16 %v88
    %v208 = vunpack.c.h.b16 %v88
    %v209 = vunpack.c.l.b16 %v89
    %v210 = vunpack.c.h.b16 %v89
    %v211 = vunpack.c.l.b16 %v90
    %v212 = vunpack.c.h.b16 %v90
    %v213 = vunpack.c.l.b16 %v91
    %v214 = vunpack.c.h.b16 %v91
    %v215 = vunpack.c.l.b16 %v92
    %v216 = vunpack.c.h.b16 %v92
    %v217 = vunpack.c.l.b16 %v93
    %v218 = vunpack.c.h.b16 %v93
    %v219 = vunpack.c.l.b16 %v94
    %v220 = vunpack.c.h.b16 %v94
    %v221 = vunpack.c.l.b16 %v95
    %v222 = vunpack.c.h.b16 %v95
    %v223 = vunpack.c.l.b16 %v96
    %v224 = vunpack.c.h.b16 %v96
    %v225 = vunpack.c.l.b16 %v97
    %v226 = vunpack.c.h.b16 %v97
    %v227 = vunpack.c.l.b16 %v98
    %v228 = vunpack.c.h.b16 %v98
    %v229 = vunpack.c.l.b16 %v99
    %v230 = vunpack.c.h.b16 %v99
    %v231 = vunpack.c.l.b16 %v100
    %v232 = vunpack.c.h.b16 %v100
    %v233 = vunpack.c.l.b16 %v101
    %v234 = vunpack.c.h.b16 %v101
    %v235 = vunpack.c.l.b16 %v102
    %v236 = vunpack.c.h.b16 %v102
    %v237 = vunpack.c.l.b16 %v103
    %v238 = vunpack.c.h.b16 %v103
    %v239 = vunpack.c.l.b16 %v104
    %v240 = vunpack.c.h.b16 %v104
    %v241 = vunpack.c.l.b16 %v105
    %v242 = vunpack.c.h.b16 %v105
    %v243 = vunpack.c.l.b16 %v106
    %v244 = vunpack.c.h.b16 %v106
    %v245 = vunpack.c.l.b16 %v107
    %v246 = vunpack.c.h.b16 %v107
    %v247 = vpack.c.b16 %v191, %v183
    %v248 = vpack.c.b16 %v192, %v184
    %v249 = vpack.c.b16 %v193, %v185
    %v250 = vpack.c.b16 %v194, %v186
    %v251 = vpack.c.b16 %v195, %v187
    %v252 = vpack.c.b16 %v196, %v188
    %v253 = vpack.c.b16 %v197, %v189
    %v254 = vpack.c.b16 %v198, %v190
    %v255 = vpack.c.b16 %v207, %v199
    %v256 = vpack.c.b16 %v208, %v200
    %v257 = vpack.c.b16 %v209, %v201
    %v258 = vpack.c.b16 %v210, %v202
    %v259 = vpack.c.b16 %v211, %v203
    %v260 = vpack.c.b16 %v212, %v204
    %v261 = vpack.c.b16 %v213, %v205
    %v262 = vpack.c.b16 %v214, %v206
    %v263 = vpack.c.b16 %v223, %v215
    %v264 = vpack.c.b16 %v224, %v216
    %v265 = vpack.c.b16 %v225, %v217
    %v266 = vpack.c.b16 %v226, %v218
    %v267 = vpack.c.b16 %v227, %v219
    %v268 = vpack.c.b16 %v228, %v220
    %v269 = vpack.c.b16 %v229, %v221
    %v270 = vpack.c.b16 %v230, %v222
    %v271 = vpack.c.b16 %v239, %v231
    %v272 = vpack.c.b16 %v240, %v232
    %v273 = vpack.c.b16 %v241, %v233
    %v274 = vpack.c.b16 %v242, %v234
    %v275 = vpack.c.b16 %v243, %v235
    %v276 = vpack.c.b16 %v244, %v236
    %v277 = vpack.c.b16 %v245, %v237
    %v278 = vpack.c.b16 %v246, %v238
    %vm311 = vcmask 523264
    %v313 = vsel %vm311, %v109, 0
    %315 = vmatprep.subr.bf16.mxu0 %v248
    %316 = vmatpush1.bf16.msra.mxu0 %v247
    %317 = vmatprep.subr.bf16.mxu0 %v256
    %318 = vmatpush1.bf16.msra.mxu0 %v255
    %319 = vmatprep.subr.bf16.mxu0 %v264
    %320 = vmatpush1.bf16.msra.mxu0 %v263
    %321 = vmatprep.subr.bf16.mxu0 %v272
    %322 = vmatpush1.bf16.msra.mxu0 %v271
    %323 = vmatprep.subr.bf16.mxu0 0
    %324 = vmatpush1.bf16.msra.mxu0 0
    %325 = vmatprep.subr.bf16.mxu0 0
    %326 = vmatpush1.bf16.msra.mxu0 0
    %327 = vmatprep.subr.bf16.mxu0 0
    %328 = vmatpush1.bf16.msra.mxu0 0
    %329 = vmatprep.subr.bf16.mxu0 0
    %330 = vmatpush1.bf16.msra.mxu0 0
    %331 = vmatprep.subr.bf16.mxu0 0
    %332 = vmatpush1.bf16.msra.mxu0 0
    %333 = vmatprep.subr.bf16.mxu0 0
    %334 = vmatpush1.bf16.msra.mxu0 0
    %335 = vmatprep.subr.bf16.mxu0 0
    %336 = vmatpush1.bf16.msra.mxu0 0
    %337 = vmatprep.subr.bf16.mxu0 0
    %338 = vmatpush1.bf16.msra.mxu0 0
    %339 = vmatprep.subr.bf16.mxu0 0
    %340 = vmatpush1.bf16.msra.mxu0 0
    %341 = vmatprep.subr.bf16.mxu0 0
    %342 = vmatpush1.bf16.msra.mxu0 0
    %343 = vmatprep.subr.bf16.mxu0 0
    %344 = vmatpush1.bf16.msra.mxu0 0
    %345 = vmatprep.subr.bf16.mxu0 0
    %346 = vmatpush1.bf16.msra.mxu0 0
    %347 = vmatprep.mubr.bf16.mxu0 0
    %348 = vmatmul.mubr.bf16.gmra.mrb[0].mxu0 %v313
    %v349 = vpop.f32.mrb[0].mxu0
    %v350 = vadd.f32 %v114, %v349
    %v351 = vpop.f32.mrb[0].mxu0
    %v352 = vadd.f32 %v118, %v351
    %v353 = vpop.f32.mrb[0].mxu0
    %v354 = vpop.f32.mrb[0].mxu0
    %355 = vdwg.mxu0
    %356 = vmatprep.subr.bf16.mxu0 %v250
    %357 = vmatpush1.bf16.msra.mxu0 %v249
    %358 = vmatprep.subr.bf16.mxu0 %v258
    %359 = vmatpush1.bf16.msra.mxu0 %v257
    %360 = vmatprep.subr.bf16.mxu0 %v266
    %361 = vmatpush1.bf16.msra.mxu0 %v265
    %362 = vmatprep.subr.bf16.mxu0 %v274
    %363 = vmatpush1.bf16.msra.mxu0 %v273
    %364 = vmatprep.subr.bf16.mxu0 0
    %365 = vmatpush1.bf16.msra.mxu0 0
    %366 = vmatprep.subr.bf16.mxu0 0
    %367 = vmatpush1.bf16.msra.mxu0 0
    %368 = vmatprep.subr.bf16.mxu0 0
    %369 = vmatpush1.bf16.msra.mxu0 0
    %370 = vmatprep.subr.bf16.mxu0 0
    %371 = vmatpush1.bf16.msra.mxu0 0
    %372 = vmatprep.subr.bf16.mxu0 0
    %373 = vmatpush1.bf16.msra.mxu0 0
    %374 = vmatprep.subr.bf16.mxu0 0
    %375 = vmatpush1.bf16.msra.mxu0 0
    %376 = vmatprep.subr.bf16.mxu0 0
    %377 = vmatpush1.bf16.msra.mxu0 0
    %378 = vmatprep.subr.bf16.mxu0 0
    %379 = vmatpush1.bf16.msra.mxu0 0
    %380 = vmatprep.subr.bf16.mxu0 0
    %381 = vmatpush1.bf16.msra.mxu0 0
    %382 = vmatprep.subr.bf16.mxu0 0
    %383 = vmatpush1.bf16.msra.mxu0 0
    %384 = vmatprep.subr.bf16.mxu0 0
    %385 = vmatpush1.bf16.msra.mxu0 0
    %386 = vmatprep.subr.bf16.mxu0 0
    %387 = vmatpush1.bf16.msra.mxu0 0
    %388 = vmatprep.mubr.bf16.mxu0 0
    %389 = vmatmul.mubr.bf16.gmra.mrb[0].mxu0 %v313
    %v390 = vpop.f32.mrb[0].mxu0
    %v391 = vadd.f32 %v122, %v390
    %v392 = vpop.f32.mrb[0].mxu0
    %v393 = vadd.f32 %v126, %v392
    %v394 = vpop.f32.mrb[0].mxu0
    %v395 = vpop.f32.mrb[0].mxu0
    %396 = vdwg.mxu0
    %397 = vmatprep.subr.bf16.mxu0 %v252
    %398 = vmatpush1.bf16.msra.mxu0 %v251
    %399 = vmatprep.subr.bf16.mxu0 %v260
    %400 = vmatpush1.bf16.msra.mxu0 %v259
    %401 = vmatprep.subr.bf16.mxu0 %v268
    %402 = vmatpush1.bf16.msra.mxu0 %v267
    %403 = vmatprep.subr.bf16.mxu0 %v276
    %404 = vmatpush1.bf16.msra.mxu0 %v275
    %405 = vmatprep.subr.bf16.mxu0 0
    %406 = vmatpush1.bf16.msra.mxu0 0
    %407 = vmatprep.subr.bf16.mxu0 0
    %408 = vmatpush1.bf16.msra.mxu0 0
    %409 = vmatprep.subr.bf16.mxu0 0
    %410 = vmatpush1.bf16.msra.mxu0 0
    %411 = vmatprep.subr.bf16.mxu0 0
    %412 = vmatpush1.bf16.msra.mxu0 0
    %413 = vmatprep.subr.bf16.mxu0 0
    %414 = vmatpush1.bf16.msra.mxu0 0
    %415 = vmatprep.subr.bf16.mxu0 0
    %416 = vmatpush1.bf16.msra.mxu0 0
    %417 = vmatprep.subr.bf16.mxu0 0
    %418 = vmatpush1.bf16.msra.mxu0 0
    %419 = vmatprep.subr.bf16.mxu0 0
    %420 = vmatpush1.bf16.msra.mxu0 0
    %421 = vmatprep.subr.bf16.mxu0 0
    %422 = vmatpush1.bf16.msra.mxu0 0
    %423 = vmatprep.subr.bf16.mxu0 0
    %424 = vmatpush1.bf16.msra.mxu0 0
    %425 = vmatprep.subr.bf16.mxu0 0
    %426 = vmatpush1.bf16.msra.mxu0 0
    %427 = vmatprep.subr.bf16.mxu0 0
    %428 = vmatpush1.bf16.msra.mxu0 0
    %429 = vmatprep.mubr.bf16.mxu0 0
    %430 = vmatmul.mubr.bf16.gmra.mrb[0].mxu0 %v313
    %v431 = vpop.f32.mrb[0].mxu0
    %v432 = vadd.f32 %v130, %v431
    %v433 = vpop.f32.mrb[0].mxu0
    %v434 = vadd.f32 %v134, %v433
    %v435 = vpop.f32.mrb[0].mxu0
    %v436 = vpop.f32.mrb[0].mxu0
    %437 = vdwg.mxu0
    %438 = vmatprep.subr.bf16.mxu0 %v254
    %439 = vmatpush1.bf16.msra.mxu0 %v253
    %440 = vmatprep.subr.bf16.mxu0 %v262
    %441 = vmatpush1.bf16.msra.mxu0 %v261
    %442 = vmatprep.subr.bf16.mxu0 %v270
    %443 = vmatpush1.bf16.msra.mxu0 %v269
    %444 = vmatprep.subr.bf16.mxu0 %v278
    %445 = vmatpush1.bf16.msra.mxu0 %v277
    %446 = vmatprep.subr.bf16.mxu0 0
    %447 = vmatpush1.bf16.msra.mxu0 0
    %448 = vmatprep.subr.bf16.mxu0 0
    %449 = vmatpush1.bf16.msra.mxu0 0
    %450 = vmatprep.subr.bf16.mxu0 0
    %451 = vmatpush1.bf16.msra.mxu0 0
    %452 = vmatprep.subr.bf16.mxu0 0
    %453 = vmatpush1.bf16.msra.mxu0 0
    %454 = vmatprep.subr.bf16.mxu0 0
    %455 = vmatpush1.bf16.msra.mxu0 0
    %456 = vmatprep.subr.bf16.mxu0 0
    %457 = vmatpush1.bf16.msra.mxu0 0
    %458 = vmatprep.subr.bf16.mxu0 0
    %459 = vmatpush1.bf16.msra.mxu0 0
    %460 = vmatprep.subr.bf16.mxu0 0
    %461 = vmatpush1.bf16.msra.mxu0 0
    %462 = vmatprep.subr.bf16.mxu0 0
    %463 = vmatpush1.bf16.msra.mxu0 0
    %464 = vmatprep.subr.bf16.mxu0 0
    %465 = vmatpush1.bf16.msra.mxu0 0
    %466 = vmatprep.subr.bf16.mxu0 0
    %467 = vmatpush1.bf16.msra.mxu0 0
    %468 = vmatprep.subr.bf16.mxu0 0
    %469 = vmatpush1.bf16.msra.mxu0 0
    %470 = vmatprep.mubr.bf16.mxu0 0
    %471 = vmatmul.mubr.bf16.gmra.mrb[0].mxu0 %v313
    %v472 = vpop.f32.mrb[0].mxu0
    %v473 = vadd.f32 %v138, %v472
    %v474 = vpop.f32.mrb[0].mxu0
    %v475 = vadd.f32 %v142, %v474
    %v476 = vpop.f32.mrb[0].mxu0
    %v477 = vpop.f32.mrb[0].mxu0
    %478 = vdwg.mxu0
    %v479 = vxor.u32 %v350, 2147483648
    %v480 = vxor.u32 %v352, 2147483648
    %v481 = vxor.u32 %v391, 2147483648
    %v482 = vxor.u32 %v393, 2147483648
    %v483 = vxor.u32 %v432, 2147483648
    %v484 = vxor.u32 %v434, 2147483648
    %v485 = vxor.u32 %v473, 2147483648
    %v486 = vxor.u32 %v475, 2147483648
    %v487 = vmul.f32 %v479, 1.442695
    %v488 = vpow.pop %v487
    %v489 = vmul.f32 %v480, 1.442695
    %v490 = vpow.pop %v489
    %v491 = vmul.f32 %v481, 1.442695
    %v492 = vpow.pop %v491
    %v493 = vmul.f32 %v482, 1.442695
    %v494 = vpow.pop %v493
    %v495 = vmul.f32 %v483, 1.442695
    %v496 = vpow.pop %v495
    %v497 = vmul.f32 %v484, 1.442695
    %v498 = vpow.pop %v497
    %v499 = vmul.f32 %v485, 1.442695
    %v500 = vpow.pop %v499
    %v501 = vmul.f32 %v486, 1.442695
    %v502 = vpow.pop %v501
    %v503 = vadd.f32 %v488, 1.0
    %v504 = vadd.f32 %v490, 1.0
    %v505 = vadd.f32 %v492, 1.0
    %v506 = vadd.f32 %v494, 1.0
    %v507 = vadd.f32 %v496, 1.0
    %v508 = vadd.f32 %v498, 1.0
    %v509 = vadd.f32 %v500, 1.0
    %v510 = vadd.f32 %v502, 1.0
    %v511 = vrcp.pop %v503
    %v512 = vmul.f32 1.0, %v511
    %v513 = vrcp.pop %v504
    %v514 = vmul.f32 1.0, %v513
    %v515 = vrcp.pop %v505
    %v516 = vmul.f32 1.0, %v515
    %v517 = vrcp.pop %v506
    %v518 = vmul.f32 1.0, %v517
    %v519 = vrcp.pop %v507
    %v520 = vmul.f32 1.0, %v519
    %v521 = vrcp.pop %v508
    %v522 = vmul.f32 1.0, %v521
    %v523 = vrcp.pop %v509
    %v524 = vmul.f32 1.0, %v523
    %v525 = vrcp.pop %v510
    %v526 = vmul.f32 1.0, %v525
    %v527 = vmul.f32 %v350, %v512
    %v528 = vmul.f32 %v352, %v514
    %v529 = vmul.f32 %v391, %v516
    %v530 = vmul.f32 %v393, %v518
    %v531 = vmul.f32 %v432, %v520
    %v532 = vmul.f32 %v434, %v522
    %v533 = vmul.f32 %v473, %v524
    %v534 = vmul.f32 %v475, %v526
    %v535 = vld [vmem:[#allocation2] sm:$0xff]
    %v536 = vld [vmem:[#allocation2 + $0x8] sm:$0xff]
    %v537 = vld [vmem:[#allocation2 + $0x10] sm:$0xff]
    %v538 = vld [vmem:[#allocation2 + $0x18] sm:$0xff]
    %v539 = vld [vmem:[#allocation2 + $0x20] sm:$0xff]
    %v540 = vld [vmem:[#allocation2 + $0x28] sm:$0xff]
    %v541 = vld [vmem:[#allocation2 + $0x30] sm:$0xff]
    %v542 = vld [vmem:[#allocation2 + $0x38] sm:$0xff]
    %v543 = vld [vmem:[#allocation2 + $0x40] sm:$0xff]
    %v544 = vld [vmem:[#allocation2 + $0x48] sm:$0xff]
    %v545 = vld [vmem:[#allocation2 + $0x50] sm:$0xff]
    %v546 = vld [vmem:[#allocation2 + $0x58] sm:$0xff]
    %v547 = vld [vmem:[#allocation2 + $0x60] sm:$0xff]
    %v548 = vld [vmem:[#allocation2 + $0x68] sm:$0xff]
    %v549 = vld [vmem:[#allocation2 + $0x70] sm:$0xff]
    %v550 = vld [vmem:[#allocation2 + $0x78] sm:$0xff]
    %v551 = vld [vmem:[#allocation2 + $0x80] sm:$0xff]
    %v552 = vld [vmem:[#allocation2 + $0x88] sm:$0xff]
    %v553 = vld [vmem:[#allocation2 + $0x90] sm:$0xff]
    %v554 = vld [vmem:[#allocation2 + $0x98] sm:$0xff]
    %v555 = vld [vmem:[#allocation2 + $0xa0] sm:$0xff]
    %v556 = vld [vmem:[#allocation2 + $0xa8] sm:$0xff]
    %v557 = vld [vmem:[#allocation2 + $0xb0] sm:$0xff]
    %v558 = vld [vmem:[#allocation2 + $0xb8] sm:$0xff]
    %v559 = vld [vmem:[#allocation2 + $0xc0] sm:$0xff]
    %v560 = vld [vmem:[#allocation2 + $0xc8] sm:$0xff]
    %v561 = vld [vmem:[#allocation2 + $0xd0] sm:$0xff]
    %v562 = vld [vmem:[#allocation2 + $0xd8] sm:$0xff]
    %v563 = vld [vmem:[#allocation2 + $0xe0] sm:$0xff]
    %v564 = vld [vmem:[#allocation2 + $0xe8] sm:$0xff]
    %v565 = vld [vmem:[#allocation2 + $0xf0] sm:$0xff]
    %v566 = vld [vmem:[#allocation2 + $0xf8] sm:$0xff]
    %v567 = vld [vmem:[#allocation2 + $0x100] sm:$0xff]
    %v568 = vld [vmem:[#allocation2 + $0x108] sm:$0xff]
    %v569 = vld [vmem:[#allocation2 + $0x110] sm:$0xff]
    %v570 = vld [vmem:[#allocation2 + $0x118] sm:$0xff]
    %v571 = vld [vmem:[#allocation2 + $0x120] sm:$0xff]
    %v572 = vld [vmem:[#allocation2 + $0x128] sm:$0xff]
    %v573 = vld [vmem:[#allocation2 + $0x130] sm:$0xff]
    %v574 = vld [vmem:[#allocation2 + $0x138] sm:$0xff]
    %v575 = vld [vmem:[#allocation2 + $0x140] sm:$0xff]
    %v576 = vld [vmem:[#allocation2 + $0x148] sm:$0xff]
    %v577 = vld [vmem:[#allocation2 + $0x150] sm:$0xff]
    %v578 = vld [vmem:[#allocation2 + $0x158] sm:$0xff]
    %v579 = vld [vmem:[#allocation2 + $0x160] sm:$0xff]
    %v580 = vld [vmem:[#allocation2 + $0x168] sm:$0xff]
    %v581 = vld [vmem:[#allocation2 + $0x170] sm:$0xff]
    %v582 = vld [vmem:[#allocation2 + $0x178] sm:$0xff]
    %v583 = vld [vmem:[#allocation2 + $0x180] sm:$0xff]
    %v584 = vld [vmem:[#allocation2 + $0x188] sm:$0xff]
    %v585 = vld [vmem:[#allocation2 + $0x190] sm:$0xff]
    %v586 = vld [vmem:[#allocation2 + $0x198] sm:$0xff]
    %v587 = vld [vmem:[#allocation2 + $0x1a0] sm:$0xff]
    %v588 = vld [vmem:[#allocation2 + $0x1a8] sm:$0xff]
    %v589 = vld [vmem:[#allocation2 + $0x1b0] sm:$0xff]
    %v590 = vld [vmem:[#allocation2 + $0x1b8] sm:$0xff]
    %v591 = vld [vmem:[#allocation2 + $0x1c0] sm:$0xff]
    %v592 = vld [vmem:[#allocation2 + $0x1c8] sm:$0xff]
    %v593 = vld [vmem:[#allocation2 + $0x1d0] sm:$0xff]
    %v594 = vld [vmem:[#allocation2 + $0x1d8] sm:$0xff]
    %v595 = vld [vmem:[#allocation2 + $0x1e0] sm:$0xff]
    %v596 = vld [vmem:[#allocation2 + $0x1e8] sm:$0xff]
    %v597 = vld [vmem:[#allocation2 + $0x1f0] sm:$0xff]
    %v598 = vld [vmem:[#allocation2 + $0x1f8] sm:$0xff]
    %v599 = vld [vmem:[#allocation2 + $0x200] sm:$0xff]
    %v600 = vld [vmem:[#allocation2 + $0x208] sm:$0xff]
    %v601 = vld [vmem:[#allocation2 + $0x210] sm:$0xff]
    %v602 = vld [vmem:[#allocation2 + $0x218] sm:$0xff]
    %v603 = vld [vmem:[#allocation2 + $0x220] sm:$0xff]
    %v604 = vld [vmem:[#allocation2 + $0x228] sm:$0xff]
    %v605 = vld [vmem:[#allocation2 + $0x230] sm:$0xff]
    %v606 = vld [vmem:[#allocation2 + $0x238] sm:$0xff]
    %v607 = vld [vmem:[#allocation2 + $0x240] sm:$0xff]
    %v608 = vld [vmem:[#allocation2 + $0x248] sm:$0xff]
    %v609 = vld [vmem:[#allocation2 + $0x250] sm:$0xff]
    %v610 = vld [vmem:[#allocation2 + $0x258] sm:$0xff]
    %v611 = vld [vmem:[#allocation2 + $0x260] sm:$0xff]
    %v612 = vld [vmem:[#allocation2 + $0x268] sm:$0xff]
    %v613 = vld [vmem:[#allocation2 + $0x270] sm:$0xff]
    %v614 = vld [vmem:[#allocation2 + $0x278] sm:$0xff]
    %v615 = vld [vmem:[#allocation2 + $0x280] sm:$0xff]
    %v616 = vld [vmem:[#allocation2 + $0x288] sm:$0xff]
    %v617 = vld [vmem:[#allocation2 + $0x290] sm:$0xff]
    %v618 = vld [vmem:[#allocation2 + $0x298] sm:$0xff]
    %v619 = vld [vmem:[#allocation2 + $0x2a0] sm:$0xff]
    %v620 = vld [vmem:[#allocation2 + $0x2a8] sm:$0xff]
    %v621 = vld [vmem:[#allocation2 + $0x2b0] sm:$0xff]
    %v622 = vld [vmem:[#allocation2 + $0x2b8] sm:$0xff]
    %v623 = vld [vmem:[#allocation2 + $0x2c0] sm:$0xff]
    %v624 = vld [vmem:[#allocation2 + $0x2c8] sm:$0xff]
    %v625 = vld [vmem:[#allocation2 + $0x2d0] sm:$0xff]
    %v626 = vld [vmem:[#allocation2 + $0x2d8] sm:$0xff]
    %v627 = vld [vmem:[#allocation2 + $0x2e0] sm:$0xff]
    %v628 = vld [vmem:[#allocation2 + $0x2e8] sm:$0xff]
    %v629 = vld [vmem:[#allocation2 + $0x2f0] sm:$0xff]
    %v630 = vld [vmem:[#allocation2 + $0x2f8] sm:$0xff]
    %v631 = vld [vmem:[#allocation2 + $0x300] sm:$0xff]
    %v632 = vld [vmem:[#allocation2 + $0x308] sm:$0xff]
    %v633 = vld [vmem:[#allocation2 + $0x310] sm:$0xff]
    %v634 = vld [vmem:[#allocation2 + $0x318] sm:$0xff]
    %v635 = vld [vmem:[#allocation2 + $0x320] sm:$0xff]
    %v636 = vld [vmem:[#allocation2 + $0x328] sm:$0xff]
    %v637 = vld [vmem:[#allocation2 + $0x330] sm:$0xff]
    %v638 = vld [vmem:[#allocation2 + $0x338] sm:$0xff]
    %v639 = vld [vmem:[#allocation2 + $0x340] sm:$0xff]
    %v640 = vld [vmem:[#allocation2 + $0x348] sm:$0xff]
    %v641 = vld [vmem:[#allocation2 + $0x350] sm:$0xff]
    %v642 = vld [vmem:[#allocation2 + $0x358] sm:$0xff]
    %v643 = vld [vmem:[#allocation2 + $0x360] sm:$0xff]
    %v644 = vld [vmem:[#allocation2 + $0x368] sm:$0xff]
    %v645 = vld [vmem:[#allocation2 + $0x370] sm:$0xff]
    %v646 = vld [vmem:[#allocation2 + $0x378] sm:$0xff]
    %v647 = vld [vmem:[#allocation2 + $0x380] sm:$0xff]
    %v648 = vld [vmem:[#allocation2 + $0x388] sm:$0xff]
    %v649 = vld [vmem:[#allocation2 + $0x390] sm:$0xff]
    %v650 = vld [vmem:[#allocation2 + $0x398] sm:$0xff]
    %v651 = vld [vmem:[#allocation2 + $0x3a0] sm:$0xff]
    %v652 = vld [vmem:[#allocation2 + $0x3a8] sm:$0xff]
    %v653 = vld [vmem:[#allocation2 + $0x3b0] sm:$0xff]
    %v654 = vld [vmem:[#allocation2 + $0x3b8] sm:$0xff]
    %v655 = vld [vmem:[#allocation2 + $0x3c0] sm:$0xff]
    %v656 = vld [vmem:[#allocation2 + $0x3c8] sm:$0xff]
    %v657 = vld [vmem:[#allocation2 + $0x3d0] sm:$0xff]
    %v658 = vld [vmem:[#allocation2 + $0x3d8] sm:$0xff]
    %v659 = vld [vmem:[#allocation2 + $0x3e0] sm:$0xff]
    %v660 = vld [vmem:[#allocation2 + $0x3e8] sm:$0xff]
    %v661 = vld [vmem:[#allocation2 + $0x3f0] sm:$0xff]
    %v662 = vld [vmem:[#allocation2 + $0x3f8] sm:$0xff]
    %v663 = vld [vmem:[#allocation2 + $0x400] sm:$0xff]
    %v664 = vld [vmem:[#allocation2 + $0x408] sm:$0xff]
    %v665 = vld [vmem:[#allocation2 + $0x410] sm:$0xff]
    %v666 = vld [vmem:[#allocation2 + $0x418] sm:$0xff]
    %v667 = vld [vmem:[#allocation2 + $0x420] sm:$0xff]
    %v668 = vld [vmem:[#allocation2 + $0x428] sm:$0xff]
    %v669 = vld [vmem:[#allocation2 + $0x430] sm:$0xff]
    %v670 = vld [vmem:[#allocation2 + $0x438] sm:$0xff]
    %v671 = vld [vmem:[#allocation2 + $0x440] sm:$0xff]
    %v672 = vld [vmem:[#allocation2 + $0x448] sm:$0xff]
    %v673 = vld [vmem:[#allocation2 + $0x450] sm:$0xff]
    %v674 = vld [vmem:[#allocation2 + $0x458] sm:$0xff]
    %v675 = vld [vmem:[#allocation2 + $0x460] sm:$0xff]
    %v676 = vld [vmem:[#allocation2 + $0x468] sm:$0xff]
    %v677 = vld [vmem:[#allocation2 + $0x470] sm:$0xff]
    %v678 = vld [vmem:[#allocation2 + $0x478] sm:$0xff]
    %v679 = vld [vmem:[#allocation2 + $0x480] sm:$0xff]
    %v680 = vld [vmem:[#allocation2 + $0x488] sm:$0xff]
    %v681 = vld [vmem:[#allocation2 + $0x490] sm:$0xff]
    %v682 = vld [vmem:[#allocation2 + $0x498] sm:$0xff]
    %v683 = vld [vmem:[#allocation2 + $0x4a0] sm:$0xff]
    %v684 = vld [vmem:[#allocation2 + $0x4a8] sm:$0xff]
    %v685 = vld [vmem:[#allocation2 + $0x4b0] sm:$0xff]
    %v686 = vld [vmem:[#allocation2 + $0x4b8] sm:$0xff]
    %v687 = vld [vmem:[#allocation2 + $0x4c0] sm:$0xff]
    %v688 = vld [vmem:[#allocation2 + $0x4c8] sm:$0xff]
    %v689 = vld [vmem:[#allocation2 + $0x4d0] sm:$0xff]
    %v690 = vld [vmem:[#allocation2 + $0x4d8] sm:$0xff]
    %v691 = vld [vmem:[#allocation2 + $0x4e0] sm:$0xff]
    %v692 = vld [vmem:[#allocation2 + $0x4e8] sm:$0xff]
    %v693 = vld [vmem:[#allocation2 + $0x4f0] sm:$0xff]
    %v694 = vld [vmem:[#allocation2 + $0x4f8] sm:$0xff]
    %v695 = vld [vmem:[#allocation2 + $0x500] sm:$0xff]
    %v696 = vld [vmem:[#allocation2 + $0x508] sm:$0xff]
    %v697 = vld [vmem:[#allocation2 + $0x510] sm:$0xff]
    %v698 = vld [vmem:[#allocation2 + $0x518] sm:$0xff]
    %v699 = vld [vmem:[#allocation2 + $0x520] sm:$0xff]
    %v700 = vld [vmem:[#allocation2 + $0x528] sm:$0xff]
    %v701 = vld [vmem:[#allocation2 + $0x530] sm:$0xff]
    %v702 = vld [vmem:[#allocation2 + $0x538] sm:$0xff]
    %v703 = vld [vmem:[#allocation2 + $0x540] sm:$0xff]
    %v704 = vld [vmem:[#allocation2 + $0x548] sm:$0xff]
    %v705 = vld [vmem:[#allocation2 + $0x550] sm:$0xff]
    %v706 = vld [vmem:[#allocation2 + $0x558] sm:$0xff]
    %v707 = vld [vmem:[#allocation2 + $0x560] sm:$0xff]
    %v708 = vld [vmem:[#allocation2 + $0x568] sm:$0xff]
    %v709 = vld [vmem:[#allocation2 + $0x570] sm:$0xff]
    %v710 = vld [vmem:[#allocation2 + $0x578] sm:$0xff]
    %v711 = vld [vmem:[#allocation2 + $0x580] sm:$0xff]
    %v712 = vld [vmem:[#allocation2 + $0x588] sm:$0xff]
    %v713 = vld [vmem:[#allocation2 + $0x590] sm:$0xff]
    %v714 = vld [vmem:[#allocation2 + $0x598] sm:$0xff]
    %v715 = vld [vmem:[#allocation2 + $0x5a0] sm:$0xff]
    %v716 = vld [vmem:[#allocation2 + $0x5a8] sm:$0xff]
    %v717 = vld [vmem:[#allocation2 + $0x5b0] sm:$0xff]
    %v718 = vld [vmem:[#allocation2 + $0x5b8] sm:$0xff]
    %v719 = vld [vmem:[#allocation2 + $0x5c0] sm:$0xff]
    %v720 = vld [vmem:[#allocation2 + $0x5c8] sm:$0xff]
    %v721 = vld [vmem:[#allocation2 + $0x5d0] sm:$0xff]
    %v722 = vld [vmem:[#allocation2 + $0x5d8] sm:$0xff]
    %v723 = vld [vmem:[#allocation2 + $0x5e0] sm:$0xff]
    %v724 = vld [vmem:[#allocation2 + $0x5e8] sm:$0xff]
    %v725 = vld [vmem:[#allocation2 + $0x5f0] sm:$0xff]
    %v726 = vld [vmem:[#allocation2 + $0x5f8] sm:$0xff]
    %v727 = vld [vmem:[#allocation2 + $0x600] sm:$0xff]
    %v728 = vld [vmem:[#allocation2 + $0x608] sm:$0xff]
    %v729 = vld [vmem:[#allocation2 + $0x610] sm:$0xff]
    %v730 = vld [vmem:[#allocation2 + $0x618] sm:$0xff]
    %v731 = vld [vmem:[#allocation2 + $0x620] sm:$0xff]
    %v732 = vld [vmem:[#allocation2 + $0x628] sm:$0xff]
    %v733 = vld [vmem:[#allocation2 + $0x630] sm:$0xff]
    %v734 = vld [vmem:[#allocation2 + $0x638] sm:$0xff]
    %v735 = vld [vmem:[#allocation2 + $0x640] sm:$0xff]
    %v736 = vld [vmem:[#allocation2 + $0x648] sm:$0xff]
    %v737 = vld [vmem:[#allocation2 + $0x650] sm:$0xff]
    %v738 = vld [vmem:[#allocation2 + $0x658] sm:$0xff]
    %v739 = vld [vmem:[#allocation2 + $0x660] sm:$0xff]
    %v740 = vld [vmem:[#allocation2 + $0x668] sm:$0xff]
    %v741 = vld [vmem:[#allocation2 + $0x670] sm:$0xff]
    %v742 = vld [vmem:[#allocation2 + $0x678] sm:$0xff]
    %v743 = vld [vmem:[#allocation2 + $0x680] sm:$0xff]
    %v744 = vld [vmem:[#allocation2 + $0x688] sm:$0xff]
    %v745 = vld [vmem:[#allocation2 + $0x690] sm:$0xff]
    %v746 = vld [vmem:[#allocation2 + $0x698] sm:$0xff]
    %v747 = vld [vmem:[#allocation2 + $0x6a0] sm:$0xff]
    %v748 = vld [vmem:[#allocation2 + $0x6a8] sm:$0xff]
    %v749 = vld [vmem:[#allocation2 + $0x6b0] sm:$0xff]
    %v750 = vld [vmem:[#allocation2 + $0x6b8] sm:$0xff]
    %v751 = vld [vmem:[#allocation2 + $0x6c0] sm:$0xff]
    %v752 = vld [vmem:[#allocation2 + $0x6c8] sm:$0xff]
    %v753 = vld [vmem:[#allocation2 + $0x6d0] sm:$0xff]
    %v754 = vld [vmem:[#allocation2 + $0x6d8] sm:$0xff]
    %v755 = vld [vmem:[#allocation2 + $0x6e0] sm:$0xff]
    %v756 = vld [vmem:[#allocation2 + $0x6e8] sm:$0xff]
    %v757 = vld [vmem:[#allocation2 + $0x6f0] sm:$0xff]
    %v758 = vld [vmem:[#allocation2 + $0x6f8] sm:$0xff]
    %v759 = vld [vmem:[#allocation2 + $0x700] sm:$0xff]
    %v760 = vld [vmem:[#allocation2 + $0x708] sm:$0xff]
    %v761 = vld [vmem:[#allocation2 + $0x710] sm:$0xff]
    %v762 = vld [vmem:[#allocation2 + $0x718] sm:$0xff]
    %v763 = vld [vmem:[#allocation2 + $0x720] sm:$0xff]
    %v764 = vld [vmem:[#allocation2 + $0x728] sm:$0xff]
    %v765 = vld [vmem:[#allocation2 + $0x730] sm:$0xff]
    %v766 = vld [vmem:[#allocation2 + $0x738] sm:$0xff]
    %v767 = vld [vmem:[#allocation2 + $0x740] sm:$0xff]
    %v768 = vld [vmem:[#allocation2 + $0x748] sm:$0xff]
    %v769 = vld [vmem:[#allocation2 + $0x750] sm:$0xff]
    %v770 = vld [vmem:[#allocation2 + $0x758] sm:$0xff]
    %v771 = vld [vmem:[#allocation2 + $0x760] sm:$0xff]
    %v772 = vld [vmem:[#allocation2 + $0x768] sm:$0xff]
    %v773 = vld [vmem:[#allocation2 + $0x770] sm:$0xff]
    %v774 = vld [vmem:[#allocation2 + $0x778] sm:$0xff]
    %v775 = vld [vmem:[#allocation2 + $0x780] sm:$0xff]
    %v776 = vld [vmem:[#allocation2 + $0x788] sm:$0xff]
    %v777 = vld [vmem:[#allocation2 + $0x790] sm:$0xff]
    %v778 = vld [vmem:[#allocation2 + $0x798] sm:$0xff]
    %v779 = vld [vmem:[#allocation2 + $0x7a0] sm:$0xff]
    %v780 = vld [vmem:[#allocation2 + $0x7a8] sm:$0xff]
    %v781 = vld [vmem:[#allocation2 + $0x7b0] sm:$0xff]
    %v782 = vld [vmem:[#allocation2 + $0x7b8] sm:$0xff]
    %v783 = vld [vmem:[#allocation2 + $0x7c0] sm:$0xff]
    %v784 = vld [vmem:[#allocation2 + $0x7c8] sm:$0xff]
    %v785 = vld [vmem:[#allocation2 + $0x7d0] sm:$0xff]
    %v786 = vld [vmem:[#allocation2 + $0x7d8] sm:$0xff]
    %v787 = vld [vmem:[#allocation2 + $0x7e0] sm:$0xff]
    %v788 = vld [vmem:[#allocation2 + $0x7e8] sm:$0xff]
    %v789 = vld [vmem:[#allocation2 + $0x7f0] sm:$0xff]
    %v790 = vld [vmem:[#allocation2 + $0x7f8] sm:$0xff]
    %v791 = vld [vmem:[%s4] sm:$0xf]
    %v792 = vpack.c.bf16 %v527, %v527
    %v793 = vpack.c.bf16 %v528, %v528
    %v794 = vpack.c.bf16 %v529, %v529
    %v795 = vpack.c.bf16 %v530, %v530
    %v796 = vpack.c.bf16 %v531, %v531
    %v797 = vpack.c.bf16 %v532, %v532
    %v798 = vpack.c.bf16 %v533, %v533
    %v799 = vpack.c.bf16 %v534, %v534
    %v801 = vlaneseq
    %v802 = vshrl.u32 %v801, 7
    %v803 = vsub.s32 0, %v802
    %v804 = vrot.slane %v791, %v803
    %v805 = vlaneseq
    %v806 = vshrl.u32 %v805, 7
    %v807 = vsub.s32 1, %v806
    %v808 = vrot.slane %v791, %v807
    %v809 = vlaneseq
    %v810 = vshrl.u32 %v809, 7
    %v811 = vsub.s32 2, %v810
    %v812 = vrot.slane %v791, %v811
    %v813 = vlaneseq
    %v814 = vshrl.u32 %v813, 7
    %v815 = vsub.s32 3, %v814
    %v816 = vrot.slane %v791, %v815
    %v1077 = vunpack.c.l.b16 %v535
    %v1078 = vunpack.c.h.b16 %v535
    %v1079 = vunpack.c.l.b16 %v536
    %v1080 = vunpack.c.h.b16 %v536
    %v1081 = vunpack.c.l.b16 %v537
    %v1082 = vunpack.c.h.b16 %v537
    %v1083 = vunpack.c.l.b16 %v538
    %v1084 = vunpack.c.h.b16 %v538
    %v1085 = vunpack.c.l.b16 %v539
    %v1086 = vunpack.c.h.b16 %v539
    %v1087 = vunpack.c.l.b16 %v540
    %v1088 = vunpack.c.h.b16 %v540
    %v1089 = vunpack.c.l.b16 %v541
    %v1090 = vunpack.c.h.b16 %v541
    %v1091 = vunpack.c.l.b16 %v542
    %v1092 = vunpack.c.h.b16 %v542
    %v1093 = vunpack.c.l.b16 %v543
    %v1094 = vunpack.c.h.b16 %v543
    %v1095 = vunpack.c.l.b16 %v544
    %v1096 = vunpack.c.h.b16 %v544
    %v1097 = vunpack.c.l.b16 %v545
    %v1098 = vunpack.c.h.b16 %v545
    %v1099 = vunpack.c.l.b16 %v546
    %v1100 = vunpack.c.h.b16 %v546
    %v1101 = vunpack.c.l.b16 %v547
    %v1102 = vunpack.c.h.b16 %v547
    %v1103 = vunpack.c.l.b16 %v548
    %v1104 = vunpack.c.h.b16 %v548
    %v1105 = vunpack.c.l.b16 %v549
    %v1106 = vunpack.c.h.b16 %v549
    %v1107 = vunpack.c.l.b16 %v550
    %v1108 = vunpack.c.h.b16 %v550
    %v1109 = vunpack.c.l.b16 %v551
    %v1110 = vunpack.c.h.b16 %v551
    %v1111 = vunpack.c.l.b16 %v552
    %v1112 = vunpack.c.h.b16 %v552
    %v1113 = vunpack.c.l.b16 %v553
    %v1114 = vunpack.c.h.b16 %v553
    %v1115 = vunpack.c.l.b16 %v554
    %v1116 = vunpack.c.h.b16 %v554
    %v1117 = vunpack.c.l.b16 %v555
    %v1118 = vunpack.c.h.b16 %v555
    %v1119 = vunpack.c.l.b16 %v556
    %v1120 = vunpack.c.h.b16 %v556
    %v1121 = vunpack.c.l.b16 %v557
    %v1122 = vunpack.c.h.b16 %v557
    %v1123 = vunpack.c.l.b16 %v558
    %v1124 = vunpack.c.h.b16 %v558
    %v1125 = vunpack.c.l.b16 %v559
    %v1126 = vunpack.c.h.b16 %v559
    %v1127 = vunpack.c.l.b16 %v560
    %v1128 = vunpack.c.h.b16 %v560
    %v1129 = vunpack.c.l.b16 %v561
    %v1130 = vunpack.c.h.b16 %v561
    %v1131 = vunpack.c.l.b16 %v562
    %v1132 = vunpack.c.h.b16 %v562
    %v1133 = vunpack.c.l.b16 %v563
    %v1134 = vunpack.c.h.b16 %v563
    %v1135 = vunpack.c.l.b16 %v564
    %v1136 = vunpack.c.h.b16 %v564
    %v1137 = vunpack.c.l.b16 %v565
    %v1138 = vunpack.c.h.b16 %v565
    %v1139 = vunpack.c.l.b16 %v566
    %v1140 = vunpack.c.h.b16 %v566
    %v1141 = vunpack.c.l.b16 %v567
    %v1142 = vunpack.c.h.b16 %v567
    %v1143 = vunpack.c.l.b16 %v568
    %v1144 = vunpack.c.h.b16 %v568
    %v1145 = vunpack.c.l.b16 %v569
    %v1146 = vunpack.c.h.b16 %v569
    %v1147 = vunpack.c.l.b16 %v570
    %v1148 = vunpack.c.h.b16 %v570
    %v1149 = vunpack.c.l.b16 %v571
    %v1150 = vunpack.c.h.b16 %v571
    %v1151 = vunpack.c.l.b16 %v572
    %v1152 = vunpack.c.h.b16 %v572
    %v1153 = vunpack.c.l.b16 %v573
    %v1154 = vunpack.c.h.b16 %v573
    %v1155 = vunpack.c.l.b16 %v574
    %v1156 = vunpack.c.h.b16 %v574
    %v1157 = vunpack.c.l.b16 %v575
    %v1158 = vunpack.c.h.b16 %v575
    %v1159 = vunpack.c.l.b16 %v576
    %v1160 = vunpack.c.h.b16 %v576
    %v1161 = vunpack.c.l.b16 %v577
    %v1162 = vunpack.c.h.b16 %v577
    %v1163 = vunpack.c.l.b16 %v578
    %v1164 = vunpack.c.h.b16 %v578
    %v1165 = vunpack.c.l.b16 %v579
    %v1166 = vunpack.c.h.b16 %v579
    %v1167 = vunpack.c.l.b16 %v580
    %v1168 = vunpack.c.h.b16 %v580
    %v1169 = vunpack.c.l.b16 %v581
    %v1170 = vunpack.c.h.b16 %v581
    %v1171 = vunpack.c.l.b16 %v582
    %v1172 = vunpack.c.h.b16 %v582
    %v1173 = vunpack.c.l.b16 %v583
    %v1174 = vunpack.c.h.b16 %v583
    %v1175 = vunpack.c.l.b16 %v584
    %v1176 = vunpack.c.h.b16 %v584
    %v1177 = vunpack.c.l.b16 %v585
    %v1178 = vunpack.c.h.b16 %v585
    %v1179 = vunpack.c.l.b16 %v586
    %v1180 = vunpack.c.h.b16 %v586
    %v1181 = vunpack.c.l.b16 %v587
    %v1182 = vunpack.c.h.b16 %v587
    %v1183 = vunpack.c.l.b16 %v588
    %v1184 = vunpack.c.h.b16 %v588
    %v1185 = vunpack.c.l.b16 %v589
    %v1186 = vunpack.c.h.b16 %v589
    %v1187 = vunpack.c.l.b16 %v590
    %v1188 = vunpack.c.h.b16 %v590
    %v1189 = vunpack.c.l.b16 %v591
    %v1190 = vunpack.c.h.b16 %v591
    %v1191 = vunpack.c.l.b16 %v592
    %v1192 = vunpack.c.h.b16 %v592
    %v1193 = vunpack.c.l.b16 %v593
    %v1194 = vunpack.c.h.b16 %v593
    %v1195 = vunpack.c.l.b16 %v594
    %v1196 = vunpack.c.h.b16 %v594
    %v1197 = vunpack.c.l.b16 %v595
    %v1198 = vunpack.c.h.b16 %v595
    %v1199 = vunpack.c.l.b16 %v596
    %v1200 = vunpack.c.h.b16 %v596
    %v1201 = vunpack.c.l.b16 %v597
    %v1202 = vunpack.c.h.b16 %v597
    %v1203 = vunpack.c.l.b16 %v598
    %v1204 = vunpack.c.h.b16 %v598
    %v1205 = vunpack.c.l.b16 %v599
    %v1206 = vunpack.c.h.b16 %v599
    %v1207 = vunpack.c.l.b16 %v600
    %v1208 = vunpack.c.h.b16 %v600
    %v1209 = vunpack.c.l.b16 %v601
    %v1210 = vunpack.c.h.b16 %v601
    %v1211 = vunpack.c.l.b16 %v602
    %v1212 = vunpack.c.h.b16 %v602
    %v1213 = vunpack.c.l.b16 %v603
    %v1214 = vunpack.c.h.b16 %v603
    %v1215 = vunpack.c.l.b16 %v604
    %v1216 = vunpack.c.h.b16 %v604
    %v1217 = vunpack.c.l.b16 %v605
    %v1218 = vunpack.c.h.b16 %v605
    %v1219 = vunpack.c.l.b16 %v606
    %v1220 = vunpack.c.h.b16 %v606
    %v1221 = vunpack.c.l.b16 %v607
    %v1222 = vunpack.c.h.b16 %v607
    %v1223 = vunpack.c.l.b16 %v608
    %v1224 = vunpack.c.h.b16 %v608
    %v1225 = vunpack.c.l.b16 %v609
    %v1226 = vunpack.c.h.b16 %v609
    %v1227 = vunpack.c.l.b16 %v610
    %v1228 = vunpack.c.h.b16 %v610
    %v1229 = vunpack.c.l.b16 %v611
    %v1230 = vunpack.c.h.b16 %v611
    %v1231 = vunpack.c.l.b16 %v612
    %v1232 = vunpack.c.h.b16 %v612
    %v1233 = vunpack.c.l.b16 %v613
    %v1234 = vunpack.c.h.b16 %v613
    %v1235 = vunpack.c.l.b16 %v614
    %v1236 = vunpack.c.h.b16 %v614
    %v1237 = vunpack.c.l.b16 %v615
    %v1238 = vunpack.c.h.b16 %v615
    %v1239 = vunpack.c.l.b16 %v616
    %v1240 = vunpack.c.h.b16 %v616
    %v1241 = vunpack.c.l.b16 %v617
    %v1242 = vunpack.c.h.b16 %v617
    %v1243 = vunpack.c.l.b16 %v618
    %v1244 = vunpack.c.h.b16 %v618
    %v1245 = vunpack.c.l.b16 %v619
    %v1246 = vunpack.c.h.b16 %v619
    %v1247 = vunpack.c.l.b16 %v620
    %v1248 = vunpack.c.h.b16 %v620
    %v1249 = vunpack.c.l.b16 %v621
    %v1250 = vunpack.c.h.b16 %v621
    %v1251 = vunpack.c.l.b16 %v622
    %v1252 = vunpack.c.h.b16 %v622
    %v1253 = vunpack.c.l.b16 %v623
    %v1254 = vunpack.c.h.b16 %v623
    %v1255 = vunpack.c.l.b16 %v624
    %v1256 = vunpack.c.h.b16 %v624
    %v1257 = vunpack.c.l.b16 %v625
    %v1258 = vunpack.c.h.b16 %v625
    %v1259 = vunpack.c.l.b16 %v626
    %v1260 = vunpack.c.h.b16 %v626
    %v1261 = vunpack.c.l.b16 %v627
    %v1262 = vunpack.c.h.b16 %v627
    %v1263 = vunpack.c.l.b16 %v628
    %v1264 = vunpack.c.h.b16 %v628
    %v1265 = vunpack.c.l.b16 %v629
    %v1266 = vunpack.c.h.b16 %v629
    %v1267 = vunpack.c.l.b16 %v630
    %v1268 = vunpack.c.h.b16 %v630
    %v1269 = vunpack.c.l.b16 %v631
    %v1270 = vunpack.c.h.b16 %v631
    %v1271 = vunpack.c.l.b16 %v632
    %v1272 = vunpack.c.h.b16 %v632
    %v1273 = vunpack.c.l.b16 %v633
    %v1274 = vunpack.c.h.b16 %v633
    %v1275 = vunpack.c.l.b16 %v634
    %v1276 = vunpack.c.h.b16 %v634
    %v1277 = vunpack.c.l.b16 %v635
    %v1278 = vunpack.c.h.b16 %v635
    %v1279 = vunpack.c.l.b16 %v636
    %v1280 = vunpack.c.h.b16 %v636
    %v1281 = vunpack.c.l.b16 %v637
    %v1282 = vunpack.c.h.b16 %v637
    %v1283 = vunpack.c.l.b16 %v638
    %v1284 = vunpack.c.h.b16 %v638
    %v1285 = vunpack.c.l.b16 %v639
    %v1286 = vunpack.c.h.b16 %v639
    %v1287 = vunpack.c.l.b16 %v640
    %v1288 = vunpack.c.h.b16 %v640
    %v1289 = vunpack.c.l.b16 %v641
    %v1290 = vunpack.c.h.b16 %v641
    %v1291 = vunpack.c.l.b16 %v642
    %v1292 = vunpack.c.h.b16 %v642
    %v1293 = vunpack.c.l.b16 %v643
    %v1294 = vunpack.c.h.b16 %v643
    %v1295 = vunpack.c.l.b16 %v644
    %v1296 = vunpack.c.h.b16 %v644
    %v1297 = vunpack.c.l.b16 %v645
    %v1298 = vunpack.c.h.b16 %v645
    %v1299 = vunpack.c.l.b16 %v646
    %v1300 = vunpack.c.h.b16 %v646
    %v1301 = vunpack.c.l.b16 %v647
    %v1302 = vunpack.c.h.b16 %v647
    %v1303 = vunpack.c.l.b16 %v648
    %v1304 = vunpack.c.h.b16 %v648
    %v1305 = vunpack.c.l.b16 %v649
    %v1306 = vunpack.c.h.b16 %v649
    %v1307 = vunpack.c.l.b16 %v650
    %v1308 = vunpack.c.h.b16 %v650
    %v1309 = vunpack.c.l.b16 %v651
    %v1310 = vunpack.c.h.b16 %v651
    %v1311 = vunpack.c.l.b16 %v652
    %v1312 = vunpack.c.h.b16 %v652
    %v1313 = vunpack.c.l.b16 %v653
    %v1314 = vunpack.c.h.b16 %v653
    %v1315 = vunpack.c.l.b16 %v654
    %v1316 = vunpack.c.h.b16 %v654
    %v1317 = vunpack.c.l.b16 %v655
    %v1318 = vunpack.c.h.b16 %v655
    %v1319 = vunpack.c.l.b16 %v656
    %v1320 = vunpack.c.h.b16 %v656
    %v1321 = vunpack.c.l.b16 %v657
    %v1322 = vunpack.c.h.b16 %v657
    %v1323 = vunpack.c.l.b16 %v658
    %v1324 = vunpack.c.h.b16 %v658
    %v1325 = vunpack.c.l.b16 %v659
    %v1326 = vunpack.c.h.b16 %v659
    %v1327 = vunpack.c.l.b16 %v660
    %v1328 = vunpack.c.h.b16 %v660
    %v1329 = vunpack.c.l.b16 %v661
    %v1330 = vunpack.c.h.b16 %v661
    %v1331 = vunpack.c.l.b16 %v662
    %v1332 = vunpack.c.h.b16 %v662
    %v1333 = vunpack.c.l.b16 %v663
    %v1334 = vunpack.c.h.b16 %v663
    %v1335 = vunpack.c.l.b16 %v664
    %v1336 = vunpack.c.h.b16 %v664
    %v1337 = vunpack.c.l.b16 %v665
    %v1338 = vunpack.c.h.b16 %v665
    %v1339 = vunpack.c.l.b16 %v666
    %v1340 = vunpack.c.h.b16 %v666
    %v1341 = vunpack.c.l.b16 %v667
    %v1342 = vunpack.c.h.b16 %v667
    %v1343 = vunpack.c.l.b16 %v668
    %v1344 = vunpack.c.h.b16 %v668
    %v1345 = vunpack.c.l.b16 %v669
    %v1346 = vunpack.c.h.b16 %v669
    %v1347 = vunpack.c.l.b16 %v670
    %v1348 = vunpack.c.h.b16 %v670
    %v1349 = vunpack.c.l.b16 %v671
    %v1350 = vunpack.c.h.b16 %v671
    %v1351 = vunpack.c.l.b16 %v672
    %v1352 = vunpack.c.h.b16 %v672
    %v1353 = vunpack.c.l.b16 %v673
    %v1354 = vunpack.c.h.b16 %v673
    %v1355 = vunpack.c.l.b16 %v674
    %v1356 = vunpack.c.h.b16 %v674
    %v1357 = vunpack.c.l.b16 %v675
    %v1358 = vunpack.c.h.b16 %v675
    %v1359 = vunpack.c.l.b16 %v676
    %v1360 = vunpack.c.h.b16 %v676
    %v1361 = vunpack.c.l.b16 %v677
    %v1362 = vunpack.c.h.b16 %v677
    %v1363 = vunpack.c.l.b16 %v678
    %v1364 = vunpack.c.h.b16 %v678
    %v1365 = vunpack.c.l.b16 %v679
    %v1366 = vunpack.c.h.b16 %v679
    %v1367 = vunpack.c.l.b16 %v680
    %v1368 = vunpack.c.h.b16 %v680
    %v1369 = vunpack.c.l.b16 %v681
    %v1370 = vunpack.c.h.b16 %v681
    %v1371 = vunpack.c.l.b16 %v682
    %v1372 = vunpack.c.h.b16 %v682
    %v1373 = vunpack.c.l.b16 %v683
    %v1374 = vunpack.c.h.b16 %v683
    %v1375 = vunpack.c.l.b16 %v684
    %v1376 = vunpack.c.h.b16 %v684
    %v1377 = vunpack.c.l.b16 %v685
    %v1378 = vunpack.c.h.b16 %v685
    %v1379 = vunpack.c.l.b16 %v686
    %v1380 = vunpack.c.h.b16 %v686
    %v1381 = vunpack.c.l.b16 %v687
    %v1382 = vunpack.c.h.b16 %v687
    %v1383 = vunpack.c.l.b16 %v688
    %v1384 = vunpack.c.h.b16 %v688
    %v1385 = vunpack.c.l.b16 %v689
    %v1386 = vunpack.c.h.b16 %v689
    %v1387 = vunpack.c.l.b16 %v690
    %v1388 = vunpack.c.h.b16 %v690
    %v1389 = vunpack.c.l.b16 %v691
    %v1390 = vunpack.c.h.b16 %v691
    %v1391 = vunpack.c.l.b16 %v692
    %v1392 = vunpack.c.h.b16 %v692
    %v1393 = vunpack.c.l.b16 %v693
    %v1394 = vunpack.c.h.b16 %v693
    %v1395 = vunpack.c.l.b16 %v694
    %v1396 = vunpack.c.h.b16 %v694
    %v1397 = vunpack.c.l.b16 %v695
    %v1398 = vunpack.c.h.b16 %v695
    %v1399 = vunpack.c.l.b16 %v696
    %v1400 = vunpack.c.h.b16 %v696
    %v1401 = vunpack.c.l.b16 %v697
    %v1402 = vunpack.c.h.b16 %v697
    %v1403 = vunpack.c.l.b16 %v698
    %v1404 = vunpack.c.h.b16 %v698
    %v1405 = vunpack.c.l.b16 %v699
    %v1406 = vunpack.c.h.b16 %v699
    %v1407 = vunpack.c.l.b16 %v700
    %v1408 = vunpack.c.h.b16 %v700
    %v1409 = vunpack.c.l.b16 %v701
    %v1410 = vunpack.c.h.b16 %v701
    %v1411 = vunpack.c.l.b16 %v702
    %v1412 = vunpack.c.h.b16 %v702
    %v1413 = vunpack.c.l.b16 %v703
    %v1414 = vunpack.c.h.b16 %v703
    %v1415 = vunpack.c.l.b16 %v704
    %v1416 = vunpack.c.h.b16 %v704
    %v1417 = vunpack.c.l.b16 %v705
    %v1418 = vunpack.c.h.b16 %v705
    %v1419 = vunpack.c.l.b16 %v706
    %v1420 = vunpack.c.h.b16 %v706
    %v1421 = vunpack.c.l.b16 %v707
    %v1422 = vunpack.c.h.b16 %v707
    %v1423 = vunpack.c.l.b16 %v708
    %v1424 = vunpack.c.h.b16 %v708
    %v1425 = vunpack.c.l.b16 %v709
    %v1426 = vunpack.c.h.b16 %v709
    %v1427 = vunpack.c.l.b16 %v710
    %v1428 = vunpack.c.h.b16 %v710
    %v1429 = vunpack.c.l.b16 %v711
    %v1430 = vunpack.c.h.b16 %v711
    %v1431 = vunpack.c.l.b16 %v712
    %v1432 = vunpack.c.h.b16 %v712
    %v1433 = vunpack.c.l.b16 %v713
    %v1434 = vunpack.c.h.b16 %v713
    %v1435 = vunpack.c.l.b16 %v714
    %v1436 = vunpack.c.h.b16 %v714
    %v1437 = vunpack.c.l.b16 %v715
    %v1438 = vunpack.c.h.b16 %v715
    %v1439 = vunpack.c.l.b16 %v716
    %v1440 = vunpack.c.h.b16 %v716
    %v1441 = vunpack.c.l.b16 %v717
    %v1442 = vunpack.c.h.b16 %v717
    %v1443 = vunpack.c.l.b16 %v718
    %v1444 = vunpack.c.h.b16 %v718
    %v1445 = vunpack.c.l.b16 %v719
    %v1446 = vunpack.c.h.b16 %v719
    %v1447 = vunpack.c.l.b16 %v720
    %v1448 = vunpack.c.h.b16 %v720
    %v1449 = vunpack.c.l.b16 %v721
    %v1450 = vunpack.c.h.b16 %v721
    %v1451 = vunpack.c.l.b16 %v722
    %v1452 = vunpack.c.h.b16 %v722
    %v1453 = vunpack.c.l.b16 %v723
    %v1454 = vunpack.c.h.b16 %v723
    %v1455 = vunpack.c.l.b16 %v724
    %v1456 = vunpack.c.h.b16 %v724
    %v1457 = vunpack.c.l.b16 %v725
    %v1458 = vunpack.c.h.b16 %v725
    %v1459 = vunpack.c.l.b16 %v726
    %v1460 = vunpack.c.h.b16 %v726
    %v1461 = vunpack.c.l.b16 %v727
    %v1462 = vunpack.c.h.b16 %v727
    %v1463 = vunpack.c.l.b16 %v728
    %v1464 = vunpack.c.h.b16 %v728
    %v1465 = vunpack.c.l.b16 %v729
    %v1466 = vunpack.c.h.b16 %v729
    %v1467 = vunpack.c.l.b16 %v730
    %v1468 = vunpack.c.h.b16 %v730
    %v1469 = vunpack.c.l.b16 %v731
    %v1470 = vunpack.c.h.b16 %v731
    %v1471 = vunpack.c.l.b16 %v732
    %v1472 = vunpack.c.h.b16 %v732
    %v1473 = vunpack.c.l.b16 %v733
    %v1474 = vunpack.c.h.b16 %v733
    %v1475 = vunpack.c.l.b16 %v734
    %v1476 = vunpack.c.h.b16 %v734
    %v1477 = vunpack.c.l.b16 %v735
    %v1478 = vunpack.c.h.b16 %v735
    %v1479 = vunpack.c.l.b16 %v736
    %v1480 = vunpack.c.h.b16 %v736
    %v1481 = vunpack.c.l.b16 %v737
    %v1482 = vunpack.c.h.b16 %v737
    %v1483 = vunpack.c.l.b16 %v738
    %v1484 = vunpack.c.h.b16 %v738
    %v1485 = vunpack.c.l.b16 %v739
    %v1486 = vunpack.c.h.b16 %v739
    %v1487 = vunpack.c.l.b16 %v740
    %v1488 = vunpack.c.h.b16 %v740
    %v1489 = vunpack.c.l.b16 %v741
    %v1490 = vunpack.c.h.b16 %v741
    %v1491 = vunpack.c.l.b16 %v742
    %v1492 = vunpack.c.h.b16 %v742
    %v1493 = vunpack.c.l.b16 %v743
    %v1494 = vunpack.c.h.b16 %v743
    %v1495 = vunpack.c.l.b16 %v744
    %v1496 = vunpack.c.h.b16 %v744
    %v1497 = vunpack.c.l.b16 %v745
    %v1498 = vunpack.c.h.b16 %v745
    %v1499 = vunpack.c.l.b16 %v746
    %v1500 = vunpack.c.h.b16 %v746
    %v1501 = vunpack.c.l.b16 %v747
    %v1502 = vunpack.c.h.b16 %v747
    %v1503 = vunpack.c.l.b16 %v748
    %v1504 = vunpack.c.h.b16 %v748
    %v1505 = vunpack.c.l.b16 %v749
    %v1506 = vunpack.c.h.b16 %v749
    %v1507 = vunpack.c.l.b16 %v750
    %v1508 = vunpack.c.h.b16 %v750
    %v1509 = vunpack.c.l.b16 %v751
    %v1510 = vunpack.c.h.b16 %v751
    %v1511 = vunpack.c.l.b16 %v752
    %v1512 = vunpack.c.h.b16 %v752
    %v1513 = vunpack.c.l.b16 %v753
    %v1514 = vunpack.c.h.b16 %v753
    %v1515 = vunpack.c.l.b16 %v754
    %v1516 = vunpack.c.h.b16 %v754
    %v1517 = vunpack.c.l.b16 %v755
    %v1518 = vunpack.c.h.b16 %v755
    %v1519 = vunpack.c.l.b16 %v756
    %v1520 = vunpack.c.h.b16 %v756
    %v1521 = vunpack.c.l.b16 %v757
    %v1522 = vunpack.c.h.b16 %v757
    %v1523 = vunpack.c.l.b16 %v758
    %v1524 = vunpack.c.h.b16 %v758
    %v1525 = vunpack.c.l.b16 %v759
    %v1526 = vunpack.c.h.b16 %v759
    %v1527 = vunpack.c.l.b16 %v760
    %v1528 = vunpack.c.h.b16 %v760
    %v1529 = vunpack.c.l.b16 %v761
    %v1530 = vunpack.c.h.b16 %v761
    %v1531 = vunpack.c.l.b16 %v762
    %v1532 = vunpack.c.h.b16 %v762
    %v1533 = vunpack.c.l.b16 %v763
    %v1534 = vunpack.c.h.b16 %v763
    %v1535 = vunpack.c.l.b16 %v764
    %v1536 = vunpack.c.h.b16 %v764
    %v1537 = vunpack.c.l.b16 %v765
    %v1538 = vunpack.c.h.b16 %v765
    %v1539 = vunpack.c.l.b16 %v766
    %v1540 = vunpack.c.h.b16 %v766
    %v1541 = vunpack.c.l.b16 %v767
    %v1542 = vunpack.c.h.b16 %v767
    %v1543 = vunpack.c.l.b16 %v768
    %v1544 = vunpack.c.h.b16 %v768
    %v1545 = vunpack.c.l.b16 %v769
    %v1546 = vunpack.c.h.b16 %v769
    %v1547 = vunpack.c.l.b16 %v770
    %v1548 = vunpack.c.h.b16 %v770
    %v1549 = vunpack.c.l.b16 %v771
    %v1550 = vunpack.c.h.b16 %v771
    %v1551 = vunpack.c.l.b16 %v772
    %v1552 = vunpack.c.h.b16 %v772
    %v1553 = vunpack.c.l.b16 %v773
    %v1554 = vunpack.c.h.b16 %v773
    %v1555 = vunpack.c.l.b16 %v774
    %v1556 = vunpack.c.h.b16 %v774
    %v1557 = vunpack.c.l.b16 %v775
    %v1558 = vunpack.c.h.b16 %v775
    %v1559 = vunpack.c.l.b16 %v776
    %v1560 = vunpack.c.h.b16 %v776
    %v1561 = vunpack.c.l.b16 %v777
    %v1562 = vunpack.c.h.b16 %v777
    %v1563 = vunpack.c.l.b16 %v778
    %v1564 = vunpack.c.h.b16 %v778
    %v1565 = vunpack.c.l.b16 %v779
    %v1566 = vunpack.c.h.b16 %v779
    %v1567 = vunpack.c.l.b16 %v780
    %v1568 = vunpack.c.h.b16 %v780
    %v1569 = vunpack.c.l.b16 %v781
    %v1570 = vunpack.c.h.b16 %v781
    %v1571 = vunpack.c.l.b16 %v782
    %v1572 = vunpack.c.h.b16 %v782
    %v1573 = vunpack.c.l.b16 %v783
    %v1574 = vunpack.c.h.b16 %v783
    %v1575 = vunpack.c.l.b16 %v784
    %v1576 = vunpack.c.h.b16 %v784
    %v1577 = vunpack.c.l.b16 %v785
    %v1578 = vunpack.c.h.b16 %v785
    %v1579 = vunpack.c.l.b16 %v786
    %v1580 = vunpack.c.h.b16 %v786
    %v1581 = vunpack.c.l.b16 %v787
    %v1582 = vunpack.c.h.b16 %v787
    %v1583 = vunpack.c.l.b16 %v788
    %v1584 = vunpack.c.h.b16 %v788
    %v1585 = vunpack.c.l.b16 %v789
    %v1586 = vunpack.c.h.b16 %v789
    %v1587 = vunpack.c.l.b16 %v790
    %v1588 = vunpack.c.h.b16 %v790
    %v1589 = vpack.c.b16 %v1081, %v1077
    %v1590 = vpack.c.b16 %v1082, %v1078
    %v1591 = vpack.c.b16 %v1083, %v1079
    %v1592 = vpack.c.b16 %v1084, %v1080
    %v1593 = vpack.c.b16 %v1089, %v1085
    %v1594 = vpack.c.b16 %v1090, %v1086
    %v1595 = vpack.c.b16 %v1091, %v1087
    %v1596 = vpack.c.b16 %v1092, %v1088
    %v1597 = vpack.c.b16 %v1097, %v1093
    %v1598 = vpack.c.b16 %v1098, %v1094
    %v1599 = vpack.c.b16 %v1099, %v1095
    %v1600 = vpack.c.b16 %v1100, %v1096
    %v1601 = vpack.c.b16 %v1105, %v1101
    %v1602 = vpack.c.b16 %v1106, %v1102
    %v1603 = vpack.c.b16 %v1107, %v1103
    %v1604 = vpack.c.b16 %v1108, %v1104
    %v1605 = vpack.c.b16 %v1113, %v1109
    %v1606 = vpack.c.b16 %v1114, %v1110
    %v1607 = vpack.c.b16 %v1115, %v1111
    %v1608 = vpack.c.b16 %v1116, %v1112
    %v1609 = vpack.c.b16 %v1121, %v1117
    %v1610 = vpack.c.b16 %v1122, %v1118
    %v1611 = vpack.c.b16 %v1123, %v1119
    %v1612 = vpack.c.b16 %v1124, %v1120
    %v1613 = vpack.c.b16 %v1129, %v1125
    %v1614 = vpack.c.b16 %v1130, %v1126
    %v1615 = vpack.c.b16 %v1131, %v1127
    %v1616 = vpack.c.b16 %v1132, %v1128
    %v1617 = vpack.c.b16 %v1137, %v1133
    %v1618 = vpack.c.b16 %v1138, %v1134
    %v1619 = vpack.c.b16 %v1139, %v1135
    %v1620 = vpack.c.b16 %v1140, %v1136
    %v1621 = vpack.c.b16 %v1145, %v1141
    %v1622 = vpack.c.b16 %v1146, %v1142
    %v1623 = vpack.c.b16 %v1147, %v1143
    %v1624 = vpack.c.b16 %v1148, %v1144
    %v1625 = vpack.c.b16 %v1153, %v1149
    %v1626 = vpack.c.b16 %v1154, %v1150
    %v1627 = vpack.c.b16 %v1155, %v1151
    %v1628 = vpack.c.b16 %v1156, %v1152
    %v1629 = vpack.c.b16 %v1161, %v1157
    %v1630 = vpack.c.b16 %v1162, %v1158
    %v1631 = vpack.c.b16 %v1163, %v1159
    %v1632 = vpack.c.b16 %v1164, %v1160
    %v1633 = vpack.c.b16 %v1169, %v1165
    %v1634 = vpack.c.b16 %v1170, %v1166
    %v1635 = vpack.c.b16 %v1171, %v1167
    %v1636 = vpack.c.b16 %v1172, %v1168
    %v1637 = vpack.c.b16 %v1177, %v1173
    %v1638 = vpack.c.b16 %v1178, %v1174
    %v1639 = vpack.c.b16 %v1179, %v1175
    %v1640 = vpack.c.b16 %v1180, %v1176
    %v1641 = vpack.c.b16 %v1185, %v1181
    %v1642 = vpack.c.b16 %v1186, %v1182
    %v1643 = vpack.c.b16 %v1187, %v1183
    %v1644 = vpack.c.b16 %v1188, %v1184
    %v1645 = vpack.c.b16 %v1193, %v1189
    %v1646 = vpack.c.b16 %v1194, %v1190
    %v1647 = vpack.c.b16 %v1195, %v1191
    %v1648 = vpack.c.b16 %v1196, %v1192
    %v1649 = vpack.c.b16 %v1201, %v1197
    %v1650 = vpack.c.b16 %v1202, %v1198
    %v1651 = vpack.c.b16 %v1203, %v1199
    %v1652 = vpack.c.b16 %v1204, %v1200
    %v1653 = vpack.c.b16 %v1209, %v1205
    %v1654 = vpack.c.b16 %v1210, %v1206
    %v1655 = vpack.c.b16 %v1211, %v1207
    %v1656 = vpack.c.b16 %v1212, %v1208
    %v1657 = vpack.c.b16 %v1217, %v1213
    %v1658 = vpack.c.b16 %v1218, %v1214
    %v1659 = vpack.c.b16 %v1219, %v1215
    %v1660 = vpack.c.b16 %v1220, %v1216
    %v1661 = vpack.c.b16 %v1225, %v1221
    %v1662 = vpack.c.b16 %v1226, %v1222
    %v1663 = vpack.c.b16 %v1227, %v1223
    %v1664 = vpack.c.b16 %v1228, %v1224
    %v1665 = vpack.c.b16 %v1233, %v1229
    %v1666 = vpack.c.b16 %v1234, %v1230
    %v1667 = vpack.c.b16 %v1235, %v1231
    %v1668 = vpack.c.b16 %v1236, %v1232
    %v1669 = vpack.c.b16 %v1241, %v1237
    %v1670 = vpack.c.b16 %v1242, %v1238
    %v1671 = vpack.c.b16 %v1243, %v1239
    %v1672 = vpack.c.b16 %v1244, %v1240
    %v1673 = vpack.c.b16 %v1249, %v1245
    %v1674 = vpack.c.b16 %v1250, %v1246
    %v1675 = vpack.c.b16 %v1251, %v1247
    %v1676 = vpack.c.b16 %v1252, %v1248
    %v1677 = vpack.c.b16 %v1257, %v1253
    %v1678 = vpack.c.b16 %v1258, %v1254
    %v1679 = vpack.c.b16 %v1259, %v1255
    %v1680 = vpack.c.b16 %v1260, %v1256
    %v1681 = vpack.c.b16 %v1265, %v1261
    %v1682 = vpack.c.b16 %v1266, %v1262
    %v1683 = vpack.c.b16 %v1267, %v1263
    %v1684 = vpack.c.b16 %v1268, %v1264
    %v1685 = vpack.c.b16 %v1273, %v1269
    %v1686 = vpack.c.b16 %v1274, %v1270
    %v1687 = vpack.c.b16 %v1275, %v1271
    %v1688 = vpack.c.b16 %v1276, %v1272
    %v1689 = vpack.c.b16 %v1281, %v1277
    %v1690 = vpack.c.b16 %v1282, %v1278
    %v1691 = vpack.c.b16 %v1283, %v1279
    %v1692 = vpack.c.b16 %v1284, %v1280
    %v1693 = vpack.c.b16 %v1289, %v1285
    %v1694 = vpack.c.b16 %v1290, %v1286
    %v1695 = vpack.c.b16 %v1291, %v1287
    %v1696 = vpack.c.b16 %v1292, %v1288
    %v1697 = vpack.c.b16 %v1297, %v1293
    %v1698 = vpack.c.b16 %v1298, %v1294
    %v1699 = vpack.c.b16 %v1299, %v1295
    %v1700 = vpack.c.b16 %v1300, %v1296
    %v1701 = vpack.c.b16 %v1305, %v1301
    %v1702 = vpack.c.b16 %v1306, %v1302
    %v1703 = vpack.c.b16 %v1307, %v1303
    %v1704 = vpack.c.b16 %v1308, %v1304
    %v1705 = vpack.c.b16 %v1313, %v1309
    %v1706 = vpack.c.b16 %v1314, %v1310
    %v1707 = vpack.c.b16 %v1315, %v1311
    %v1708 = vpack.c.b16 %v1316, %v1312
    %v1709 = vpack.c.b16 %v1321, %v1317
    %v1710 = vpack.c.b16 %v1322, %v1318
    %v1711 = vpack.c.b16 %v1323, %v1319
    %v1712 = vpack.c.b16 %v1324, %v1320
    %v1713 = vpack.c.b16 %v1329, %v1325
    %v1714 = vpack.c.b16 %v1330, %v1326
    %v1715 = vpack.c.b16 %v1331, %v1327
    %v1716 = vpack.c.b16 %v1332, %v1328
    %v1717 = vpack.c.b16 %v1337, %v1333
    %v1718 = vpack.c.b16 %v1338, %v1334
    %v1719 = vpack.c.b16 %v1339, %v1335
    %v1720 = vpack.c.b16 %v1340, %v1336
    %v1721 = vpack.c.b16 %v1345, %v1341
    %v1722 = vpack.c.b16 %v1346, %v1342
    %v1723 = vpack.c.b16 %v1347, %v1343
    %v1724 = vpack.c.b16 %v1348, %v1344
    %v1725 = vpack.c.b16 %v1353, %v1349
    %v1726 = vpack.c.b16 %v1354, %v1350
    %v1727 = vpack.c.b16 %v1355, %v1351
    %v1728 = vpack.c.b16 %v1356, %v1352
    %v1729 = vpack.c.b16 %v1361, %v1357
    %v1730 = vpack.c.b16 %v1362, %v1358
    %v1731 = vpack.c.b16 %v1363, %v1359
    %v1732 = vpack.c.b16 %v1364, %v1360
    %v1733 = vpack.c.b16 %v1369, %v1365
    %v1734 = vpack.c.b16 %v1370, %v1366
    %v1735 = vpack.c.b16 %v1371, %v1367
    %v1736 = vpack.c.b16 %v1372, %v1368
    %v1737 = vpack.c.b16 %v1377, %v1373
    %v1738 = vpack.c.b16 %v1378, %v1374
    %v1739 = vpack.c.b16 %v1379, %v1375
    %v1740 = vpack.c.b16 %v1380, %v1376
    %v1741 = vpack.c.b16 %v1385, %v1381
    %v1742 = vpack.c.b16 %v1386, %v1382
    %v1743 = vpack.c.b16 %v1387, %v1383
    %v1744 = vpack.c.b16 %v1388, %v1384
    %v1745 = vpack.c.b16 %v1393, %v1389
    %v1746 = vpack.c.b16 %v1394, %v1390
    %v1747 = vpack.c.b16 %v1395, %v1391
    %v1748 = vpack.c.b16 %v1396, %v1392
    %v1749 = vpack.c.b16 %v1401, %v1397
    %v1750 = vpack.c.b16 %v1402, %v1398
    %v1751 = vpack.c.b16 %v1403, %v1399
    %v1752 = vpack.c.b16 %v1404, %v1400
    %v1753 = vpack.c.b16 %v1409, %v1405
    %v1754 = vpack.c.b16 %v1410, %v1406
    %v1755 = vpack.c.b16 %v1411, %v1407
    %v1756 = vpack.c.b16 %v1412, %v1408
    %v1757 = vpack.c.b16 %v1417, %v1413
    %v1758 = vpack.c.b16 %v1418, %v1414
    %v1759 = vpack.c.b16 %v1419, %v1415
    %v1760 = vpack.c.b16 %v1420, %v1416
    %v1761 = vpack.c.b16 %v1425, %v1421
    %v1762 = vpack.c.b16 %v1426, %v1422
    %v1763 = vpack.c.b16 %v1427, %v1423
    %v1764 = vpack.c.b16 %v1428, %v1424
    %v1765 = vpack.c.b16 %v1433, %v1429
    %v1766 = vpack.c.b16 %v1434, %v1430
    %v1767 = vpack.c.b16 %v1435, %v1431
    %v1768 = vpack.c.b16 %v1436, %v1432
    %v1769 = vpack.c.b16 %v1441, %v1437
    %v1770 = vpack.c.b16 %v1442, %v1438
    %v1771 = vpack.c.b16 %v1443, %v1439
    %v1772 = vpack.c.b16 %v1444, %v1440
    %v1773 = vpack.c.b16 %v1449, %v1445
    %v1774 = vpack.c.b16 %v1450, %v1446
    %v1775 = vpack.c.b16 %v1451, %v1447
    %v1776 = vpack.c.b16 %v1452, %v1448
    %v1777 = vpack.c.b16 %v1457, %v1453
    %v1778 = vpack.c.b16 %v1458, %v1454
    %v1779 = vpack.c.b16 %v1459, %v1455
    %v1780 = vpack.c.b16 %v1460, %v1456
    %v1781 = vpack.c.b16 %v1465, %v1461
    %v1782 = vpack.c.b16 %v1466, %v1462
    %v1783 = vpack.c.b16 %v1467, %v1463
    %v1784 = vpack.c.b16 %v1468, %v1464
    %v1785 = vpack.c.b16 %v1473, %v1469
    %v1786 = vpack.c.b16 %v1474, %v1470
    %v1787 = vpack.c.b16 %v1475, %v1471
    %v1788 = vpack.c.b16 %v1476, %v1472
    %v1789 = vpack.c.b16 %v1481, %v1477
    %v1790 = vpack.c.b16 %v1482, %v1478
    %v1791 = vpack.c.b16 %v1483, %v1479
    %v1792 = vpack.c.b16 %v1484, %v1480
    %v1793 = vpack.c.b16 %v1489, %v1485
    %v1794 = vpack.c.b16 %v1490, %v1486
    %v1795 = vpack.c.b16 %v1491, %v1487
    %v1796 = vpack.c.b16 %v1492, %v1488
    %v1797 = vpack.c.b16 %v1497, %v1493
    %v1798 = vpack.c.b16 %v1498, %v1494
    %v1799 = vpack.c.b16 %v1499, %v1495
    %v1800 = vpack.c.b16 %v1500, %v1496
    %v1801 = vpack.c.b16 %v1505, %v1501
    %v1802 = vpack.c.b16 %v1506, %v1502
    %v1803 = vpack.c.b16 %v1507, %v1503
    %v1804 = vpack.c.b16 %v1508, %v1504
    %v1805 = vpack.c.b16 %v1513, %v1509
    %v1806 = vpack.c.b16 %v1514, %v1510
    %v1807 = vpack.c.b16 %v1515, %v1511
    %v1808 = vpack.c.b16 %v1516, %v1512
    %v1809 = vpack.c.b16 %v1521, %v1517
    %v1810 = vpack.c.b16 %v1522, %v1518
    %v1811 = vpack.c.b16 %v1523, %v1519
    %v1812 = vpack.c.b16 %v1524, %v1520
    %v1813 = vpack.c.b16 %v1529, %v1525
    %v1814 = vpack.c.b16 %v1530, %v1526
    %v1815 = vpack.c.b16 %v1531, %v1527
    %v1816 = vpack.c.b16 %v1532, %v1528
    %v1817 = vpack.c.b16 %v1537, %v1533
    %v1818 = vpack.c.b16 %v1538, %v1534
    %v1819 = vpack.c.b16 %v1539, %v1535
    %v1820 = vpack.c.b16 %v1540, %v1536
    %v1821 = vpack.c.b16 %v1545, %v1541
    %v1822 = vpack.c.b16 %v1546, %v1542
    %v1823 = vpack.c.b16 %v1547, %v1543
    %v1824 = vpack.c.b16 %v1548, %v1544
    %v1825 = vpack.c.b16 %v1553, %v1549
    %v1826 = vpack.c.b16 %v1554, %v1550
    %v1827 = vpack.c.b16 %v1555, %v1551
    %v1828 = vpack.c.b16 %v1556, %v1552
    %v1829 = vpack.c.b16 %v1561, %v1557
    %v1830 = vpack.c.b16 %v1562, %v1558
    %v1831 = vpack.c.b16 %v1563, %v1559
    %v1832 = vpack.c.b16 %v1564, %v1560
    %v1833 = vpack.c.b16 %v1569, %v1565
    %v1834 = vpack.c.b16 %v1570, %v1566
    %v1835 = vpack.c.b16 %v1571, %v1567
    %v1836 = vpack.c.b16 %v1572, %v1568
    %v1837 = vpack.c.b16 %v1577, %v1573
    %v1838 = vpack.c.b16 %v1578, %v1574
    %v1839 = vpack.c.b16 %v1579, %v1575
    %v1840 = vpack.c.b16 %v1580, %v1576
    %v1841 = vpack.c.b16 %v1585, %v1581
    %v1842 = vpack.c.b16 %v1586, %v1582
    %v1843 = vpack.c.b16 %v1587, %v1583
    %v1844 = vpack.c.b16 %v1588, %v1584
    %2101 = vmatprep.subr.bf16.mxu0 %v1590
    %2102 = vmatpush1.bf16.msra.mxu0 %v1589
    %2103 = vmatprep.subr.bf16.mxu0 %v1594
    %2104 = vmatpush1.bf16.msra.mxu0 %v1593
    %2105 = vmatprep.subr.bf16.mxu0 %v1598
    %2106 = vmatpush1.bf16.msra.mxu0 %v1597
    %2107 = vmatprep.subr.bf16.mxu0 %v1602
    %2108 = vmatpush1.bf16.msra.mxu0 %v1601
    %2109 = vmatprep.subr.bf16.mxu0 %v1606
    %2110 = vmatpush1.bf16.msra.mxu0 %v1605
    %2111 = vmatprep.subr.bf16.mxu0 %v1610
    %2112 = vmatpush1.bf16.msra.mxu0 %v1609
    %2113 = vmatprep.subr.bf16.mxu0 %v1614
    %2114 = vmatpush1.bf16.msra.mxu0 %v1613
    %2115 = vmatprep.subr.bf16.mxu0 %v1618
    %2116 = vmatpush1.bf16.msra.mxu0 %v1617
    %2117 = vmatprep.subr.bf16.mxu0 %v1622
    %2118 = vmatpush1.bf16.msra.mxu0 %v1621
    %2119 = vmatprep.subr.bf16.mxu0 %v1626
    %2120 = vmatpush1.bf16.msra.mxu0 %v1625
    %2121 = vmatprep.subr.bf16.mxu0 %v1630
    %2122 = vmatpush1.bf16.msra.mxu0 %v1629
    %2123 = vmatprep.subr.bf16.mxu0 %v1634
    %2124 = vmatpush1.bf16.msra.mxu0 %v1633
    %2125 = vmatprep.subr.bf16.mxu0 %v1638
    %2126 = vmatpush1.bf16.msra.mxu0 %v1637
    %2127 = vmatprep.subr.bf16.mxu0 %v1642
    %2128 = vmatpush1.bf16.msra.mxu0 %v1641
    %2129 = vmatprep.subr.bf16.mxu0 %v1646
    %2130 = vmatpush1.bf16.msra.mxu0 %v1645
    %2131 = vmatprep.subr.bf16.mxu0 %v1650
    %2132 = vmatpush1.bf16.msra.mxu0 %v1649
    %2133 = vmatprep.mubr.bf16.mxu0 %v793
    %2134 = vmatmul.mubr.bf16.gmra.mrb[0].mxu0 %v792
    %v2135 = vpop.f32.mrb[0].mxu0
    %v2136 = vadd.f32 %v804, %v2135
    %v2137 = vpop.f32.mrb[0].mxu0
    %v2138 = vadd.f32 %v808, %v2137
    %v2139 = vpop.f32.mrb[0].mxu0
    %v2140 = vpop.f32.mrb[0].mxu0
    %2141 = vdwg.mxu0
    %2142 = vmatprep.subr.bf16.mxu0 %v1654
    %2143 = vmatpush1.bf16.msra.mxu0 %v1653
    %2144 = vmatprep.subr.bf16.mxu0 %v1658
    %2145 = vmatpush1.bf16.msra.mxu0 %v1657
    %2146 = vmatprep.subr.bf16.mxu0 %v1662
    %2147 = vmatpush1.bf16.msra.mxu0 %v1661
    %2148 = vmatprep.subr.bf16.mxu0 %v1666
    %2149 = vmatpush1.bf16.msra.mxu0 %v1665
    %2150 = vmatprep.subr.bf16.mxu0 %v1670
    %2151 = vmatpush1.bf16.msra.mxu0 %v1669
    %2152 = vmatprep.subr.bf16.mxu0 %v1674
    %2153 = vmatpush1.bf16.msra.mxu0 %v1673
    %2154 = vmatprep.subr.bf16.mxu0 %v1678
    %2155 = vmatpush1.bf16.msra.mxu0 %v1677
    %2156 = vmatprep.subr.bf16.mxu0 %v1682
    %2157 = vmatpush1.bf16.msra.mxu0 %v1681
    %2158 = vmatprep.subr.bf16.mxu0 %v1686
    %2159 = vmatpush1.bf16.msra.mxu0 %v1685
    %2160 = vmatprep.subr.bf16.mxu0 %v1690
    %2161 = vmatpush1.bf16.msra.mxu0 %v1689
    %2162 = vmatprep.subr.bf16.mxu0 %v1694
    %2163 = vmatpush1.bf16.msra.mxu0 %v1693
    %2164 = vmatprep.subr.bf16.mxu0 %v1698
    %2165 = vmatpush1.bf16.msra.mxu0 %v1697
    %2166 = vmatprep.subr.bf16.mxu0 %v1702
    %2167 = vmatpush1.bf16.msra.mxu0 %v1701
    %2168 = vmatprep.subr.bf16.mxu0 %v1706
    %2169 = vmatpush1.bf16.msra.mxu0 %v1705
    %2170 = vmatprep.subr.bf16.mxu0 %v1710
    %2171 = vmatpush1.bf16.msra.mxu0 %v1709
    %2172 = vmatprep.subr.bf16.mxu0 %v1714
    %2173 = vmatpush1.bf16.msra.mxu0 %v1713
    %2174 = vmatprep.mubr.bf16.mxu0 %v795
    %2175 = vmatmul.mubr.bf16.gmra.mrb[0].mxu0 %v794
    %v2176 = vpop.f32.mrb[0].mxu0
    %v2177 = vadd.f32 %v2136, %v2176
    %v2178 = vpop.f32.mrb[0].mxu0
    %v2179 = vadd.f32 %v2138, %v2178
    %v2180 = vpop.f32.mrb[0].mxu0
    %v2181 = vpop.f32.mrb[0].mxu0
    %2182 = vdwg.mxu0
    %2183 = vmatprep.subr.bf16.mxu0 %v1718
    %2184 = vmatpush1.bf16.msra.mxu0 %v1717
    %2185 = vmatprep.subr.bf16.mxu0 %v1722
    %2186 = vmatpush1.bf16.msra.mxu0 %v1721
    %2187 = vmatprep.subr.bf16.mxu0 %v1726
    %2188 = vmatpush1.bf16.msra.mxu0 %v1725
    %2189 = vmatprep.subr.bf16.mxu0 %v1730
    %2190 = vmatpush1.bf16.msra.mxu0 %v1729
    %2191 = vmatprep.subr.bf16.mxu0 %v1734
    %2192 = vmatpush1.bf16.msra.mxu0 %v1733
    %2193 = vmatprep.subr.bf16.mxu0 %v1738
    %2194 = vmatpush1.bf16.msra.mxu0 %v1737
    %2195 = vmatprep.subr.bf16.mxu0 %v1742
    %2196 = vmatpush1.bf16.msra.mxu0 %v1741
    %2197 = vmatprep.subr.bf16.mxu0 %v1746
    %2198 = vmatpush1.bf16.msra.mxu0 %v1745
    %2199 = vmatprep.subr.bf16.mxu0 %v1750
    %2200 = vmatpush1.bf16.msra.mxu0 %v1749
    %2201 = vmatprep.subr.bf16.mxu0 %v1754
    %2202 = vmatpush1.bf16.msra.mxu0 %v1753
    %2203 = vmatprep.subr.bf16.mxu0 %v1758
    %2204 = vmatpush1.bf16.msra.mxu0 %v1757
    %2205 = vmatprep.subr.bf16.mxu0 %v1762
    %2206 = vmatpush1.bf16.msra.mxu0 %v1761
    %2207 = vmatprep.subr.bf16.mxu0 %v1766
    %2208 = vmatpush1.bf16.msra.mxu0 %v1765
    %2209 = vmatprep.subr.bf16.mxu0 %v1770
    %2210 = vmatpush1.bf16.msra.mxu0 %v1769
    %2211 = vmatprep.subr.bf16.mxu0 %v1774
    %2212 = vmatpush1.bf16.msra.mxu0 %v1773
    %2213 = vmatprep.subr.bf16.mxu0 %v1778
    %2214 = vmatpush1.bf16.msra.mxu0 %v1777
    %2215 = vmatprep.mubr.bf16.mxu0 %v797
    %2216 = vmatmul.mubr.bf16.gmra.mrb[0].mxu0 %v796
    %v2217 = vpop.f32.mrb[0].mxu0
    %v2218 = vadd.f32 %v2177, %v2217
    %v2219 = vpop.f32.mrb[0].mxu0
    %v2220 = vadd.f32 %v2179, %v2219
    %v2221 = vpop.f32.mrb[0].mxu0
    %v2222 = vpop.f32.mrb[0].mxu0
    %2223 = vdwg.mxu0
    %2224 = vmatprep.subr.bf16.mxu0 %v1782
    %2225 = vmatpush1.bf16.msra.mxu0 %v1781
    %2226 = vmatprep.subr.bf16.mxu0 %v1786
    %2227 = vmatpush1.bf16.msra.mxu0 %v1785
    %2228 = vmatprep.subr.bf16.mxu0 %v1790
    %2229 = vmatpush1.bf16.msra.mxu0 %v1789
    %2230 = vmatprep.subr.bf16.mxu0 %v1794
    %2231 = vmatpush1.bf16.msra.mxu0 %v1793
    %2232 = vmatprep.subr.bf16.mxu0 %v1798
    %2233 = vmatpush1.bf16.msra.mxu0 %v1797
    %2234 = vmatprep.subr.bf16.mxu0 %v1802
    %2235 = vmatpush1.bf16.msra.mxu0 %v1801
    %2236 = vmatprep.subr.bf16.mxu0 %v1806
    %2237 = vmatpush1.bf16.msra.mxu0 %v1805
    %2238 = vmatprep.subr.bf16.mxu0 %v1810
    %2239 = vmatpush1.bf16.msra.mxu0 %v1809
    %2240 = vmatprep.subr.bf16.mxu0 %v1814
    %2241 = vmatpush1.bf16.msra.mxu0 %v1813
    %2242 = vmatprep.subr.bf16.mxu0 %v1818
    %2243 = vmatpush1.bf16.msra.mxu0 %v1817
    %2244 = vmatprep.subr.bf16.mxu0 %v1822
    %2245 = vmatpush1.bf16.msra.mxu0 %v1821
    %2246 = vmatprep.subr.bf16.mxu0 %v1826
    %2247 = vmatpush1.bf16.msra.mxu0 %v1825
    %2248 = vmatprep.subr.bf16.mxu0 %v1830
    %2249 = vmatpush1.bf16.msra.mxu0 %v1829
    %2250 = vmatprep.subr.bf16.mxu0 %v1834
    %2251 = vmatpush1.bf16.msra.mxu0 %v1833
    %2252 = vmatprep.subr.bf16.mxu0 %v1838
    %2253 = vmatpush1.bf16.msra.mxu0 %v1837
    %2254 = vmatprep.subr.bf16.mxu0 %v1842
    %2255 = vmatpush1.bf16.msra.mxu0 %v1841
    %2256 = vmatprep.mubr.bf16.mxu0 %v799
    %2257 = vmatmul.mubr.bf16.gmra.mrb[0].mxu0 %v798
    %v2258 = vpop.f32.mrb[0].mxu0
    %v2259 = vadd.f32 %v2218, %v2258
    %v2260 = vpop.f32.mrb[0].mxu0
    %v2261 = vadd.f32 %v2220, %v2260
    %v2262 = vpop.f32.mrb[0].mxu0
    %v2263 = vpop.f32.mrb[0].mxu0
    %2264 = vdwg.mxu0
    %2265 = vmatprep.subr.bf16.mxu0 %v1592
    %2266 = vmatpush1.bf16.msra.mxu0 %v1591
    %2267 = vmatprep.subr.bf16.mxu0 %v1596
    %2268 = vmatpush1.bf16.msra.mxu0 %v1595
    %2269 = vmatprep.subr.bf16.mxu0 %v1600
    %2270 = vmatpush1.bf16.msra.mxu0 %v1599
    %2271 = vmatprep.subr.bf16.mxu0 %v1604
    %2272 = vmatpush1.bf16.msra.mxu0 %v1603
    %2273 = vmatprep.subr.bf16.mxu0 %v1608
    %2274 = vmatpush1.bf16.msra.mxu0 %v1607
    %2275 = vmatprep.subr.bf16.mxu0 %v1612
    %2276 = vmatpush1.bf16.msra.mxu0 %v1611
    %2277 = vmatprep.subr.bf16.mxu0 %v1616
    %2278 = vmatpush1.bf16.msra.mxu0 %v1615
    %2279 = vmatprep.subr.bf16.mxu0 %v1620
    %2280 = vmatpush1.bf16.msra.mxu0 %v1619
    %2281 = vmatprep.subr.bf16.mxu0 %v1624
    %2282 = vmatpush1.bf16.msra.mxu0 %v1623
    %2283 = vmatprep.subr.bf16.mxu0 %v1628
    %2284 = vmatpush1.bf16.msra.mxu0 %v1627
    %2285 = vmatprep.subr.bf16.mxu0 %v1632
    %2286 = vmatpush1.bf16.msra.mxu0 %v1631
    %2287 = vmatprep.subr.bf16.mxu0 %v1636
    %2288 = vmatpush1.bf16.msra.mxu0 %v1635
    %2289 = vmatprep.subr.bf16.mxu0 %v1640
    %2290 = vmatpush1.bf16.msra.mxu0 %v1639
    %2291 = vmatprep.subr.bf16.mxu0 %v1644
    %2292 = vmatpush1.bf16.msra.mxu0 %v1643
    %2293 = vmatprep.subr.bf16.mxu0 %v1648
    %2294 = vmatpush1.bf16.msra.mxu0 %v1647
    %2295 = vmatprep.subr.bf16.mxu0 %v1652
    %2296 = vmatpush1.bf16.msra.mxu0 %v1651
    %2297 = vmatprep.mubr.bf16.mxu0 %v793
    %2298 = vmatmul.mubr.bf16.gmra.mrb[0].mxu0 %v792
    %v2299 = vpop.f32.mrb[0].mxu0
    %v2300 = vadd.f32 %v812, %v2299
    %v2301 = vpop.f32.mrb[0].mxu0
    %v2302 = vadd.f32 %v816, %v2301
    %v2303 = vpop.f32.mrb[0].mxu0
    %v2304 = vpop.f32.mrb[0].mxu0
    %2305 = vdwg.mxu0
    %2306 = vmatprep.subr.bf16.mxu0 %v1656
    %2307 = vmatpush1.bf16.msra.mxu0 %v1655
    %2308 = vmatprep.subr.bf16.mxu0 %v1660
    %2309 = vmatpush1.bf16.msra.mxu0 %v1659
    %2310 = vmatprep.subr.bf16.mxu0 %v1664
    %2311 = vmatpush1.bf16.msra.mxu0 %v1663
    %2312 = vmatprep.subr.bf16.mxu0 %v1668
    %2313 = vmatpush1.bf16.msra.mxu0 %v1667
    %2314 = vmatprep.subr.bf16.mxu0 %v1672
    %2315 = vmatpush1.bf16.msra.mxu0 %v1671
    %2316 = vmatprep.subr.bf16.mxu0 %v1676
    %2317 = vmatpush1.bf16.msra.mxu0 %v1675
    %2318 = vmatprep.subr.bf16.mxu0 %v1680
    %2319 = vmatpush1.bf16.msra.mxu0 %v1679
    %2320 = vmatprep.subr.bf16.mxu0 %v1684
    %2321 = vmatpush1.bf16.msra.mxu0 %v1683
    %2322 = vmatprep.subr.bf16.mxu0 %v1688
    %2323 = vmatpush1.bf16.msra.mxu0 %v1687
    %2324 = vmatprep.subr.bf16.mxu0 %v1692
    %2325 = vmatpush1.bf16.msra.mxu0 %v1691
    %2326 = vmatprep.subr.bf16.mxu0 %v1696
    %2327 = vmatpush1.bf16.msra.mxu0 %v1695
    %2328 = vmatprep.subr.bf16.mxu0 %v1700
    %2329 = vmatpush1.bf16.msra.mxu0 %v1699
    %2330 = vmatprep.subr.bf16.mxu0 %v1704
    %2331 = vmatpush1.bf16.msra.mxu0 %v1703
    %2332 = vmatprep.subr.bf16.mxu0 %v1708
    %2333 = vmatpush1.bf16.msra.mxu0 %v1707
    %2334 = vmatprep.subr.bf16.mxu0 %v1712
    %2335 = vmatpush1.bf16.msra.mxu0 %v1711
    %2336 = vmatprep.subr.bf16.mxu0 %v1716
    %2337 = vmatpush1.bf16.msra.mxu0 %v1715
    %2338 = vmatprep.mubr.bf16.mxu0 %v795
    %2339 = vmatmul.mubr.bf16.gmra.mrb[0].mxu0 %v794
    %v2340 = vpop.f32.mrb[0].mxu0
    %v2341 = vadd.f32 %v2300, %v2340
    %v2342 = vpop.f32.mrb[0].mxu0
    %v2343 = vadd.f32 %v2302, %v2342
    %v2344 = vpop.f32.mrb[0].mxu0
    %v2345 = vpop.f32.mrb[0].mxu0
    %2346 = vdwg.mxu0
    %2347 = vmatprep.subr.bf16.mxu0 %v1720
    %2348 = vmatpush1.bf16.msra.mxu0 %v1719
    %2349 = vmatprep.subr.bf16.mxu0 %v1724
    %2350 = vmatpush1.bf16.msra.mxu0 %v1723
    %2351 = vmatprep.subr.bf16.mxu0 %v1728
    %2352 = vmatpush1.bf16.msra.mxu0 %v1727
    %2353 = vmatprep.subr.bf16.mxu0 %v1732
    %2354 = vmatpush1.bf16.msra.mxu0 %v1731
    %2355 = vmatprep.subr.bf16.mxu0 %v1736
    %2356 = vmatpush1.bf16.msra.mxu0 %v1735
    %2357 = vmatprep.subr.bf16.mxu0 %v1740
    %2358 = vmatpush1.bf16.msra.mxu0 %v1739
    %2359 = vmatprep.subr.bf16.mxu0 %v1744
    %2360 = vmatpush1.bf16.msra.mxu0 %v1743
    %2361 = vmatprep.subr.bf16.mxu0 %v1748
    %2362 = vmatpush1.bf16.msra.mxu0 %v1747
    %2363 = vmatprep.subr.bf16.mxu0 %v1752
    %2364 = vmatpush1.bf16.msra.mxu0 %v1751
    %2365 = vmatprep.subr.bf16.mxu0 %v1756
    %2366 = vmatpush1.bf16.msra.mxu0 %v1755
    %2367 = vmatprep.subr.bf16.mxu0 %v1760
    %2368 = vmatpush1.bf16.msra.mxu0 %v1759
    %2369 = vmatprep.subr.bf16.mxu0 %v1764
    %2370 = vmatpush1.bf16.msra.mxu0 %v1763
    %2371 = vmatprep.subr.bf16.mxu0 %v1768
    %2372 = vmatpush1.bf16.msra.mxu0 %v1767
    %2373 = vmatprep.subr.bf16.mxu0 %v1772
    %2374 = vmatpush1.bf16.msra.mxu0 %v1771
    %2375 = vmatprep.subr.bf16.mxu0 %v1776
    %2376 = vmatpush1.bf16.msra.mxu0 %v1775
    %2377 = vmatprep.subr.bf16.mxu0 %v1780
    %2378 = vmatpush1.bf16.msra.mxu0 %v1779
    %2379 = vmatprep.mubr.bf16.mxu0 %v797
    %2380 = vmatmul.mubr.bf16.gmra.mrb[0].mxu0 %v796
    %v2381 = vpop.f32.mrb[0].mxu0
    %v2382 = vadd.f32 %v2341, %v2381
    %v2383 = vpop.f32.mrb[0].mxu0
    %v2384 = vadd.f32 %v2343, %v2383
    %v2385 = vpop.f32.mrb[0].mxu0
    %v2386 = vpop.f32.mrb[0].mxu0
    %2387 = vdwg.mxu0
    %2388 = vmatprep.subr.bf16.mxu0 %v1784
    %2389 = vmatpush1.bf16.msra.mxu0 %v1783
    %2390 = vmatprep.subr.bf16.mxu0 %v1788
    %2391 = vmatpush1.bf16.msra.mxu0 %v1787
    %2392 = vmatprep.subr.bf16.mxu0 %v1792
    %2393 = vmatpush1.bf16.msra.mxu0 %v1791
    %2394 = vmatprep.subr.bf16.mxu0 %v1796
    %2395 = vmatpush1.bf16.msra.mxu0 %v1795
    %2396 = vmatprep.subr.bf16.mxu0 %v1800
    %2397 = vmatpush1.bf16.msra.mxu0 %v1799
    %2398 = vmatprep.subr.bf16.mxu0 %v1804
    %2399 = vmatpush1.bf16.msra.mxu0 %v1803
    %2400 = vmatprep.subr.bf16.mxu0 %v1808
    %2401 = vmatpush1.bf16.msra.mxu0 %v1807
    %2402 = vmatprep.subr.bf16.mxu0 %v1812
    %2403 = vmatpush1.bf16.msra.mxu0 %v1811
    %2404 = vmatprep.subr.bf16.mxu0 %v1816
    %2405 = vmatpush1.bf16.msra.mxu0 %v1815
    %2406 = vmatprep.subr.bf16.mxu0 %v1820
    %2407 = vmatpush1.bf16.msra.mxu0 %v1819
    %2408 = vmatprep.subr.bf16.mxu0 %v1824
    %2409 = vmatpush1.bf16.msra.mxu0 %v1823
    %2410 = vmatprep.subr.bf16.mxu0 %v1828
    %2411 = vmatpush1.bf16.msra.mxu0 %v1827
    %2412 = vmatprep.subr.bf16.mxu0 %v1832
    %2413 = vmatpush1.bf16.msra.mxu0 %v1831
    %2414 = vmatprep.subr.bf16.mxu0 %v1836
    %2415 = vmatpush1.bf16.msra.mxu0 %v1835
    %2416 = vmatprep.subr.bf16.mxu0 %v1840
    %2417 = vmatpush1.bf16.msra.mxu0 %v1839
    %2418 = vmatprep.subr.bf16.mxu0 %v1844
    %2419 = vmatpush1.bf16.msra.mxu0 %v1843
    %2420 = vmatprep.mubr.bf16.mxu0 %v799
    %2421 = vmatmul.mubr.bf16.gmra.mrb[0].mxu0 %v798
    %v2422 = vpop.f32.mrb[0].mxu0
    %v2423 = vadd.f32 %v2382, %v2422
    %v2424 = vpop.f32.mrb[0].mxu0
    %v2425 = vadd.f32 %v2384, %v2424
    %v2426 = vpop.f32.mrb[0].mxu0
    %v2427 = vpop.f32.mrb[0].mxu0
    %2428 = vdwg.mxu0
    %v2429 = vxor.u32 %v2259, 2147483648
    %v2430 = vxor.u32 %v2261, 2147483648
    %v2431 = vxor.u32 %v2423, 2147483648
    %v2432 = vxor.u32 %v2425, 2147483648
    %v2433 = vmul.f32 %v2429, 1.442695
    %v2434 = vpow.pop %v2433
    %v2435 = vmul.f32 %v2430, 1.442695
    %v2436 = vpow.pop %v2435
    %v2437 = vmul.f32 %v2431, 1.442695
    %v2438 = vpow.pop %v2437
    %v2439 = vmul.f32 %v2432, 1.442695
    %v2440 = vpow.pop %v2439
    %v2441 = vadd.f32 %v2434, 1.0
    %v2442 = vadd.f32 %v2436, 1.0
    %v2443 = vadd.f32 %v2438, 1.0
    %v2444 = vadd.f32 %v2440, 1.0
    %v2445 = vrcp.pop %v2441
    %v2446 = vmul.f32 1.0, %v2445
    %v2447 = vrcp.pop %v2442
    %v2448 = vmul.f32 1.0, %v2447
    %v2449 = vrcp.pop %v2443
    %v2450 = vmul.f32 1.0, %v2449
    %v2451 = vrcp.pop %v2444
    %v2452 = vmul.f32 1.0, %v2451
    %v2453 = vmul.f32 %v2259, %v2446
    %v2454 = vmul.f32 %v2261, %v2448
    %v2455 = vmul.f32 %v2423, %v2450
    %v2456 = vmul.f32 %v2425, %v2452
    %v2457 = vld [vmem:[#allocation4] sm:$0xff]
    %v2458 = vld [vmem:[#allocation4 + $0x8] sm:$0xff]
    %v2459 = vld [vmem:[#allocation4 + $0x10] sm:$0xff]
    %v2460 = vld [vmem:[#allocation4 + $0x18] sm:$0xff]
    %v2461 = vld [vmem:[#allocation4 + $0x20] sm:$0xff]
    %v2462 = vld [vmem:[#allocation4 + $0x28] sm:$0xff]
    %v2463 = vld [vmem:[#allocation4 + $0x30] sm:$0xff]
    %v2464 = vld [vmem:[#allocation4 + $0x38] sm:$0xff]
    %v2465 = vld [vmem:[#allocation4 + $0x40] sm:$0xff]
    %v2466 = vld [vmem:[#allocation4 + $0x48] sm:$0xff]
    %v2467 = vld [vmem:[#allocation4 + $0x50] sm:$0xff]
    %v2468 = vld [vmem:[#allocation4 + $0x58] sm:$0xff]
    %v2469 = vld [vmem:[#allocation4 + $0x60] sm:$0xff]
    %v2470 = vld [vmem:[#allocation4 + $0x68] sm:$0xff]
    %v2471 = vld [vmem:[#allocation4 + $0x70] sm:$0xff]
    %v2472 = vld [vmem:[#allocation4 + $0x78] sm:$0xff]
    %v2473 = vld [vmem:[#allocation4 + $0x80] sm:$0xff]
    %v2474 = vld [vmem:[#allocation4 + $0x88] sm:$0xff]
    %v2475 = vld [vmem:[#allocation4 + $0x90] sm:$0xff]
    %v2476 = vld [vmem:[#allocation4 + $0x98] sm:$0xff]
    %v2477 = vld [vmem:[#allocation4 + $0xa0] sm:$0xff]
    %v2478 = vld [vmem:[#allocation4 + $0xa8] sm:$0xff]
    %v2479 = vld [vmem:[#allocation4 + $0xb0] sm:$0xff]
    %v2480 = vld [vmem:[#allocation4 + $0xb8] sm:$0xff]
    %v2481 = vld [vmem:[#allocation4 + $0xc0] sm:$0xff]
    %v2482 = vld [vmem:[#allocation4 + $0xc8] sm:$0xff]
    %v2483 = vld [vmem:[#allocation4 + $0xd0] sm:$0xff]
    %v2484 = vld [vmem:[#allocation4 + $0xd8] sm:$0xff]
    %v2485 = vld [vmem:[#allocation4 + $0xe0] sm:$0xff]
    %v2486 = vld [vmem:[#allocation4 + $0xe8] sm:$0xff]
    %v2487 = vld [vmem:[#allocation4 + $0xf0] sm:$0xff]
    %v2488 = vld [vmem:[#allocation4 + $0xf8] sm:$0xff]
    %v2489 = vld [vmem:[#allocation4 + $0x100] sm:$0xff]
    %v2490 = vld [vmem:[#allocation4 + $0x108] sm:$0xff]
    %v2491 = vld [vmem:[#allocation4 + $0x110] sm:$0xff]
    %v2492 = vld [vmem:[#allocation4 + $0x118] sm:$0xff]
    %v2493 = vld [vmem:[#allocation4 + $0x120] sm:$0xff]
    %v2494 = vld [vmem:[#allocation4 + $0x128] sm:$0xff]
    %v2495 = vld [vmem:[#allocation4 + $0x130] sm:$0xff]
    %v2496 = vld [vmem:[#allocation4 + $0x138] sm:$0xff]
    %v2497 = vld [vmem:[#allocation4 + $0x140] sm:$0xff]
    %v2498 = vld [vmem:[#allocation4 + $0x148] sm:$0xff]
    %v2499 = vld [vmem:[#allocation4 + $0x150] sm:$0xff]
    %v2500 = vld [vmem:[#allocation4 + $0x158] sm:$0xff]
    %v2501 = vld [vmem:[#allocation4 + $0x160] sm:$0xff]
    %v2502 = vld [vmem:[#allocation4 + $0x168] sm:$0xff]
    %v2503 = vld [vmem:[#allocation4 + $0x170] sm:$0xff]
    %v2504 = vld [vmem:[#allocation4 + $0x178] sm:$0xff]
    %v2505 = vld [vmem:[#allocation4 + $0x180] sm:$0xff]
    %v2506 = vld [vmem:[#allocation4 + $0x188] sm:$0xff]
    %v2507 = vld [vmem:[#allocation4 + $0x190] sm:$0xff]
    %v2508 = vld [vmem:[#allocation4 + $0x198] sm:$0xff]
    %v2509 = vld [vmem:[#allocation4 + $0x1a0] sm:$0xff]
    %v2510 = vld [vmem:[#allocation4 + $0x1a8] sm:$0xff]
    %v2511 = vld [vmem:[#allocation4 + $0x1b0] sm:$0xff]
    %v2512 = vld [vmem:[#allocation4 + $0x1b8] sm:$0xff]
    %v2513 = vld [vmem:[#allocation4 + $0x1c0] sm:$0xff]
    %v2514 = vld [vmem:[#allocation4 + $0x1c8] sm:$0xff]
    %v2515 = vld [vmem:[#allocation4 + $0x1d0] sm:$0xff]
    %v2516 = vld [vmem:[#allocation4 + $0x1d8] sm:$0xff]
    %v2517 = vld [vmem:[#allocation4 + $0x1e0] sm:$0xff]
    %v2518 = vld [vmem:[#allocation4 + $0x1e8] sm:$0xff]
    %v2519 = vld [vmem:[#allocation4 + $0x1f0] sm:$0xff]
    %v2520 = vld [vmem:[#allocation4 + $0x1f8] sm:$0xff]
    %v2521 = vld [vmem:[%s6] sm:$0x3]
    %v2522 = vpack.c.bf16 %v2453, %v2453
    %v2523 = vpack.c.bf16 %v2454, %v2454
    %v2524 = vpack.c.bf16 %v2455, %v2455
    %v2525 = vpack.c.bf16 %v2456, %v2456
    %v2527 = vlaneseq
    %v2528 = vshrl.u32 %v2527, 7
    %v2529 = vsub.s32 0, %v2528
    %v2530 = vrot.slane %v2521, %v2529
    %v2531 = vlaneseq
    %v2532 = vshrl.u32 %v2531, 7
    %v2533 = vsub.s32 1, %v2532
    %v2534 = vrot.slane %v2521, %v2533
    %v2601 = vunpack.c.l.b16 %v2457
    %v2602 = vunpack.c.h.b16 %v2457
    %v2603 = vunpack.c.l.b16 %v2458
    %v2604 = vunpack.c.h.b16 %v2458
    %v2605 = vunpack.c.l.b16 %v2459
    %v2606 = vunpack.c.h.b16 %v2459
    %v2607 = vunpack.c.l.b16 %v2460
    %v2608 = vunpack.c.h.b16 %v2460
    %v2609 = vunpack.c.l.b16 %v2461
    %v2610 = vunpack.c.h.b16 %v2461
    %v2611 = vunpack.c.l.b16 %v2462
    %v2612 = vunpack.c.h.b16 %v2462
    %v2613 = vunpack.c.l.b16 %v2463
    %v2614 = vunpack.c.h.b16 %v2463
    %v2615 = vunpack.c.l.b16 %v2464
    %v2616 = vunpack.c.h.b16 %v2464
    %v2617 = vunpack.c.l.b16 %v2465
    %v2618 = vunpack.c.h.b16 %v2465
    %v2619 = vunpack.c.l.b16 %v2466
    %v2620 = vunpack.c.h.b16 %v2466
    %v2621 = vunpack.c.l.b16 %v2467
    %v2622 = vunpack.c.h.b16 %v2467
    %v2623 = vunpack.c.l.b16 %v2468
    %v2624 = vunpack.c.h.b16 %v2468
    %v2625 = vunpack.c.l.b16 %v2469
    %v2626 = vunpack.c.h.b16 %v2469
    %v2627 = vunpack.c.l.b16 %v2470
    %v2628 = vunpack.c.h.b16 %v2470
    %v2629 = vunpack.c.l.b16 %v2471
    %v2630 = vunpack.c.h.b16 %v2471
    %v2631 = vunpack.c.l.b16 %v2472
    %v2632 = vunpack.c.h.b16 %v2472
    %v2633 = vunpack.c.l.b16 %v2473
    %v2634 = vunpack.c.h.b16 %v2473
    %v2635 = vunpack.c.l.b16 %v2474
    %v2636 = vunpack.c.h.b16 %v2474
    %v2637 = vunpack.c.l.b16 %v2475
    %v2638 = vunpack.c.h.b16 %v2475
    %v2639 = vunpack.c.l.b16 %v2476
    %v2640 = vunpack.c.h.b16 %v2476
    %v2641 = vunpack.c.l.b16 %v2477
    %v2642 = vunpack.c.h.b16 %v2477
    %v2643 = vunpack.c.l.b16 %v2478
    %v2644 = vunpack.c.h.b16 %v2478
    %v2645 = vunpack.c.l.b16 %v2479
    %v2646 = vunpack.c.h.b16 %v2479
    %v2647 = vunpack.c.l.b16 %v2480
    %v2648 = vunpack.c.h.b16 %v2480
    %v2649 = vunpack.c.l.b16 %v2481
    %v2650 = vunpack.c.h.b16 %v2481
    %v2651 = vunpack.c.l.b16 %v2482
    %v2652 = vunpack.c.h.b16 %v2482
    %v2653 = vunpack.c.l.b16 %v2483
    %v2654 = vunpack.c.h.b16 %v2483
    %v2655 = vunpack.c.l.b16 %v2484
    %v2656 = vunpack.c.h.b16 %v2484
    %v2657 = vunpack.c.l.b16 %v2485
    %v2658 = vunpack.c.h.b16 %v2485
    %v2659 = vunpack.c.l.b16 %v2486
    %v2660 = vunpack.c.h.b16 %v2486
    %v2661 = vunpack.c.l.b16 %v2487
    %v2662 = vunpack.c.h.b16 %v2487
    %v2663 = vunpack.c.l.b16 %v2488
    %v2664 = vunpack.c.h.b16 %v2488
    %v2665 = vunpack.c.l.b16 %v2489
    %v2666 = vunpack.c.h.b16 %v2489
    %v2667 = vunpack.c.l.b16 %v2490
    %v2668 = vunpack.c.h.b16 %v2490
    %v2669 = vunpack.c.l.b16 %v2491
    %v2670 = vunpack.c.h.b16 %v2491
    %v2671 = vunpack.c.l.b16 %v2492
    %v2672 = vunpack.c.h.b16 %v2492
    %v2673 = vunpack.c.l.b16 %v2493
    %v2674 = vunpack.c.h.b16 %v2493
    %v2675 = vunpack.c.l.b16 %v2494
    %v2676 = vunpack.c.h.b16 %v2494
    %v2677 = vunpack.c.l.b16 %v2495
    %v2678 = vunpack.c.h.b16 %v2495
    %v2679 = vunpack.c.l.b16 %v2496
    %v2680 = vunpack.c.h.b16 %v2496
    %v2681 = vunpack.c.l.b16 %v2497
    %v2682 = vunpack.c.h.b16 %v2497
    %v2683 = vunpack.c.l.b16 %v2498
    %v2684 = vunpack.c.h.b16 %v2498
    %v2685 = vunpack.c.l.b16 %v2499
    %v2686 = vunpack.c.h.b16 %v2499
    %v2687 = vunpack.c.l.b16 %v2500
    %v2688 = vunpack.c.h.b16 %v2500
    %v2689 = vunpack.c.l.b16 %v2501
    %v2690 = vunpack.c.h.b16 %v2501
    %v2691 = vunpack.c.l.b16 %v2502
    %v2692 = vunpack.c.h.b16 %v2502
    %v2693 = vunpack.c.l.b16 %v2503
    %v2694 = vunpack.c.h.b16 %v2503
    %v2695 = vunpack.c.l.b16 %v2504
    %v2696 = vunpack.c.h.b16 %v2504
    %v2697 = vunpack.c.l.b16 %v2505
    %v2698 = vunpack.c.h.b16 %v2505
    %v2699 = vunpack.c.l.b16 %v2506
    %v2700 = vunpack.c.h.b16 %v2506
    %v2701 = vunpack.c.l.b16 %v2507
    %v2702 = vunpack.c.h.b16 %v2507
    %v2703 = vunpack.c.l.b16 %v2508
    %v2704 = vunpack.c.h.b16 %v2508
    %v2705 = vunpack.c.l.b16 %v2509
    %v2706 = vunpack.c.h.b16 %v2509
    %v2707 = vunpack.c.l.b16 %v2510
    %v2708 = vunpack.c.h.b16 %v2510
    %v2709 = vunpack.c.l.b16 %v2511
    %v2710 = vunpack.c.h.b16 %v2511
    %v2711 = vunpack.c.l.b16 %v2512
    %v2712 = vunpack.c.h.b16 %v2512
    %v2713 = vunpack.c.l.b16 %v2513
    %v2714 = vunpack.c.h.b16 %v2513
    %v2715 = vunpack.c.l.b16 %v2514
    %v2716 = vunpack.c.h.b16 %v2514
    %v2717 = vunpack.c.l.b16 %v2515
    %v2718 = vunpack.c.h.b16 %v2515
    %v2719 = vunpack.c.l.b16 %v2516
    %v2720 = vunpack.c.h.b16 %v2516
    %v2721 = vunpack.c.l.b16 %v2517
    %v2722 = vunpack.c.h.b16 %v2517
    %v2723 = vunpack.c.l.b16 %v2518
    %v2724 = vunpack.c.h.b16 %v2518
    %v2725 = vunpack.c.l.b16 %v2519
    %v2726 = vunpack.c.h.b16 %v2519
    %v2727 = vunpack.c.l.b16 %v2520
    %v2728 = vunpack.c.h.b16 %v2520
    %v2729 = vpack.c.b16 %v2603, %v2601
    %v2730 = vpack.c.b16 %v2604, %v2602
    %v2731 = vpack.c.b16 %v2607, %v2605
    %v2732 = vpack.c.b16 %v2608, %v2606
    %v2733 = vpack.c.b16 %v2611, %v2609
    %v2734 = vpack.c.b16 %v2612, %v2610
    %v2735 = vpack.c.b16 %v2615, %v2613
    %v2736 = vpack.c.b16 %v2616, %v2614
    %v2737 = vpack.c.b16 %v2619, %v2617
    %v2738 = vpack.c.b16 %v2620, %v2618
    %v2739 = vpack.c.b16 %v2623, %v2621
    %v2740 = vpack.c.b16 %v2624, %v2622
    %v2741 = vpack.c.b16 %v2627, %v2625
    %v2742 = vpack.c.b16 %v2628, %v2626
    %v2743 = vpack.c.b16 %v2631, %v2629
    %v2744 = vpack.c.b16 %v2632, %v2630
    %v2745 = vpack.c.b16 %v2635, %v2633
    %v2746 = vpack.c.b16 %v2636, %v2634
    %v2747 = vpack.c.b16 %v2639, %v2637
    %v2748 = vpack.c.b16 %v2640, %v2638
    %v2749 = vpack.c.b16 %v2643, %v2641
    %v2750 = vpack.c.b16 %v2644, %v2642
    %v2751 = vpack.c.b16 %v2647, %v2645
    %v2752 = vpack.c.b16 %v2648, %v2646
    %v2753 = vpack.c.b16 %v2651, %v2649
    %v2754 = vpack.c.b16 %v2652, %v2650
    %v2755 = vpack.c.b16 %v2655, %v2653
    %v2756 = vpack.c.b16 %v2656, %v2654
    %v2757 = vpack.c.b16 %v2659, %v2657
    %v2758 = vpack.c.b16 %v2660, %v2658
    %v2759 = vpack.c.b16 %v2663, %v2661
    %v2760 = vpack.c.b16 %v2664, %v2662
    %v2761 = vpack.c.b16 %v2667, %v2665
    %v2762 = vpack.c.b16 %v2668, %v2666
    %v2763 = vpack.c.b16 %v2671, %v2669
    %v2764 = vpack.c.b16 %v2672, %v2670
    %v2765 = vpack.c.b16 %v2675, %v2673
    %v2766 = vpack.c.b16 %v2676, %v2674
    %v2767 = vpack.c.b16 %v2679, %v2677
    %v2768 = vpack.c.b16 %v2680, %v2678
    %v2769 = vpack.c.b16 %v2683, %v2681
    %v2770 = vpack.c.b16 %v2684, %v2682
    %v2771 = vpack.c.b16 %v2687, %v2685
    %v2772 = vpack.c.b16 %v2688, %v2686
    %v2773 = vpack.c.b16 %v2691, %v2689
    %v2774 = vpack.c.b16 %v2692, %v2690
    %v2775 = vpack.c.b16 %v2695, %v2693
    %v2776 = vpack.c.b16 %v2696, %v2694
    %v2777 = vpack.c.b16 %v2699, %v2697
    %v2778 = vpack.c.b16 %v2700, %v2698
    %v2779 = vpack.c.b16 %v2703, %v2701
    %v2780 = vpack.c.b16 %v2704, %v2702
    %v2781 = vpack.c.b16 %v2707, %v2705
    %v2782 = vpack.c.b16 %v2708, %v2706
    %v2783 = vpack.c.b16 %v2711, %v2709
    %v2784 = vpack.c.b16 %v2712, %v2710
    %v2785 = vpack.c.b16 %v2715, %v2713
    %v2786 = vpack.c.b16 %v2716, %v2714
    %v2787 = vpack.c.b16 %v2719, %v2717
    %v2788 = vpack.c.b16 %v2720, %v2718
    %v2789 = vpack.c.b16 %v2723, %v2721
    %v2790 = vpack.c.b16 %v2724, %v2722
    %v2791 = vpack.c.b16 %v2727, %v2725
    %v2792 = vpack.c.b16 %v2728, %v2726
    %2857 = vmatprep.subr.bf16.mxu0 %v2730
    %2858 = vmatpush1.bf16.msra.mxu0 %v2729
    %2859 = vmatprep.subr.bf16.mxu0 %v2732
    %2860 = vmatpush1.bf16.msra.mxu0 %v2731
    %2861 = vmatprep.subr.bf16.mxu0 %v2734
    %2862 = vmatpush1.bf16.msra.mxu0 %v2733
    %2863 = vmatprep.subr.bf16.mxu0 %v2736
    %2864 = vmatpush1.bf16.msra.mxu0 %v2735
    %2865 = vmatprep.subr.bf16.mxu0 %v2738
    %2866 = vmatpush1.bf16.msra.mxu0 %v2737
    %2867 = vmatprep.subr.bf16.mxu0 %v2740
    %2868 = vmatpush1.bf16.msra.mxu0 %v2739
    %2869 = vmatprep.subr.bf16.mxu0 %v2742
    %2870 = vmatpush1.bf16.msra.mxu0 %v2741
    %2871 = vmatprep.subr.bf16.mxu0 %v2744
    %2872 = vmatpush1.bf16.msra.mxu0 %v2743
    %2873 = vmatprep.subr.bf16.mxu0 %v2746
    %2874 = vmatpush1.bf16.msra.mxu0 %v2745
    %2875 = vmatprep.subr.bf16.mxu0 %v2748
    %2876 = vmatpush1.bf16.msra.mxu0 %v2747
    %2877 = vmatprep.subr.bf16.mxu0 %v2750
    %2878 = vmatpush1.bf16.msra.mxu0 %v2749
    %2879 = vmatprep.subr.bf16.mxu0 %v2752
    %2880 = vmatpush1.bf16.msra.mxu0 %v2751
    %2881 = vmatprep.subr.bf16.mxu0 %v2754
    %2882 = vmatpush1.bf16.msra.mxu0 %v2753
    %2883 = vmatprep.subr.bf16.mxu0 %v2756
    %2884 = vmatpush1.bf16.msra.mxu0 %v2755
    %2885 = vmatprep.subr.bf16.mxu0 %v2758
    %2886 = vmatpush1.bf16.msra.mxu0 %v2757
    %2887 = vmatprep.subr.bf16.mxu0 %v2760
    %2888 = vmatpush1.bf16.msra.mxu0 %v2759
    %2889 = vmatprep.mubr.bf16.mxu0 %v2523
    %2890 = vmatmul.mubr.bf16.gmra.mrb[0].mxu0 %v2522
    %v2891 = vpop.f32.mrb[0].mxu0
    %v2892 = vadd.f32 %v2530, %v2891
    %v2893 = vpop.f32.mrb[0].mxu0
    %v2894 = vadd.f32 %v2534, %v2893
    %v2895 = vpop.f32.mrb[0].mxu0
    %v2896 = vpop.f32.mrb[0].mxu0
    %2897 = vdwg.mxu0
    %2898 = vmatprep.subr.bf16.mxu0 %v2762
    %2899 = vmatpush1.bf16.msra.mxu0 %v2761
    %2900 = vmatprep.subr.bf16.mxu0 %v2764
    %2901 = vmatpush1.bf16.msra.mxu0 %v2763
    %2902 = vmatprep.subr.bf16.mxu0 %v2766
    %2903 = vmatpush1.bf16.msra.mxu0 %v2765
    %2904 = vmatprep.subr.bf16.mxu0 %v2768
    %2905 = vmatpush1.bf16.msra.mxu0 %v2767
    %2906 = vmatprep.subr.bf16.mxu0 %v2770
    %2907 = vmatpush1.bf16.msra.mxu0 %v2769
    %2908 = vmatprep.subr.bf16.mxu0 %v2772
    %2909 = vmatpush1.bf16.msra.mxu0 %v2771
    %2910 = vmatprep.subr.bf16.mxu0 %v2774
    %2911 = vmatpush1.bf16.msra.mxu0 %v2773
    %2912 = vmatprep.subr.bf16.mxu0 %v2776
    %2913 = vmatpush1.bf16.msra.mxu0 %v2775
    %2914 = vmatprep.subr.bf16.mxu0 %v2778
    %2915 = vmatpush1.bf16.msra.mxu0 %v2777
    %2916 = vmatprep.subr.bf16.mxu0 %v2780
    %2917 = vmatpush1.bf16.msra.mxu0 %v2779
    %2918 = vmatprep.subr.bf16.mxu0 %v2782
    %2919 = vmatpush1.bf16.msra.mxu0 %v2781
    %2920 = vmatprep.subr.bf16.mxu0 %v2784
    %2921 = vmatpush1.bf16.msra.mxu0 %v2783
    %2922 = vmatprep.subr.bf16.mxu0 %v2786
    %2923 = vmatpush1.bf16.msra.mxu0 %v2785
    %2924 = vmatprep.subr.bf16.mxu0 %v2788
    %2925 = vmatpush1.bf16.msra.mxu0 %v2787
    %2926 = vmatprep.subr.bf16.mxu0 %v2790
    %2927 = vmatpush1.bf16.msra.mxu0 %v2789
    %2928 = vmatprep.subr.bf16.mxu0 %v2792
    %2929 = vmatpush1.bf16.msra.mxu0 %v2791
    %2930 = vmatprep.mubr.bf16.mxu0 %v2525
    %2931 = vmatmul.mubr.bf16.gmra.mrb[0].mxu0 %v2524
    %v2932 = vpop.f32.mrb[0].mxu0
    %v2933 = vadd.f32 %v2892, %v2932
    %v2934 = vpop.f32.mrb[0].mxu0
    %v2935 = vadd.f32 %v2894, %v2934
    %v2936 = vpop.f32.mrb[0].mxu0
    %v2937 = vpop.f32.mrb[0].mxu0
    %2938 = vdwg.mxu0
    %v2939 = vxor.u32 %v2933, 2147483648
    %v2940 = vxor.u32 %v2935, 2147483648
    %v2941 = vmul.f32 %v2939, 1.442695
    %v2942 = vpow.pop %v2941
    %v2943 = vmul.f32 %v2940, 1.442695
    %v2944 = vpow.pop %v2943
    %v2945 = vadd.f32 %v2942, 1.0
    %v2946 = vadd.f32 %v2944, 1.0
    %v2947 = vrcp.pop %v2945
    %v2948 = vmul.f32 1.0, %v2947
    %v2949 = vrcp.pop %v2946
    %v2950 = vmul.f32 1.0, %v2949
    %v2951 = vmul.f32 %v2933, %v2948
    %v2952 = vmul.f32 %v2935, %v2950
    %v2953 = vld [vmem:[%s7] sm:$0xf]
    %v2954 = vld [vmem:[%s7 + $0x4] sm:$0xf]
    %v2955 = vld [vmem:[%s7 + $0x8] sm:$0xf]
    %v2956 = vld [vmem:[%s7 + $0xc] sm:$0xf]
    %v2957 = vld [vmem:[%s7 + $0x10] sm:$0xf]
    %v2958 = vld [vmem:[%s7 + $0x14] sm:$0xf]
    %v2959 = vld [vmem:[%s7 + $0x18] sm:$0xf]
    %v2960 = vld [vmem:[%s7 + $0x1c] sm:$0xf]
    %v2961 = vld [vmem:[%s7 + $0x20] sm:$0xf]
    %v2962 = vld [vmem:[%s7 + $0x24] sm:$0xf]
    %v2963 = vld [vmem:[%s7 + $0x28] sm:$0xf]
    %v2964 = vld [vmem:[%s7 + $0x2c] sm:$0xf]
    %v2965 = vld [vmem:[%s7 + $0x30] sm:$0xf]
    %v2966 = vld [vmem:[%s7 + $0x34] sm:$0xf]
    %v2967 = vld [vmem:[%s7 + $0x38] sm:$0xf]
    %v2968 = vld [vmem:[%s7 + $0x3c] sm:$0xf]
    %v2969 = vld [vmem:[%s7 + $0x40] sm:$0xf]
    %v2970 = vld [vmem:[%s7 + $0x44] sm:$0xf]
    %v2971 = vld [vmem:[%s7 + $0x48] sm:$0xf]
    %v2972 = vld [vmem:[%s7 + $0x4c] sm:$0xf]
    %v2973 = vld [vmem:[%s7 + $0x50] sm:$0xf]
    %v2974 = vld [vmem:[%s7 + $0x54] sm:$0xf]
    %v2975 = vld [vmem:[%s7 + $0x58] sm:$0xf]
    %v2976 = vld [vmem:[%s7 + $0x5c] sm:$0xf]
    %v2977 = vld [vmem:[%s7 + $0x60] sm:$0xf]
    %v2978 = vld [vmem:[%s7 + $0x64] sm:$0xf]
    %v2979 = vld [vmem:[%s7 + $0x68] sm:$0xf]
    %v2980 = vld [vmem:[%s7 + $0x6c] sm:$0xf]
    %v2981 = vld [vmem:[%s7 + $0x70] sm:$0xf]
    %v2982 = vld [vmem:[%s7 + $0x74] sm:$0xf]
    %v2983 = vld [vmem:[%s7 + $0x78] sm:$0xf]
    %v2984 = vld [vmem:[%s7 + $0x7c] sm:$0xf]
    %v2985 = vld [vmem:[%s8] sm:$0x1]
    %v2986 = vpack.c.bf16 %v2951, %v2951
    %v2987 = vpack.c.bf16 %v2952, %v2952
    %v2989 = vlaneseq
    %v2990 = vshrl.u32 %v2989, 7
    %v2991 = vsub.s32 0, %v2990
    %v2992 = vrot.slane %v2985, %v2991
    %v3026 = vunpack.c.l.b16 %v2953
    %v3027 = vunpack.c.l.b16 %v2954
    %v3028 = vunpack.c.l.b16 %v2955
    %v3029 = vunpack.c.l.b16 %v2956
    %v3030 = vunpack.c.l.b16 %v2957
    %v3031 = vunpack.c.l.b16 %v2958
    %v3032 = vunpack.c.l.b16 %v2959
    %v3033 = vunpack.c.l.b16 %v2960
    %v3034 = vunpack.c.l.b16 %v2961
    %v3035 = vunpack.c.l.b16 %v2962
    %v3036 = vunpack.c.l.b16 %v2963
    %v3037 = vunpack.c.l.b16 %v2964
    %v3038 = vunpack.c.l.b16 %v2965
    %v3039 = vunpack.c.l.b16 %v2966
    %v3040 = vunpack.c.l.b16 %v2967
    %v3041 = vunpack.c.l.b16 %v2968
    %v3042 = vunpack.c.l.b16 %v2969
    %v3043 = vunpack.c.l.b16 %v2970
    %v3044 = vunpack.c.l.b16 %v2971
    %v3045 = vunpack.c.l.b16 %v2972
    %v3046 = vunpack.c.l.b16 %v2973
    %v3047 = vunpack.c.l.b16 %v2974
    %v3048 = vunpack.c.l.b16 %v2975
    %v3049 = vunpack.c.l.b16 %v2976
    %v3050 = vunpack.c.l.b16 %v2977
    %v3051 = vunpack.c.l.b16 %v2978
    %v3052 = vunpack.c.l.b16 %v2979
    %v3053 = vunpack.c.l.b16 %v2980
    %v3054 = vunpack.c.l.b16 %v2981
    %v3055 = vunpack.c.l.b16 %v2982
    %v3056 = vunpack.c.l.b16 %v2983
    %v3057 = vunpack.c.l.b16 %v2984
    %v3058 = vpack.c.b16 %v3027, %v3026
    %v3059 = vpack.c.b16 %v3029, %v3028
    %v3060 = vpack.c.b16 %v3031, %v3030
    %v3061 = vpack.c.b16 %v3033, %v3032
    %v3062 = vpack.c.b16 %v3035, %v3034
    %v3063 = vpack.c.b16 %v3037, %v3036
    %v3064 = vpack.c.b16 %v3039, %v3038
    %v3065 = vpack.c.b16 %v3041, %v3040
    %v3066 = vpack.c.b16 %v3043, %v3042
    %v3067 = vpack.c.b16 %v3045, %v3044
    %v3068 = vpack.c.b16 %v3047, %v3046
    %v3069 = vpack.c.b16 %v3049, %v3048
    %v3070 = vpack.c.b16 %v3051, %v3050
    %v3071 = vpack.c.b16 %v3053, %v3052
    %v3072 = vpack.c.b16 %v3055, %v3054
    %v3073 = vpack.c.b16 %v3057, %v3056
    %3090 = vmatprep.subr.bf16.mxu0 0
    %3091 = vmatpush1.bf16.msra.mxu0 %v3058
    %3092 = vmatprep.subr.bf16.mxu0 0
    %3093 = vmatpush1.bf16.msra.mxu0 %v3059
    %3094 = vmatprep.subr.bf16.mxu0 0
    %3095 = vmatpush1.bf16.msra.mxu0 %v3060
    %3096 = vmatprep.subr.bf16.mxu0 0
    %3097 = vmatpush1.bf16.msra.mxu0 %v3061
    %3098 = vmatprep.subr.bf16.mxu0 0
    %3099 = vmatpush1.bf16.msra.mxu0 %v3062
    %3100 = vmatprep.subr.bf16.mxu0 0
    %3101 = vmatpush1.bf16.msra.mxu0 %v3063
    %3102 = vmatprep.subr.bf16.mxu0 0
    %3103 = vmatpush1.bf16.msra.mxu0 %v3064
    %3104 = vmatprep.subr.bf16.mxu0 0
    %3105 = vmatpush1.bf16.msra.mxu0 %v3065
    %3106 = vmatprep.subr.bf16.mxu0 0
    %3107 = vmatpush1.bf16.msra.mxu0 %v3066
    %3108 = vmatprep.subr.bf16.mxu0 0
    %3109 = vmatpush1.bf16.msra.mxu0 %v3067
    %3110 = vmatprep.subr.bf16.mxu0 0
    %3111 = vmatpush1.bf16.msra.mxu0 %v3068
    %3112 = vmatprep.subr.bf16.mxu0 0
    %3113 = vmatpush1.bf16.msra.mxu0 %v3069
    %3114 = vmatprep.subr.bf16.mxu0 0
    %3115 = vmatpush1.bf16.msra.mxu0 %v3070
    %3116 = vmatprep.subr.bf16.mxu0 0
    %3117 = vmatpush1.bf16.msra.mxu0 %v3071
    %3118 = vmatprep.subr.bf16.mxu0 0
    %3119 = vmatpush1.bf16.msra.mxu0 %v3072
    %3120 = vmatprep.subr.bf16.mxu0 0
    %3121 = vmatpush1.bf16.msra.mxu0 %v3073
    %3122 = vmatprep.mubr.bf16.mxu0 %v2987
    %3123 = vmatmul.mubr.bf16.gmra.mrb[0].mxu0 %v2986
    %v3124 = vpop.f32.mrb[0].mxu0
    %v3125 = vadd.f32 %v2992, %v3124
    %v3126 = vpop.f32.mrb[0].mxu0
    %v3127 = vpop.f32.mrb[0].mxu0
    %v3128 = vpop.f32.mrb[0].mxu0
    %3129 = vdwg.mxu0
    %v3130 = vxor.u32 %v3125, 2147483648
    %v3131 = vmul.f32 %v3130, 1.442695
    %v3132 = vpow.pop %v3131
    %v3133 = vadd.f32 %v3132, 1.0
    %v3134 = vrcp.pop %v3133
    %v3135 = vmul.f32 1.0, %v3134
    %v3136 = vmul.f32 %v3125, %v3135
    %v3137 = vld [vmem:[%s9] sm:$0xff]
    %v3138 = vld [vmem:[%s9 + $0x8] sm:$0xff]
    %v3139 = vld [vmem:[%s9 + $0x10] sm:$0xff]
    %v3140 = vld [vmem:[%s9 + $0x18] sm:$0xff]
    %v3141 = vld [vmem:[%s9 + $0x20] sm:$0xff]
    %v3142 = vld [vmem:[%s9 + $0x28] sm:$0xff]
    %v3143 = vld [vmem:[%s9 + $0x30] sm:$0xff]
    %v3144 = vld [vmem:[%s9 + $0x38] sm:$0xff]
    %v3145 = vld [vmem:[%s9 + $0x40] sm:$0xff]
    %v3146 = vld [vmem:[%s9 + $0x48] sm:$0xff]
    %v3147 = vld [vmem:[%s9 + $0x50] sm:$0xff]
    %v3148 = vld [vmem:[%s9 + $0x58] sm:$0xff]
    %v3149 = vld [vmem:[%s9 + $0x60] sm:$0xff]
    %v3150 = vld [vmem:[%s9 + $0x68] sm:$0xff]
    %v3151 = vld [vmem:[%s9 + $0x70] sm:$0xff]
    %v3152 = vld [vmem:[%s9 + $0x78] sm:$0xff]
    %v3153 = vld [vmem:[%s10] sm:$0x3]
    %v3154 = vpack.c.bf16 %v3136, %v3136
    %v3156 = vlaneseq
    %v3157 = vshrl.u32 %v3156, 7
    %v3158 = vsub.s32 0, %v3157
    %v3159 = vrot.slane %v3153, %v3158
    %v3160 = vlaneseq
    %v3161 = vshrl.u32 %v3160, 7
    %v3162 = vsub.s32 1, %v3161
    %v3163 = vrot.slane %v3153, %v3162
    %v3182 = vunpack.c.l.b16 %v3137
    %v3183 = vunpack.c.h.b16 %v3137
    %v3184 = vunpack.c.l.b16 %v3138
    %v3185 = vunpack.c.h.b16 %v3138
    %v3186 = vunpack.c.l.b16 %v3139
    %v3187 = vunpack.c.h.b16 %v3139
    %v3188 = vunpack.c.l.b16 %v3140
    %v3189 = vunpack.c.h.b16 %v3140
    %v3190 = vunpack.c.l.b16 %v3141
    %v3191 = vunpack.c.h.b16 %v3141
    %v3192 = vunpack.c.l.b16 %v3142
    %v3193 = vunpack.c.h.b16 %v3142
    %v3194 = vunpack.c.l.b16 %v3143
    %v3195 = vunpack.c.h.b16 %v3143
    %v3196 = vunpack.c.l.b16 %v3144
    %v3197 = vunpack.c.h.b16 %v3144
    %v3198 = vunpack.c.l.b16 %v3145
    %v3199 = vunpack.c.h.b16 %v3145
    %v3200 = vunpack.c.l.b16 %v3146
    %v3201 = vunpack.c.h.b16 %v3146
    %v3202 = vunpack.c.l.b16 %v3147
    %v3203 = vunpack.c.h.b16 %v3147
    %v3204 = vunpack.c.l.b16 %v3148
    %v3205 = vunpack.c.h.b16 %v3148
    %v3206 = vunpack.c.l.b16 %v3149
    %v3207 = vunpack.c.h.b16 %v3149
    %v3208 = vunpack.c.l.b16 %v3150
    %v3209 = vunpack.c.h.b16 %v3150
    %v3210 = vunpack.c.l.b16 %v3151
    %v3211 = vunpack.c.h.b16 %v3151
    %v3212 = vunpack.c.l.b16 %v3152
    %v3213 = vunpack.c.h.b16 %v3152
    %v3214 = vpack.c.b16 %v3184, %v3182
    %v3215 = vpack.c.b16 %v3185, %v3183
    %v3216 = vpack.c.b16 %v3188, %v3186
    %v3217 = vpack.c.b16 %v3189, %v3187
    %v3218 = vpack.c.b16 %v3192, %v3190
    %v3219 = vpack.c.b16 %v3193, %v3191
    %v3220 = vpack.c.b16 %v3196, %v3194
    %v3221 = vpack.c.b16 %v3197, %v3195
    %v3222 = vpack.c.b16 %v3200, %v3198
    %v3223 = vpack.c.b16 %v3201, %v3199
    %v3224 = vpack.c.b16 %v3204, %v3202
    %v3225 = vpack.c.b16 %v3205, %v3203
    %v3226 = vpack.c.b16 %v3208, %v3206
    %v3227 = vpack.c.b16 %v3209, %v3207
    %v3228 = vpack.c.b16 %v3212, %v3210
    %v3229 = vpack.c.b16 %v3213, %v3211
    %3246 = vmatprep.subr.bf16.mxu0 %v3215
    %3247 = vmatpush1.bf16.msra.mxu0 %v3214
    %3248 = vmatprep.subr.bf16.mxu0 %v3217
    %3249 = vmatpush1.bf16.msra.mxu0 %v3216
    %3250 = vmatprep.subr.bf16.mxu0 %v3219
    %3251 = vmatpush1.bf16.msra.mxu0 %v3218
    %3252 = vmatprep.subr.bf16.mxu0 %v3221
    %3253 = vmatpush1.bf16.msra.mxu0 %v3220
    %3254 = vmatprep.subr.bf16.mxu0 %v3223
    %3255 = vmatpush1.bf16.msra.mxu0 %v3222
    %3256 = vmatprep.subr.bf16.mxu0 %v3225
    %3257 = vmatpush1.bf16.msra.mxu0 %v3224
    %3258 = vmatprep.subr.bf16.mxu0 %v3227
    %3259 = vmatpush1.bf16.msra.mxu0 %v3226
    %3260 = vmatprep.subr.bf16.mxu0 %v3229
    %3261 = vmatpush1.bf16.msra.mxu0 %v3228
    %3262 = vmatprep.subr.bf16.mxu0 0
    %3263 = vmatpush1.bf16.msra.mxu0 0
    %3264 = vmatprep.subr.bf16.mxu0 0
    %3265 = vmatpush1.bf16.msra.mxu0 0
    %3266 = vmatprep.subr.bf16.mxu0 0
    %3267 = vmatpush1.bf16.msra.mxu0 0
    %3268 = vmatprep.subr.bf16.mxu0 0
    %3269 = vmatpush1.bf16.msra.mxu0 0
    %3270 = vmatprep.subr.bf16.mxu0 0
    %3271 = vmatpush1.bf16.msra.mxu0 0
    %3272 = vmatprep.subr.bf16.mxu0 0
    %3273 = vmatpush1.bf16.msra.mxu0 0
    %3274 = vmatprep.subr.bf16.mxu0 0
    %3275 = vmatpush1.bf16.msra.mxu0 0
    %3276 = vmatprep.subr.bf16.mxu0 0
    %3277 = vmatpush1.bf16.msra.mxu0 0
    %3278 = vmatprep.mubr.bf16.mxu0 0
    %3279 = vmatmul.mubr.bf16.gmra.mrb[0].mxu0 %v3154
    %v3280 = vpop.f32.mrb[0].mxu0
    %v3281 = vadd.f32 %v3159, %v3280
    %v3282 = vpop.f32.mrb[0].mxu0
    %v3283 = vadd.f32 %v3163, %v3282
    %v3284 = vpop.f32.mrb[0].mxu0
    %v3285 = vpop.f32.mrb[0].mxu0
    %3286 = vdwg.mxu0
    %v3287 = vld [vmem:[%s11] sm:$0xf]
    %v3288 = vld [vmem:[%s11 + $0x4] sm:$0xf]
    %v3289 = vld [vmem:[%s11 + $0x8] sm:$0xf]
    %v3290 = vld [vmem:[%s11 + $0xc] sm:$0xf]
    %v3291 = vld [vmem:[%s11 + $0x10] sm:$0xf]
    %v3292 = vld [vmem:[%s11 + $0x14] sm:$0xf]
    %v3293 = vld [vmem:[%s11 + $0x18] sm:$0xf]
    %v3294 = vld [vmem:[%s11 + $0x1c] sm:$0xf]
    %v3295 = vld [vmem:[%s11 + $0x20] sm:$0xf]
    %v3296 = vld [vmem:[%s11 + $0x24] sm:$0xf]
    %v3297 = vld [vmem:[%s11 + $0x28] sm:$0xf]
    %v3298 = vld [vmem:[%s11 + $0x2c] sm:$0xf]
    %v3299 = vld [vmem:[%s11 + $0x30] sm:$0xf]
    %v3300 = vld [vmem:[%s11 + $0x34] sm:$0xf]
    %v3301 = vld [vmem:[%s11 + $0x38] sm:$0xf]
    %v3302 = vld [vmem:[%s11 + $0x3c] sm:$0xf]
    %v3303 = vld [vmem:[%s12] sm:$0x1]
    %v3304 = vpack.c.bf16 %v3281, %v3281
    %v3306 = vlaneseq
    %v3307 = vshrl.u32 %v3306, 7
    %v3308 = vsub.s32 0, %v3307
    %v3309 = vrot.slane %v3303, %v3308
    %v3327 = vunpack.c.l.b16 %v3287
    %v3328 = vunpack.c.l.b16 %v3288
    %v3329 = vunpack.c.l.b16 %v3289
    %v3330 = vunpack.c.l.b16 %v3290
    %v3331 = vunpack.c.l.b16 %v3291
    %v3332 = vunpack.c.l.b16 %v3292
    %v3333 = vunpack.c.l.b16 %v3293
    %v3334 = vunpack.c.l.b16 %v3294
    %v3335 = vunpack.c.l.b16 %v3295
    %v3336 = vunpack.c.l.b16 %v3296
    %v3337 = vunpack.c.l.b16 %v3297
    %v3338 = vunpack.c.l.b16 %v3298
    %v3339 = vunpack.c.l.b16 %v3299
    %v3340 = vunpack.c.l.b16 %v3300
    %v3341 = vunpack.c.l.b16 %v3301
    %v3342 = vunpack.c.l.b16 %v3302
    %v3343 = vpack.c.b16 %v3328, %v3327
    %v3344 = vpack.c.b16 %v3330, %v3329
    %v3345 = vpack.c.b16 %v3332, %v3331
    %v3346 = vpack.c.b16 %v3334, %v3333
    %v3347 = vpack.c.b16 %v3336, %v3335
    %v3348 = vpack.c.b16 %v3338, %v3337
    %v3349 = vpack.c.b16 %v3340, %v3339
    %v3350 = vpack.c.b16 %v3342, %v3341
    %3359 = vmatprep.subr.bf16.mxu0 0
    %3360 = vmatpush1.bf16.msra.mxu0 %v3343
    %3361 = vmatprep.subr.bf16.mxu0 0
    %3362 = vmatpush1.bf16.msra.mxu0 %v3344
    %3363 = vmatprep.subr.bf16.mxu0 0
    %3364 = vmatpush1.bf16.msra.mxu0 %v3345
    %3365 = vmatprep.subr.bf16.mxu0 0
    %3366 = vmatpush1.bf16.msra.mxu0 %v3346
    %3367 = vmatprep.subr.bf16.mxu0 0
    %3368 = vmatpush1.bf16.msra.mxu0 %v3347
    %3369 = vmatprep.subr.bf16.mxu0 0
    %3370 = vmatpush1.bf16.msra.mxu0 %v3348
    %3371 = vmatprep.subr.bf16.mxu0 0
    %3372 = vmatpush1.bf16.msra.mxu0 %v3349
    %3373 = vmatprep.subr.bf16.mxu0 0
    %3374 = vmatpush1.bf16.msra.mxu0 %v3350
    %3375 = vmatprep.subr.bf16.mxu0 0
    %3376 = vmatpush1.bf16.msra.mxu0 0
    %3377 = vmatprep.subr.bf16.mxu0 0
    %3378 = vmatpush1.bf16.msra.mxu0 0
    %3379 = vmatprep.subr.bf16.mxu0 0
    %3380 = vmatpush1.bf16.msra.mxu0 0
    %3381 = vmatprep.subr.bf16.mxu0 0
    %3382 = vmatpush1.bf16.msra.mxu0 0
    %3383 = vmatprep.subr.bf16.mxu0 0
    %3384 = vmatpush1.bf16.msra.mxu0 0
    %3385 = vmatprep.subr.bf16.mxu0 0
    %3386 = vmatpush1.bf16.msra.mxu0 0
    %3387 = vmatprep.subr.bf16.mxu0 0
    %3388 = vmatpush1.bf16.msra.mxu0 0
    %3389 = vmatprep.subr.bf16.mxu0 0
    %3390 = vmatpush1.bf16.msra.mxu0 0
    %3391 = vmatprep.mubr.bf16.mxu0 0
    %3392 = vmatmul.mubr.bf16.gmra.mrb[0].mxu0 %v3304
    %v3393 = vpop.f32.mrb[0].mxu0
    %v3394 = vadd.f32 %v3309, %v3393
    %v3395 = vpop.f32.mrb[0].mxu0
    %v3396 = vpop.f32.mrb[0].mxu0
    %v3397 = vpop.f32.mrb[0].mxu0
    %3398 = vdwg.mxu0
    %vm3399 = vcmask 39936
    %v3400 = vsel %vm3399, %v3394, -inf
    %3401 = vmax.xlane.f32.xlu0 %v3400
    %v3402 = vpop.xlane.xlu0 %3401
    %v3403 = vsub.f32 %v3394, %v3402
    %v3404 = vmul.f32 %v3403, 1.442695
    %v3405 = vpow.pop %v3404
    %v3406 = vsel %vm3399, %v3405, 0.0
    %3407 = vadd.xlane.f32.xlu0 %v3406
    %v3408 = vpop.xlane.xlu0 %3407
    %v3409 = vrcp.pop %v3408
    %v3410 = vmul.f32 %v3405, %v3409
    %3411 = vst [vmem:[%s13] sm:$0xff] %v3281
    %vm3412 = vcmask 261120
    %3413 = vst.msk [vmem:[%s13 + $0x8] sm:$0xff] %vm3412, %v3283
    %3414 = vst.msk [vmem:[%s14] sm:$0xff] %vm3399, %v3410
    // Predicated region
    $region62: #{cvae_forward.2} parent=1 // pred_check
      _
    $region63: #{cvae_forward.2} parent=1 // pred_check_branch
      %3416 = sbr.rel (0) target = $region65
    $region64: #{cvae_forward.2} parent=1 // pred_region
      _
    $region65: #{cvae_forward.2} parent=1 // pred_fallthru
      _
    // Predicated region
    $region66: #{cvae_forward.2} parent=1 // pred_check
      _
    $region67: #{cvae_forward.2} parent=1 // pred_check_branch
      %3418 = sbr.rel (0) target = $region69
    $region68: #{cvae_forward.2} parent=1 // pred_region
      _
    $region69: #{cvae_forward.2} parent=1 // pred_fallthru
      _
    // Predicated region
    $region70: #{cvae_forward.2} parent=1 // pred_check
      _
    $region71: #{cvae_forward.2} parent=1 // pred_check_branch
      %3420 = sbr.rel (0) target = $region73
    $region72: #{cvae_forward.2} parent=1 // pred_region
      _
    $region73: #{cvae_forward.2} parent=1 // pred_fallthru
      _
    // Predicated region
    $region74: #{cvae_forward.2} parent=1 // pred_check
      _
    $region75: #{cvae_forward.2} parent=1 // pred_check_branch
      %3422 = sbr.rel (0) target = $region77
    $region76: #{cvae_forward.2} parent=1 // pred_region
      _
    $region77: #{cvae_forward.2} parent=1 // pred_fallthru
      _
    %3423 = vsyncpa [#allocation3], 1
    %3424 = vsyncpa [#allocation5], 1

</llo_original>
